<compile_context>
chip_gen: v5e
topology: v5e:2x2
jax: 0.10.0
libtpu: 0.0.40
codegen_flags: <defaults>
</compile_context>

<pallas_src>
import math

import numpy as np
import jax
import jax.numpy as jnp
from jax.experimental import pallas as pl
from jax.experimental.pallas import tpu as pltpu


# (concat, inter-layer GELU) for the three TransformerConv layers
LAYER_CFG = ((True, True), (True, True), (False, False))


# ---------------------------------------------------------------------------
# fused forward kernel
# ---------------------------------------------------------------------------
def make_fused_kernel(*, N, E, heads, out_channels, vocab, rel, layout,
                      eps=1e-5):
    C = out_channels
    HC = heads * C
    k_gelu = math.sqrt(2.0 / math.pi)
    f32 = jnp.float32

    def fdot(a, b):
        # f32 operands / f32 accumulation (bf16 x bf16 dots are rejected by
        # the interpret-mode CPU executor; at these shapes the kernel is
        # launch/DMA bound, not MXU bound, so f32 costs nothing material).
        return jnp.dot(a, b, preferred_element_type=f32)

    def gelu(t):
        # tanh-approximate GELU: one EUP tanh (~1e-3 max dev vs torch erf GELU)
        return 0.5 * t * (1.0 + jnp.tanh(k_gelu * (t + 0.044715 * t * t * t)))

    def graph_layernorm(t, w, b):
        # torch_geometric LayerNorm(mode='graph') with batch=None:
        #   t = t - t.mean(); out = t / (t.std(unbiased=False) + eps) * w + b
        inv_n = 1.0 / (t.shape[0] * t.shape[1])
        m = jnp.sum(jnp.sum(t, axis=1, keepdims=True), axis=0,
                    keepdims=True) * inv_n
        tc = t - m
        var = jnp.sum(jnp.sum(tc * tc, axis=1, keepdims=True), axis=0,
                      keepdims=True) * inv_n
        inv_std = pl.reciprocal(jnp.sqrt(var) + eps, approx=True)
        return tc * inv_std * w + b

    lay_d, lay_qkv, lay_hc, lay_vp = (layout["d"], layout["qkv"],
                                      layout["hc"], layout["vp"])

    def kernel(nodes_ref, eattr_ref, src_ref, dst_ref, dst_row_ref,
               sd_ref, sqkv_ref, shc_ref, hred_ref, svp_ref, out_ref):
        def sl(ref, lay, name):
            o, r = lay[name]          # static python ints -> static slice
            return ref[o:o + r, :]

        d = lambda name: sl(sd_ref, lay_d, name)
        qk = lambda name: sl(sqkv_ref, lay_qkv, name)
        hcs = lambda name: sl(shc_ref, lay_hc, name)
        vps = lambda name: sl(svp_ref, lay_vp, name)

        # gather / scatter one-hots built in-register from int32 indices
        # (VPU iota compares) -- no O(E*N) HBM traffic, no wrapper transpose.
        node_oh = (jax.lax.broadcasted_iota(jnp.int32, (N, vocab), 1)
                   == nodes_ref[...]).astype(f32)                 # [N, vocab]
        edge_oh = (jax.lax.broadcasted_iota(jnp.int32, (E, rel), 1)
                   == eattr_ref[...]).astype(f32)                 # [E, rel]
        iota_en = jax.lax.broadcasted_iota(jnp.int32, (E, N), 1)
        src_oh = (iota_en == src_ref[...]).astype(f32)            # [E, N] (j)
        dst_oh = (iota_en == dst_ref[...]).astype(f32)            # [E, N] (i)
        dstT_oh = (jax.lax.broadcasted_iota(jnp.int32, (N, E), 0)
                   == dst_row_ref[...]).astype(f32)               # [N, E]

        hred = hred_ref[...]            # [HC, Hp], pre-scaled by 1/sqrt(C)
        hexp = hcs("head_expand")       # [Hp, HC]
        hmean = d("head_mean")          # [HC, C]

        # embedding lookups as one-hot matmuls on the MXU
        x = fdot(node_oh, d("embed"))        # [N, D]
        ef = fdot(edge_oh, d("embed_ee"))    # [E, D]

        h = x
        for li, (concat, post_gelu) in enumerate(LAYER_CFG):
            residual = h
            xn = graph_layernorm(h, d(f"ln1_w{li}"), d(f"ln1_b{li}"))

            # fused q/k/v projection
            qkv = fdot(xn, qk(f"wqkv{li}")) + qk(f"bqkv{li}")     # [N, 3*HC]
            q = qkv[:, 0:HC]
            k = qkv[:, HC:2 * HC]
            v = qkv[:, 2 * HC:3 * HC]
            e = fdot(ef, hcs(f"we{li}"))                          # [E, HC]

            q_i = fdot(dst_oh, q)                                 # gather @ dst
            k_j = fdot(src_oh, k) + e                             # gather @ src
            v_j = fdot(src_oh, v) + e                             # [E, HC]

            # per-head logits + segment softmax over incoming edges of each
            # destination node; 1/sqrt(C) is folded into hred.
            # TODO(synk): global per-head max shift equals PyG's per-segment
            # shift algebraically but can underflow for destinations whose
            # logits sit far below the global max; a true per-segment max
            # needs a scatter-max and is left for the tiled version.
            logits = fdot(q_i * k_j, hred)                        # [E, Hp]
            mx = jnp.max(logits, axis=0, keepdims=True)           # [1, Hp]
            p = jnp.exp(logits - mx)                              # [E, Hp]
            denom_n = fdot(dstT_oh, p)                            # [N, Hp]
            denom_e = fdot(dst_oh, denom_n) + 1e-16               # [E, Hp]
            alpha = p * pl.reciprocal(denom_e, approx=True)
            msg = v_j * fdot(alpha, hexp)                         # [E, HC]
            agg = fdot(dstT_oh, msg)                              # [N, HC]

            if concat:
                attn = fdot(agg, d(f"wproj{li}")) + d(f"bproj{li}")
            else:
                attn = fdot(agg, hmean)          # out.mean(dim=1)

            h = attn + residual                  # dropout = identity (eval)
            residual2 = h
            hn = graph_layernorm(h, d(f"ln2_w{li}"), d(f"ln2_b{li}"))
            ff = gelu(fdot(hn, d(f"w1{li}")) + d(f"b1{li}"))
            ff = fdot(ff, d(f"w2{li}")) + d(f"b2{li}")
            h = ff + residual2
            if post_gelu:
                h = gelu(h)                      # inter-layer nn.GELU()

        # vocab head, zero-padded to a lane-dense 128-wide store
        out_ref[...] = fdot(h, vps("lin_w")) + vps("lin_b")

    return kernel


# ---------------------------------------------------------------------------
# parameter packing: fuse qkv, fold 1/sqrt(C), pad vocab head, coalesce the
# per-layer tensors into a few width-uniform slabs (8-row aligned entries).
# ---------------------------------------------------------------------------
def pack_params(params, *, heads):
    f32 = jnp.float32
    embed = jnp.asarray(params["embed"], f32)
    embed_ee = jnp.asarray(params["embed_ee"], f32)
    vocab, D = embed.shape
    R = embed_ee.shape[0]
    C = D
    HC = heads * C
    HP = max(heads, 8)                 # pad head dim for robust narrow matmuls
    L = params["layers"]

    V = params["lin_w"].shape[1]
    VP = max(((V + 127) // 128) * 128, 128)

    inv_sqrt_c = 1.0 / math.sqrt(C)
    hred = np.zeros((HC, HP), np.float32)
    hexp = np.zeros((HP, HC), np.float32)
    hmean = np.zeros((HC, C), np.float32)
    for h in range(heads):
        hred[h * C:(h + 1) * C, h] = inv_sqrt_c     # fold 1/sqrt(C) here
        hexp[h, h * C:(h + 1) * C] = 1.0
        hmean[h * C:(h + 1) * C, :] = np.eye(C, dtype=np.float32) / heads

    def build_slab(entries):
        """Concat [rows, width] blocks; 8-row-align each entry's offset."""
        width = int(entries[0][1].shape[1])
        parts, lay, rows = [], {}, 0
        for name, a in entries:
            a = jnp.asarray(a, f32)
            assert a.ndim == 2 and a.shape[1] == width
            pad = (-rows) % 8
            if pad:
                parts.append(jnp.zeros((pad, width), f32))
                rows += pad
            lay[name] = (rows, int(a.shape[0]))
            parts.append(a)
            rows += int(a.shape[0])
        return jnp.concatenate(parts, axis=0), lay

    d_entries = [("embed", embed), ("embed_ee", embed_ee),
                 ("head_mean", jnp.asarray(hmean))]
    qkv_entries, hc_entries = [], [("head_expand", jnp.asarray(hexp))]
    for li, l in enumerate(L):
        d_entries += [
            (f"ln1_w{li}", l["ln1_w"]), (f"ln1_b{li}", l["ln1_b"]),
            (f"bproj{li}", l["bproj"]),
            (f"ln2_w{li}", l["ln2_w"]), (f"ln2_b{li}", l["ln2_b"]),
            (f"b1{li}", l["b1"]), (f"b2{li}", l["b2"]),
            (f"wproj{li}", l["wproj"]),
            (f"w1{li}", l["w1"]), (f"w2{li}", l["w2"]),
        ]
        qkv_entries += [
            (f"wqkv{li}",
             jnp.concatenate([l["wq"], l["wk"], l["wv"]], axis=1)),
            (f"bqkv{li}",
             jnp.concatenate([l["bq"], l["bk"], l["bv"]], axis=1)),
        ]
        hc_entries.append((f"we{li}", l["we"]))

    lin_w_pad = jnp.zeros((D, VP), f32).at[:, :V].set(params["lin_w"])
    lin_b_pad = jnp.zeros((1, VP), f32).at[:, :V].set(params["lin_b"])
    vp_entries = [("lin_w", lin_w_pad), ("lin_b", lin_b_pad)]

    slab_d, lay_d = build_slab(d_entries)
    slab_qkv, lay_qkv = build_slab(qkv_entries)
    slab_hc, lay_hc = build_slab(hc_entries)
    slab_vp, lay_vp = build_slab(vp_entries)

    return {
        "heads": heads, "D": D, "HC": HC, "HP": HP,
        "vocab": vocab, "rel": R, "vocab_size": V, "VP": VP,
        "slab_d": slab_d, "slab_qkv": slab_qkv, "slab_hc": slab_hc,
        "slab_vp": slab_vp, "hred": jnp.asarray(hred, f32),
        "layout": {"d": lay_d, "qkv": lay_qkv, "hc": lay_hc, "vp": lay_vp},
    }


# ---------------------------------------------------------------------------
# PreTrainModel.forward
# ---------------------------------------------------------------------------
def pretrain_model_forward(packed, nodes, edge_index, edge_attr, batch=None):
    # `batch` is accepted for API fidelity with PreTrainModel.forward, but the
    # tgmnn.Sequential wiring never forwards it to the convs, so it is unused.
    del batch
    N = int(nodes.shape[0])
    E = int(edge_attr.shape[0])
    D = packed["D"]
    V = packed["vocab_size"]
    VP = packed["VP"]

    i32 = jnp.int32
    nodes_c = nodes.astype(i32).reshape(N, 1)
    eattr_c = edge_attr.astype(i32).reshape(E, 1)
    src_c = edge_index[0].astype(i32).reshape(E, 1)
    dst_c = edge_index[1].astype(i32).reshape(E, 1)
    dst_r = edge_index[1].astype(i32).reshape(1, E)

    args = (nodes_c, eattr_c, src_c, dst_c, dst_r,
            packed["slab_d"], packed["slab_qkv"], packed["slab_hc"],
            packed["hred"], packed["slab_vp"])

    kernel = make_fused_kernel(
        N=N, E=E, heads=packed["heads"], out_channels=D,
        vocab=packed["vocab"], rel=packed["rel"], layout=packed["layout"])

    out = pl.pallas_call(
        kernel,
        out_shape=jax.ShapeDtypeStruct((N, VP), jnp.float32),
        in_specs=[pl.BlockSpec(memory_space=pltpu.MemorySpace.VMEM)
                  for _ in args],
        out_specs=pl.BlockSpec(memory_space=pltpu.MemorySpace.VMEM),
        compiler_params=pltpu.CompilerParams(
            vmem_limit_bytes=32 * 1024 * 1024),
    )(*args)

    # TODO(synk): the dynamic (nodes == 0).nonzero() selection (`vst`) in
    # GraphTransformer.forward is unused by PreTrainModel's returned logits,
    # so it is not computed here.
    return out[:, :V]


# ---------------------------------------------------------------------------
# parameters (deterministic, synthetic)
# ---------------------------------------------------------------------------
def init_params(key, *, vocab_size, edge_rel_size, hidden_size, heads):
    D = hidden_size // 5
    HC = heads * D
    keys = iter(jax.random.split(key, 64))

    def w(shape, scale=0.1):
        return scale * jax.random.normal(next(keys), shape, jnp.float32)

    params = {
        "embed": w((vocab_size, D), 0.5),         # nn.Embedding(vocab, D)
        "embed_ee": w((edge_rel_size, D), 0.5),   # nn.Embedding(edge_rel, D)
        "layers": [],
        "lin_w": w((D, vocab_size)),              # nn.Linear(D, vocab) [in,out]
        "lin_b": jnp.zeros((1, vocab_size), jnp.float32),
    }
    for _ in range(3):
        params["layers"].append({
            "ln1_w": jnp.ones((1, D), jnp.float32),
            "ln1_b": jnp.zeros((1, D), jnp.float32),
            "wq": w((D, HC)), "bq": jnp.zeros((1, HC), jnp.float32),
            "wk": w((D, HC)), "bk": jnp.zeros((1, HC), jnp.float32),
            "wv": w((D, HC)), "bv": jnp.zeros((1, HC), jnp.float32),
            "we": w((D, HC)),                       # lin_edge, no bias
            "wproj": w((HC, D)),
            "bproj": jnp.zeros((1, D), jnp.float32),
            "ln2_w": jnp.ones((1, D), jnp.float32),
            "ln2_b": jnp.zeros((1, D), jnp.float32),
            "w1": w((D, D)), "b1": jnp.zeros((1, D), jnp.float32),
            "w2": w((D, D)), "b2": jnp.zeros((1, D), jnp.float32),
        })
    return params


if __name__ == "__main__":
    # small config consistent with the module: hidden_size=160 -> D=32, heads=2
    hidden_size = 160
    vocab_size = 16
    edge_rel_size = 8
    heads = 2
    N, E = 16, 32

    key = jax.random.PRNGKey(0)
    kp, kn, ks, kd, ke = jax.random.split(key, 5)
    params = init_params(kp, vocab_size=vocab_size,
                         edge_rel_size=edge_rel_size,
                         hidden_size=hidden_size, heads=heads)
    packed = pack_params(params, heads=heads)

    nodes = jax.random.randint(kn, (N,), 0, vocab_size)               # [N]
    src = jax.random.randint(ks, (E,), 0, N)
    dst = jax.random.randint(kd, (E,), 0, N)
    edge_index = jnp.stack([src, dst], axis=0)                        # [2, E]
    edge_attr = jax.random.randint(ke, (E,), 0, edge_rel_size)        # [E]
    batch = jnp.concatenate([jnp.zeros((N // 2,), jnp.int32),
                             jnp.ones((N - N // 2,), jnp.int32)])     # [N]

    fwd = jax.jit(
        lambda n, ei, ea, b: pretrain_model_forward(packed, n, ei, ea, b))
    out = fwd(nodes, edge_index, edge_attr, batch)
    jax.block_until_ready(out)
    assert out.shape == (N, vocab_size) and out.dtype == jnp.float32
    print("KERNEL_OK")
</pallas_src>

<mosaic_0001>
module attributes {stable_mosaic.version = 11 : i64} {
  func.func @kernel(%arg0: memref<16x1xi32, #tpu.memory_space<vmem>>, %arg1: memref<32x1xi32, #tpu.memory_space<vmem>>, %arg2: memref<32x1xi32, #tpu.memory_space<vmem>>, %arg3: memref<32x1xi32, #tpu.memory_space<vmem>>, %arg4: memref<1x32xi32, #tpu.memory_space<vmem>>, %arg5: memref<640x32xf32, #tpu.memory_space<vmem>>, %arg6: memref<113x192xf32, #tpu.memory_space<vmem>>, %arg7: memref<104x64xf32, #tpu.memory_space<vmem>>, %arg8: memref<64x8xf32, #tpu.memory_space<vmem>>, %arg9: memref<33x128xf32, #tpu.memory_space<vmem>>, %arg10: memref<16x128xf32, #tpu.memory_space<vmem>>) attributes {dimension_semantics = [], scalar_prefetch = 0 : i64, scratch_operands = 0 : i64, tpu.core_type = #tpu.core_type<tc>} {
    %0 = tpu.iota {dimensions = array<i32: 1>} : vector<16x16xi32>
    %c0 = arith.constant 0 : index
    %c0_0 = arith.constant 0 : index
    %1 = vector.load %arg0[%c0, %c0_0] : memref<16x1xi32, #tpu.memory_space<vmem>>, vector<16x1xi32>
    %2 = vector.broadcast %1 : vector<16x1xi32> to vector<16x16xi32>
    %3 = arith.cmpi eq, %0, %2 : vector<16x16xi32>
    %4 = arith.extui %3 : vector<16x16xi1> to vector<16x16xi32>
    %5 = arith.sitofp %4 : vector<16x16xi32> to vector<16x16xf32>
    %6 = tpu.iota {dimensions = array<i32: 1>} : vector<32x8xi32>
    %c0_1 = arith.constant 0 : index
    %c0_2 = arith.constant 0 : index
    %7 = vector.load %arg1[%c0_1, %c0_2] : memref<32x1xi32, #tpu.memory_space<vmem>>, vector<32x1xi32>
    %8 = vector.broadcast %7 : vector<32x1xi32> to vector<32x8xi32>
    %9 = arith.cmpi eq, %6, %8 : vector<32x8xi32>
    %10 = arith.extui %9 : vector<32x8xi1> to vector<32x8xi32>
    %11 = arith.sitofp %10 : vector<32x8xi32> to vector<32x8xf32>
    %12 = tpu.iota {dimensions = array<i32: 1>} : vector<32x16xi32>
    %c0_3 = arith.constant 0 : index
    %c0_4 = arith.constant 0 : index
    %13 = vector.load %arg2[%c0_3, %c0_4] : memref<32x1xi32, #tpu.memory_space<vmem>>, vector<32x1xi32>
    %14 = vector.broadcast %13 : vector<32x1xi32> to vector<32x16xi32>
    %15 = arith.cmpi eq, %12, %14 : vector<32x16xi32>
    %16 = arith.extui %15 : vector<32x16xi1> to vector<32x16xi32>
    %17 = arith.sitofp %16 : vector<32x16xi32> to vector<32x16xf32>
    %c0_5 = arith.constant 0 : index
    %c0_6 = arith.constant 0 : index
    %18 = vector.load %arg3[%c0_5, %c0_6] : memref<32x1xi32, #tpu.memory_space<vmem>>, vector<32x1xi32>
    %19 = vector.broadcast %18 : vector<32x1xi32> to vector<32x16xi32>
    %20 = arith.cmpi eq, %12, %19 : vector<32x16xi32>
    %21 = arith.extui %20 : vector<32x16xi1> to vector<32x16xi32>
    %22 = arith.sitofp %21 : vector<32x16xi32> to vector<32x16xf32>
    %23 = tpu.iota {dimensions = array<i32: 0>} : vector<16x32xi32>
    %c0_7 = arith.constant 0 : index
    %c0_8 = arith.constant 0 : index
    %24 = vector.load %arg4[%c0_7, %c0_8] : memref<1x32xi32, #tpu.memory_space<vmem>>, vector<1x32xi32>
    %25 = vector.broadcast %24 : vector<1x32xi32> to vector<16x32xi32>
    %26 = arith.cmpi eq, %23, %25 : vector<16x32xi32>
    %27 = arith.extui %26 : vector<16x32xi1> to vector<16x32xi32>
    %28 = arith.sitofp %27 : vector<16x32xi32> to vector<16x32xf32>
    %c0_9 = arith.constant 0 : index
    %c0_10 = arith.constant 0 : index
    %29 = vector.load %arg8[%c0_9, %c0_10] : memref<64x8xf32, #tpu.memory_space<vmem>>, vector<64x8xf32>
    %c0_11 = arith.constant 0 : index
    %c0_12 = arith.constant 0 : index
    %30 = vector.load %arg7[%c0_11, %c0_12] : memref<104x64xf32, #tpu.memory_space<vmem>>, vector<8x64xf32>
    %c24 = arith.constant 24 : index
    %c0_13 = arith.constant 0 : index
    %31 = vector.load %arg5[%c24, %c0_13] : memref<640x32xf32, #tpu.memory_space<vmem>>, vector<64x32xf32>
    %c0_14 = arith.constant 0 : index
    %c0_15 = arith.constant 0 : index
    %32 = vector.load %arg5[%c0_14, %c0_15] : memref<640x32xf32, #tpu.memory_space<vmem>>, vector<16x32xf32>
    %cst = arith.constant dense<0.000000e+00> : vector<16x32xf32>
    %33 = tpu.matmul %5, %32, %cst {dimension_numbers = #tpu.dot_dimension_numbers<[1], [0], [0], [1], [0, 0, 1, 1], [], []>} : vector<16x16xf32>, vector<16x32xf32>, vector<16x32xf32> -> vector<16x32xf32>
    %c16 = arith.constant 16 : index
    %c0_16 = arith.constant 0 : index
    %34 = vector.load %arg5[%c16, %c0_16] : memref<640x32xf32, #tpu.memory_space<vmem>>, vector<8x32xf32>
    %cst_17 = arith.constant dense<0.000000e+00> : vector<32x32xf32>
    %35 = tpu.matmul %11, %34, %cst_17 {dimension_numbers = #tpu.dot_dimension_numbers<[1], [0], [0], [1], [0, 0, 1, 1], [], []>} : vector<32x8xf32>, vector<8x32xf32>, vector<32x32xf32> -> vector<32x32xf32>
    %c88 = arith.constant 88 : index
    %c0_18 = arith.constant 0 : index
    %36 = vector.load %arg5[%c88, %c0_18] : memref<640x32xf32, #tpu.memory_space<vmem>>, vector<1x32xf32>
    %c96 = arith.constant 96 : index
    %c0_19 = arith.constant 0 : index
    %37 = vector.load %arg5[%c96, %c0_19] : memref<640x32xf32, #tpu.memory_space<vmem>>, vector<1x32xf32>
    %cst_20 = arith.constant dense<0.000000e+00> : vector<16xf32>
    %38 = vector.multi_reduction <add>, %33, %cst_20 [1] : vector<16x32xf32> to vector<16xf32>
    %39 = vector.shape_cast %38 : vector<16xf32> to vector<16x1xf32>
    %cst_21 = arith.constant dense<0.000000e+00> : vector<1xf32>
    %40 = vector.multi_reduction <add>, %39, %cst_21 [0] : vector<16x1xf32> to vector<1xf32>
    %41 = vector.shape_cast %40 : vector<1xf32> to vector<1x1xf32>
    %cst_22 = arith.constant 0.001953125 : f32
    %42 = vector.broadcast %cst_22 : f32 to vector<1x1xf32>
    %43 = arith.mulf %41, %42 : vector<1x1xf32>
    %44 = vector.broadcast %43 : vector<1x1xf32> to vector<16x32xf32>
    %45 = arith.subf %33, %44 : vector<16x32xf32>
    %46 = arith.mulf %45, %45 : vector<16x32xf32>
    %cst_23 = arith.constant dense<0.000000e+00> : vector<16xf32>
    %47 = vector.multi_reduction <add>, %46, %cst_23 [1] : vector<16x32xf32> to vector<16xf32>
    %48 = vector.shape_cast %47 : vector<16xf32> to vector<16x1xf32>
    %cst_24 = arith.constant dense<0.000000e+00> : vector<1xf32>
    %49 = vector.multi_reduction <add>, %48, %cst_24 [0] : vector<16x1xf32> to vector<1xf32>
    %50 = vector.shape_cast %49 : vector<1xf32> to vector<1x1xf32>
    %cst_25 = arith.constant 0.001953125 : f32
    %51 = vector.broadcast %cst_25 : f32 to vector<1x1xf32>
    %52 = arith.mulf %50, %51 : vector<1x1xf32>
    %53 = math.sqrt %52 : vector<1x1xf32>
    %cst_26 = arith.constant 9.99999974E-6 : f32
    %54 = vector.broadcast %cst_26 : f32 to vector<1x1xf32>
    %55 = arith.addf %53, %54 : vector<1x1xf32>
    %56 = tpu.reciprocal %55 {approx = true} : vector<1x1xf32> -> vector<1x1xf32>
    %57 = vector.broadcast %56 : vector<1x1xf32> to vector<16x32xf32>
    %58 = arith.mulf %45, %57 : vector<16x32xf32>
    %59 = vector.broadcast %36 : vector<1x32xf32> to vector<16x32xf32>
    %60 = arith.mulf %58, %59 : vector<16x32xf32>
    %61 = vector.broadcast %37 : vector<1x32xf32> to vector<16x32xf32>
    %62 = arith.addf %60, %61 : vector<16x32xf32>
    %c0_27 = arith.constant 0 : index
    %c0_28 = arith.constant 0 : index
    %63 = vector.load %arg6[%c0_27, %c0_28] : memref<113x192xf32, #tpu.memory_space<vmem>>, vector<32x192xf32>
    %cst_29 = arith.constant dense<0.000000e+00> : vector<16x192xf32>
    %64 = tpu.matmul %62, %63, %cst_29 {dimension_numbers = #tpu.dot_dimension_numbers<[1], [0], [0], [1], [0, 0, 1, 1], [], []>} : vector<16x32xf32>, vector<32x192xf32>, vector<16x192xf32> -> vector<16x192xf32>
    %c32 = arith.constant 32 : index
    %c0_30 = arith.constant 0 : index
    %65 = vector.load %arg6[%c32, %c0_30] : memref<113x192xf32, #tpu.memory_space<vmem>>, vector<1x192xf32>
    %66 = vector.broadcast %65 : vector<1x192xf32> to vector<16x192xf32>
    %67 = arith.addf %64, %66 : vector<16x192xf32>
    %68 = vector.extract_strided_slice %67 {offsets = [0, 0], sizes = [16, 64], strides = [1, 1]} : vector<16x192xf32> to vector<16x64xf32>
    %69 = vector.extract_strided_slice %67 {offsets = [0, 64], sizes = [16, 64], strides = [1, 1]} : vector<16x192xf32> to vector<16x64xf32>
    %70 = vector.extract_strided_slice %67 {offsets = [0, 128], sizes = [16, 64], strides = [1, 1]} : vector<16x192xf32> to vector<16x64xf32>
    %c8 = arith.constant 8 : index
    %c0_31 = arith.constant 0 : index
    %71 = vector.load %arg7[%c8, %c0_31] : memref<104x64xf32, #tpu.memory_space<vmem>>, vector<32x64xf32>
    %cst_32 = arith.constant dense<0.000000e+00> : vector<32x64xf32>
    %72 = tpu.matmul %35, %71, %cst_32 {dimension_numbers = #tpu.dot_dimension_numbers<[1], [0], [0], [1], [0, 0, 1, 1], [], []>} : vector<32x32xf32>, vector<32x64xf32>, vector<32x64xf32> -> vector<32x64xf32>
    %cst_33 = arith.constant dense<0.000000e+00> : vector<32x64xf32>
    %73 = tpu.matmul %22, %68, %cst_33 {dimension_numbers = #tpu.dot_dimension_numbers<[1], [0], [0], [1], [0, 0, 1, 1], [], []>} : vector<32x16xf32>, vector<16x64xf32>, vector<32x64xf32> -> vector<32x64xf32>
    %cst_34 = arith.constant dense<0.000000e+00> : vector<32x64xf32>
    %74 = tpu.matmul %17, %69, %cst_34 {dimension_numbers = #tpu.dot_dimension_numbers<[1], [0], [0], [1], [0, 0, 1, 1], [], []>} : vector<32x16xf32>, vector<16x64xf32>, vector<32x64xf32> -> vector<32x64xf32>
    %75 = arith.addf %74, %72 : vector<32x64xf32>
    %cst_35 = arith.constant dense<0.000000e+00> : vector<32x64xf32>
    %76 = tpu.matmul %17, %70, %cst_35 {dimension_numbers = #tpu.dot_dimension_numbers<[1], [0], [0], [1], [0, 0, 1, 1], [], []>} : vector<32x16xf32>, vector<16x64xf32>, vector<32x64xf32> -> vector<32x64xf32>
    %77 = arith.addf %76, %72 : vector<32x64xf32>
    %78 = arith.mulf %73, %75 : vector<32x64xf32>
    %cst_36 = arith.constant dense<0.000000e+00> : vector<32x8xf32>
    %79 = tpu.matmul %78, %29, %cst_36 {dimension_numbers = #tpu.dot_dimension_numbers<[1], [0], [0], [1], [0, 0, 1, 1], [], []>} : vector<32x64xf32>, vector<64x8xf32>, vector<32x8xf32> -> vector<32x8xf32>
    %cst_37 = arith.constant dense<0xFF800000> : vector<8xf32>
    %80 = vector.multi_reduction <maximumf>, %79, %cst_37 [0] : vector<32x8xf32> to vector<8xf32>
    %81 = vector.shape_cast %80 : vector<8xf32> to vector<1x8xf32>
    %82 = vector.broadcast %81 : vector<1x8xf32> to vector<32x8xf32>
    %83 = arith.subf %79, %82 : vector<32x8xf32>
    %84 = math.exp %83 : vector<32x8xf32>
    %cst_38 = arith.constant dense<0.000000e+00> : vector<16x8xf32>
    %85 = tpu.matmul %28, %84, %cst_38 {dimension_numbers = #tpu.dot_dimension_numbers<[1], [0], [0], [1], [0, 0, 1, 1], [], []>} : vector<16x32xf32>, vector<32x8xf32>, vector<16x8xf32> -> vector<16x8xf32>
    %cst_39 = arith.constant dense<0.000000e+00> : vector<32x8xf32>
    %86 = tpu.matmul %22, %85, %cst_39 {dimension_numbers = #tpu.dot_dimension_numbers<[1], [0], [0], [1], [0, 0, 1, 1], [], []>} : vector<32x16xf32>, vector<16x8xf32>, vector<32x8xf32> -> vector<32x8xf32>
    %cst_40 = arith.constant 1.000000e-16 : f32
    %87 = vector.broadcast %cst_40 : f32 to vector<32x8xf32>
    %88 = arith.addf %86, %87 : vector<32x8xf32>
    %89 = tpu.reciprocal %88 {approx = true} : vector<32x8xf32> -> vector<32x8xf32>
    %90 = arith.mulf %84, %89 : vector<32x8xf32>
    %cst_41 = arith.constant dense<0.000000e+00> : vector<32x64xf32>
    %91 = tpu.matmul %90, %30, %cst_41 {dimension_numbers = #tpu.dot_dimension_numbers<[1], [0], [0], [1], [0, 0, 1, 1], [], []>} : vector<32x8xf32>, vector<8x64xf32>, vector<32x64xf32> -> vector<32x64xf32>
    %92 = arith.mulf %77, %91 : vector<32x64xf32>
    %cst_42 = arith.constant dense<0.000000e+00> : vector<16x64xf32>
    %93 = tpu.matmul %28, %92, %cst_42 {dimension_numbers = #tpu.dot_dimension_numbers<[1], [0], [0], [1], [0, 0, 1, 1], [], []>} : vector<16x32xf32>, vector<32x64xf32>, vector<16x64xf32> -> vector<16x64xf32>
    %c144 = arith.constant 144 : index
    %c0_43 = arith.constant 0 : index
    %94 = vector.load %arg5[%c144, %c0_43] : memref<640x32xf32, #tpu.memory_space<vmem>>, vector<64x32xf32>
    %cst_44 = arith.constant dense<0.000000e+00> : vector<16x32xf32>
    %95 = tpu.matmul %93, %94, %cst_44 {dimension_numbers = #tpu.dot_dimension_numbers<[1], [0], [0], [1], [0, 0, 1, 1], [], []>} : vector<16x64xf32>, vector<64x32xf32>, vector<16x32xf32> -> vector<16x32xf32>
    %c104 = arith.constant 104 : index
    %c0_45 = arith.constant 0 : index
    %96 = vector.load %arg5[%c104, %c0_45] : memref<640x32xf32, #tpu.memory_space<vmem>>, vector<1x32xf32>
    %97 = vector.broadcast %96 : vector<1x32xf32> to vector<16x32xf32>
    %98 = arith.addf %95, %97 : vector<16x32xf32>
    %99 = arith.addf %98, %33 : vector<16x32xf32>
    %c112 = arith.constant 112 : index
    %c0_46 = arith.constant 0 : index
    %100 = vector.load %arg5[%c112, %c0_46] : memref<640x32xf32, #tpu.memory_space<vmem>>, vector<1x32xf32>
    %c120 = arith.constant 120 : index
    %c0_47 = arith.constant 0 : index
    %101 = vector.load %arg5[%c120, %c0_47] : memref<640x32xf32, #tpu.memory_space<vmem>>, vector<1x32xf32>
    %cst_48 = arith.constant dense<0.000000e+00> : vector<16xf32>
    %102 = vector.multi_reduction <add>, %99, %cst_48 [1] : vector<16x32xf32> to vector<16xf32>
    %103 = vector.shape_cast %102 : vector<16xf32> to vector<16x1xf32>
    %cst_49 = arith.constant dense<0.000000e+00> : vector<1xf32>
    %104 = vector.multi_reduction <add>, %103, %cst_49 [0] : vector<16x1xf32> to vector<1xf32>
    %105 = vector.shape_cast %104 : vector<1xf32> to vector<1x1xf32>
    %cst_50 = arith.constant 0.001953125 : f32
    %106 = vector.broadcast %cst_50 : f32 to vector<1x1xf32>
    %107 = arith.mulf %105, %106 : vector<1x1xf32>
    %108 = vector.broadcast %107 : vector<1x1xf32> to vector<16x32xf32>
    %109 = arith.subf %99, %108 : vector<16x32xf32>
    %110 = arith.mulf %109, %109 : vector<16x32xf32>
    %cst_51 = arith.constant dense<0.000000e+00> : vector<16xf32>
    %111 = vector.multi_reduction <add>, %110, %cst_51 [1] : vector<16x32xf32> to vector<16xf32>
    %112 = vector.shape_cast %111 : vector<16xf32> to vector<16x1xf32>
    %cst_52 = arith.constant dense<0.000000e+00> : vector<1xf32>
    %113 = vector.multi_reduction <add>, %112, %cst_52 [0] : vector<16x1xf32> to vector<1xf32>
    %114 = vector.shape_cast %113 : vector<1xf32> to vector<1x1xf32>
    %cst_53 = arith.constant 0.001953125 : f32
    %115 = vector.broadcast %cst_53 : f32 to vector<1x1xf32>
    %116 = arith.mulf %114, %115 : vector<1x1xf32>
    %117 = math.sqrt %116 : vector<1x1xf32>
    %cst_54 = arith.constant 9.99999974E-6 : f32
    %118 = vector.broadcast %cst_54 : f32 to vector<1x1xf32>
    %119 = arith.addf %117, %118 : vector<1x1xf32>
    %120 = tpu.reciprocal %119 {approx = true} : vector<1x1xf32> -> vector<1x1xf32>
    %121 = vector.broadcast %120 : vector<1x1xf32> to vector<16x32xf32>
    %122 = arith.mulf %109, %121 : vector<16x32xf32>
    %123 = vector.broadcast %100 : vector<1x32xf32> to vector<16x32xf32>
    %124 = arith.mulf %122, %123 : vector<16x32xf32>
    %125 = vector.broadcast %101 : vector<1x32xf32> to vector<16x32xf32>
    %126 = arith.addf %124, %125 : vector<16x32xf32>
    %c208 = arith.constant 208 : index
    %c0_55 = arith.constant 0 : index
    %127 = vector.load %arg5[%c208, %c0_55] : memref<640x32xf32, #tpu.memory_space<vmem>>, vector<32x32xf32>
    %cst_56 = arith.constant dense<0.000000e+00> : vector<16x32xf32>
    %128 = tpu.matmul %126, %127, %cst_56 {dimension_numbers = #tpu.dot_dimension_numbers<[1], [0], [0], [1], [0, 0, 1, 1], [], []>} : vector<16x32xf32>, vector<32x32xf32>, vector<16x32xf32> -> vector<16x32xf32>
    %c128 = arith.constant 128 : index
    %c0_57 = arith.constant 0 : index
    %129 = vector.load %arg5[%c128, %c0_57] : memref<640x32xf32, #tpu.memory_space<vmem>>, vector<1x32xf32>
    %130 = vector.broadcast %129 : vector<1x32xf32> to vector<16x32xf32>
    %131 = arith.addf %128, %130 : vector<16x32xf32>
    %cst_58 = arith.constant 5.000000e-01 : f32
    %132 = vector.broadcast %cst_58 : f32 to vector<16x32xf32>
    %133 = arith.mulf %132, %131 : vector<16x32xf32>
    %cst_59 = arith.constant 4.471500e-02 : f32
    %134 = vector.broadcast %cst_59 : f32 to vector<16x32xf32>
    %135 = arith.mulf %134, %131 : vector<16x32xf32>
    %136 = arith.mulf %135, %131 : vector<16x32xf32>
    %137 = arith.mulf %136, %131 : vector<16x32xf32>
    %138 = arith.addf %131, %137 : vector<16x32xf32>
    %cst_60 = arith.constant 0.797884583 : f32
    %139 = vector.broadcast %cst_60 : f32 to vector<16x32xf32>
    %140 = arith.mulf %139, %138 : vector<16x32xf32>
    %141 = math.tanh %140 : vector<16x32xf32>
    %cst_61 = arith.constant 1.000000e+00 : f32
    %142 = vector.broadcast %cst_61 : f32 to vector<16x32xf32>
    %143 = arith.addf %142, %141 : vector<16x32xf32>
    %144 = arith.mulf %133, %143 : vector<16x32xf32>
    %c240 = arith.constant 240 : index
    %c0_62 = arith.constant 0 : index
    %145 = vector.load %arg5[%c240, %c0_62] : memref<640x32xf32, #tpu.memory_space<vmem>>, vector<32x32xf32>
    %cst_63 = arith.constant dense<0.000000e+00> : vector<16x32xf32>
    %146 = tpu.matmul %144, %145, %cst_63 {dimension_numbers = #tpu.dot_dimension_numbers<[1], [0], [0], [1], [0, 0, 1, 1], [], []>} : vector<16x32xf32>, vector<32x32xf32>, vector<16x32xf32> -> vector<16x32xf32>
    %c136 = arith.constant 136 : index
    %c0_64 = arith.constant 0 : index
    %147 = vector.load %arg5[%c136, %c0_64] : memref<640x32xf32, #tpu.memory_space<vmem>>, vector<1x32xf32>
    %148 = vector.broadcast %147 : vector<1x32xf32> to vector<16x32xf32>
    %149 = arith.addf %146, %148 : vector<16x32xf32>
    %150 = arith.addf %149, %99 : vector<16x32xf32>
    %cst_65 = arith.constant 5.000000e-01 : f32
    %151 = vector.broadcast %cst_65 : f32 to vector<16x32xf32>
    %152 = arith.mulf %151, %150 : vector<16x32xf32>
    %cst_66 = arith.constant 4.471500e-02 : f32
    %153 = vector.broadcast %cst_66 : f32 to vector<16x32xf32>
    %154 = arith.mulf %153, %150 : vector<16x32xf32>
    %155 = arith.mulf %154, %150 : vector<16x32xf32>
    %156 = arith.mulf %155, %150 : vector<16x32xf32>
    %157 = arith.addf %150, %156 : vector<16x32xf32>
    %cst_67 = arith.constant 0.797884583 : f32
    %158 = vector.broadcast %cst_67 : f32 to vector<16x32xf32>
    %159 = arith.mulf %158, %157 : vector<16x32xf32>
    %160 = math.tanh %159 : vector<16x32xf32>
    %cst_68 = arith.constant 1.000000e+00 : f32
    %161 = vector.broadcast %cst_68 : f32 to vector<16x32xf32>
    %162 = arith.addf %161, %160 : vector<16x32xf32>
    %163 = arith.mulf %152, %162 : vector<16x32xf32>
    %c272 = arith.constant 272 : index
    %c0_69 = arith.constant 0 : index
    %164 = vector.load %arg5[%c272, %c0_69] : memref<640x32xf32, #tpu.memory_space<vmem>>, vector<1x32xf32>
    %c280 = arith.constant 280 : index
    %c0_70 = arith.constant 0 : index
    %165 = vector.load %arg5[%c280, %c0_70] : memref<640x32xf32, #tpu.memory_space<vmem>>, vector<1x32xf32>
    %cst_71 = arith.constant dense<0.000000e+00> : vector<16xf32>
    %166 = vector.multi_reduction <add>, %163, %cst_71 [1] : vector<16x32xf32> to vector<16xf32>
    %167 = vector.shape_cast %166 : vector<16xf32> to vector<16x1xf32>
    %cst_72 = arith.constant dense<0.000000e+00> : vector<1xf32>
    %168 = vector.multi_reduction <add>, %167, %cst_72 [0] : vector<16x1xf32> to vector<1xf32>
    %169 = vector.shape_cast %168 : vector<1xf32> to vector<1x1xf32>
    %cst_73 = arith.constant 0.001953125 : f32
    %170 = vector.broadcast %cst_73 : f32 to vector<1x1xf32>
    %171 = arith.mulf %169, %170 : vector<1x1xf32>
    %172 = vector.broadcast %171 : vector<1x1xf32> to vector<16x32xf32>
    %173 = arith.subf %163, %172 : vector<16x32xf32>
    %174 = arith.mulf %173, %173 : vector<16x32xf32>
    %cst_74 = arith.constant dense<0.000000e+00> : vector<16xf32>
    %175 = vector.multi_reduction <add>, %174, %cst_74 [1] : vector<16x32xf32> to vector<16xf32>
    %176 = vector.shape_cast %175 : vector<16xf32> to vector<16x1xf32>
    %cst_75 = arith.constant dense<0.000000e+00> : vector<1xf32>
    %177 = vector.multi_reduction <add>, %176, %cst_75 [0] : vector<16x1xf32> to vector<1xf32>
    %178 = vector.shape_cast %177 : vector<1xf32> to vector<1x1xf32>
    %cst_76 = arith.constant 0.001953125 : f32
    %179 = vector.broadcast %cst_76 : f32 to vector<1x1xf32>
    %180 = arith.mulf %178, %179 : vector<1x1xf32>
    %181 = math.sqrt %180 : vector<1x1xf32>
    %cst_77 = arith.constant 9.99999974E-6 : f32
    %182 = vector.broadcast %cst_77 : f32 to vector<1x1xf32>
    %183 = arith.addf %181, %182 : vector<1x1xf32>
    %184 = tpu.reciprocal %183 {approx = true} : vector<1x1xf32> -> vector<1x1xf32>
    %185 = vector.broadcast %184 : vector<1x1xf32> to vector<16x32xf32>
    %186 = arith.mulf %173, %185 : vector<16x32xf32>
    %187 = vector.broadcast %164 : vector<1x32xf32> to vector<16x32xf32>
    %188 = arith.mulf %186, %187 : vector<16x32xf32>
    %189 = vector.broadcast %165 : vector<1x32xf32> to vector<16x32xf32>
    %190 = arith.addf %188, %189 : vector<16x32xf32>
    %c40 = arith.constant 40 : index
    %c0_78 = arith.constant 0 : index
    %191 = vector.load %arg6[%c40, %c0_78] : memref<113x192xf32, #tpu.memory_space<vmem>>, vector<32x192xf32>
    %cst_79 = arith.constant dense<0.000000e+00> : vector<16x192xf32>
    %192 = tpu.matmul %190, %191, %cst_79 {dimension_numbers = #tpu.dot_dimension_numbers<[1], [0], [0], [1], [0, 0, 1, 1], [], []>} : vector<16x32xf32>, vector<32x192xf32>, vector<16x192xf32> -> vector<16x192xf32>
    %c72 = arith.constant 72 : index
    %c0_80 = arith.constant 0 : index
    %193 = vector.load %arg6[%c72, %c0_80] : memref<113x192xf32, #tpu.memory_space<vmem>>, vector<1x192xf32>
    %194 = vector.broadcast %193 : vector<1x192xf32> to vector<16x192xf32>
    %195 = arith.addf %192, %194 : vector<16x192xf32>
    %196 = vector.extract_strided_slice %195 {offsets = [0, 0], sizes = [16, 64], strides = [1, 1]} : vector<16x192xf32> to vector<16x64xf32>
    %197 = vector.extract_strided_slice %195 {offsets = [0, 64], sizes = [16, 64], strides = [1, 1]} : vector<16x192xf32> to vector<16x64xf32>
    %198 = vector.extract_strided_slice %195 {offsets = [0, 128], sizes = [16, 64], strides = [1, 1]} : vector<16x192xf32> to vector<16x64xf32>
    %c40_81 = arith.constant 40 : index
    %c0_82 = arith.constant 0 : index
    %199 = vector.load %arg7[%c40_81, %c0_82] : memref<104x64xf32, #tpu.memory_space<vmem>>, vector<32x64xf32>
    %cst_83 = arith.constant dense<0.000000e+00> : vector<32x64xf32>
    %200 = tpu.matmul %35, %199, %cst_83 {dimension_numbers = #tpu.dot_dimension_numbers<[1], [0], [0], [1], [0, 0, 1, 1], [], []>} : vector<32x32xf32>, vector<32x64xf32>, vector<32x64xf32> -> vector<32x64xf32>
    %cst_84 = arith.constant dense<0.000000e+00> : vector<32x64xf32>
    %201 = tpu.matmul %22, %196, %cst_84 {dimension_numbers = #tpu.dot_dimension_numbers<[1], [0], [0], [1], [0, 0, 1, 1], [], []>} : vector<32x16xf32>, vector<16x64xf32>, vector<32x64xf32> -> vector<32x64xf32>
    %cst_85 = arith.constant dense<0.000000e+00> : vector<32x64xf32>
    %202 = tpu.matmul %17, %197, %cst_85 {dimension_numbers = #tpu.dot_dimension_numbers<[1], [0], [0], [1], [0, 0, 1, 1], [], []>} : vector<32x16xf32>, vector<16x64xf32>, vector<32x64xf32> -> vector<32x64xf32>
    %203 = arith.addf %202, %200 : vector<32x64xf32>
    %cst_86 = arith.constant dense<0.000000e+00> : vector<32x64xf32>
    %204 = tpu.matmul %17, %198, %cst_86 {dimension_numbers = #tpu.dot_dimension_numbers<[1], [0], [0], [1], [0, 0, 1, 1], [], []>} : vector<32x16xf32>, vector<16x64xf32>, vector<32x64xf32> -> vector<32x64xf32>
    %205 = arith.addf %204, %200 : vector<32x64xf32>
    %206 = arith.mulf %201, %203 : vector<32x64xf32>
    %cst_87 = arith.constant dense<0.000000e+00> : vector<32x8xf32>
    %207 = tpu.matmul %206, %29, %cst_87 {dimension_numbers = #tpu.dot_dimension_numbers<[1], [0], [0], [1], [0, 0, 1, 1], [], []>} : vector<32x64xf32>, vector<64x8xf32>, vector<32x8xf32> -> vector<32x8xf32>
    %cst_88 = arith.constant dense<0xFF800000> : vector<8xf32>
    %208 = vector.multi_reduction <maximumf>, %207, %cst_88 [0] : vector<32x8xf32> to vector<8xf32>
    %209 = vector.shape_cast %208 : vector<8xf32> to vector<1x8xf32>
    %210 = vector.broadcast %209 : vector<1x8xf32> to vector<32x8xf32>
    %211 = arith.subf %207, %210 : vector<32x8xf32>
    %212 = math.exp %211 : vector<32x8xf32>
    %cst_89 = arith.constant dense<0.000000e+00> : vector<16x8xf32>
    %213 = tpu.matmul %28, %212, %cst_89 {dimension_numbers = #tpu.dot_dimension_numbers<[1], [0], [0], [1], [0, 0, 1, 1], [], []>} : vector<16x32xf32>, vector<32x8xf32>, vector<16x8xf32> -> vector<16x8xf32>
    %cst_90 = arith.constant dense<0.000000e+00> : vector<32x8xf32>
    %214 = tpu.matmul %22, %213, %cst_90 {dimension_numbers = #tpu.dot_dimension_numbers<[1], [0], [0], [1], [0, 0, 1, 1], [], []>} : vector<32x16xf32>, vector<16x8xf32>, vector<32x8xf32> -> vector<32x8xf32>
    %cst_91 = arith.constant 1.000000e-16 : f32
    %215 = vector.broadcast %cst_91 : f32 to vector<32x8xf32>
    %216 = arith.addf %214, %215 : vector<32x8xf32>
    %217 = tpu.reciprocal %216 {approx = true} : vector<32x8xf32> -> vector<32x8xf32>
    %218 = arith.mulf %212, %217 : vector<32x8xf32>
    %cst_92 = arith.constant dense<0.000000e+00> : vector<32x64xf32>
    %219 = tpu.matmul %218, %30, %cst_92 {dimension_numbers = #tpu.dot_dimension_numbers<[1], [0], [0], [1], [0, 0, 1, 1], [], []>} : vector<32x8xf32>, vector<8x64xf32>, vector<32x64xf32> -> vector<32x64xf32>
    %220 = arith.mulf %205, %219 : vector<32x64xf32>
    %cst_93 = arith.constant dense<0.000000e+00> : vector<16x64xf32>
    %221 = tpu.matmul %28, %220, %cst_93 {dimension_numbers = #tpu.dot_dimension_numbers<[1], [0], [0], [1], [0, 0, 1, 1], [], []>} : vector<16x32xf32>, vector<32x64xf32>, vector<16x64xf32> -> vector<16x64xf32>
    %c328 = arith.constant 328 : index
    %c0_94 = arith.constant 0 : index
    %222 = vector.load %arg5[%c328, %c0_94] : memref<640x32xf32, #tpu.memory_space<vmem>>, vector<64x32xf32>
    %cst_95 = arith.constant dense<0.000000e+00> : vector<16x32xf32>
    %223 = tpu.matmul %221, %222, %cst_95 {dimension_numbers = #tpu.dot_dimension_numbers<[1], [0], [0], [1], [0, 0, 1, 1], [], []>} : vector<16x64xf32>, vector<64x32xf32>, vector<16x32xf32> -> vector<16x32xf32>
    %c288 = arith.constant 288 : index
    %c0_96 = arith.constant 0 : index
    %224 = vector.load %arg5[%c288, %c0_96] : memref<640x32xf32, #tpu.memory_space<vmem>>, vector<1x32xf32>
    %225 = vector.broadcast %224 : vector<1x32xf32> to vector<16x32xf32>
    %226 = arith.addf %223, %225 : vector<16x32xf32>
    %227 = arith.addf %226, %163 : vector<16x32xf32>
    %c296 = arith.constant 296 : index
    %c0_97 = arith.constant 0 : index
    %228 = vector.load %arg5[%c296, %c0_97] : memref<640x32xf32, #tpu.memory_space<vmem>>, vector<1x32xf32>
    %c304 = arith.constant 304 : index
    %c0_98 = arith.constant 0 : index
    %229 = vector.load %arg5[%c304, %c0_98] : memref<640x32xf32, #tpu.memory_space<vmem>>, vector<1x32xf32>
    %cst_99 = arith.constant dense<0.000000e+00> : vector<16xf32>
    %230 = vector.multi_reduction <add>, %227, %cst_99 [1] : vector<16x32xf32> to vector<16xf32>
    %231 = vector.shape_cast %230 : vector<16xf32> to vector<16x1xf32>
    %cst_100 = arith.constant dense<0.000000e+00> : vector<1xf32>
    %232 = vector.multi_reduction <add>, %231, %cst_100 [0] : vector<16x1xf32> to vector<1xf32>
    %233 = vector.shape_cast %232 : vector<1xf32> to vector<1x1xf32>
    %cst_101 = arith.constant 0.001953125 : f32
    %234 = vector.broadcast %cst_101 : f32 to vector<1x1xf32>
    %235 = arith.mulf %233, %234 : vector<1x1xf32>
    %236 = vector.broadcast %235 : vector<1x1xf32> to vector<16x32xf32>
    %237 = arith.subf %227, %236 : vector<16x32xf32>
    %238 = arith.mulf %237, %237 : vector<16x32xf32>
    %cst_102 = arith.constant dense<0.000000e+00> : vector<16xf32>
    %239 = vector.multi_reduction <add>, %238, %cst_102 [1] : vector<16x32xf32> to vector<16xf32>
    %240 = vector.shape_cast %239 : vector<16xf32> to vector<16x1xf32>
    %cst_103 = arith.constant dense<0.000000e+00> : vector<1xf32>
    %241 = vector.multi_reduction <add>, %240, %cst_103 [0] : vector<16x1xf32> to vector<1xf32>
    %242 = vector.shape_cast %241 : vector<1xf32> to vector<1x1xf32>
    %cst_104 = arith.constant 0.001953125 : f32
    %243 = vector.broadcast %cst_104 : f32 to vector<1x1xf32>
    %244 = arith.mulf %242, %243 : vector<1x1xf32>
    %245 = math.sqrt %244 : vector<1x1xf32>
    %cst_105 = arith.constant 9.99999974E-6 : f32
    %246 = vector.broadcast %cst_105 : f32 to vector<1x1xf32>
    %247 = arith.addf %245, %246 : vector<1x1xf32>
    %248 = tpu.reciprocal %247 {approx = true} : vector<1x1xf32> -> vector<1x1xf32>
    %249 = vector.broadcast %248 : vector<1x1xf32> to vector<16x32xf32>
    %250 = arith.mulf %237, %249 : vector<16x32xf32>
    %251 = vector.broadcast %228 : vector<1x32xf32> to vector<16x32xf32>
    %252 = arith.mulf %250, %251 : vector<16x32xf32>
    %253 = vector.broadcast %229 : vector<1x32xf32> to vector<16x32xf32>
    %254 = arith.addf %252, %253 : vector<16x32xf32>
    %c392 = arith.constant 392 : index
    %c0_106 = arith.constant 0 : index
    %255 = vector.load %arg5[%c392, %c0_106] : memref<640x32xf32, #tpu.memory_space<vmem>>, vector<32x32xf32>
    %cst_107 = arith.constant dense<0.000000e+00> : vector<16x32xf32>
    %256 = tpu.matmul %254, %255, %cst_107 {dimension_numbers = #tpu.dot_dimension_numbers<[1], [0], [0], [1], [0, 0, 1, 1], [], []>} : vector<16x32xf32>, vector<32x32xf32>, vector<16x32xf32> -> vector<16x32xf32>
    %c312 = arith.constant 312 : index
    %c0_108 = arith.constant 0 : index
    %257 = vector.load %arg5[%c312, %c0_108] : memref<640x32xf32, #tpu.memory_space<vmem>>, vector<1x32xf32>
    %258 = vector.broadcast %257 : vector<1x32xf32> to vector<16x32xf32>
    %259 = arith.addf %256, %258 : vector<16x32xf32>
    %cst_109 = arith.constant 5.000000e-01 : f32
    %260 = vector.broadcast %cst_109 : f32 to vector<16x32xf32>
    %261 = arith.mulf %260, %259 : vector<16x32xf32>
    %cst_110 = arith.constant 4.471500e-02 : f32
    %262 = vector.broadcast %cst_110 : f32 to vector<16x32xf32>
    %263 = arith.mulf %262, %259 : vector<16x32xf32>
    %264 = arith.mulf %263, %259 : vector<16x32xf32>
    %265 = arith.mulf %264, %259 : vector<16x32xf32>
    %266 = arith.addf %259, %265 : vector<16x32xf32>
    %cst_111 = arith.constant 0.797884583 : f32
    %267 = vector.broadcast %cst_111 : f32 to vector<16x32xf32>
    %268 = arith.mulf %267, %266 : vector<16x32xf32>
    %269 = math.tanh %268 : vector<16x32xf32>
    %cst_112 = arith.constant 1.000000e+00 : f32
    %270 = vector.broadcast %cst_112 : f32 to vector<16x32xf32>
    %271 = arith.addf %270, %269 : vector<16x32xf32>
    %272 = arith.mulf %261, %271 : vector<16x32xf32>
    %c424 = arith.constant 424 : index
    %c0_113 = arith.constant 0 : index
    %273 = vector.load %arg5[%c424, %c0_113] : memref<640x32xf32, #tpu.memory_space<vmem>>, vector<32x32xf32>
    %cst_114 = arith.constant dense<0.000000e+00> : vector<16x32xf32>
    %274 = tpu.matmul %272, %273, %cst_114 {dimension_numbers = #tpu.dot_dimension_numbers<[1], [0], [0], [1], [0, 0, 1, 1], [], []>} : vector<16x32xf32>, vector<32x32xf32>, vector<16x32xf32> -> vector<16x32xf32>
    %c320 = arith.constant 320 : index
    %c0_115 = arith.constant 0 : index
    %275 = vector.load %arg5[%c320, %c0_115] : memref<640x32xf32, #tpu.memory_space<vmem>>, vector<1x32xf32>
    %276 = vector.broadcast %275 : vector<1x32xf32> to vector<16x32xf32>
    %277 = arith.addf %274, %276 : vector<16x32xf32>
    %278 = arith.addf %277, %227 : vector<16x32xf32>
    %cst_116 = arith.constant 5.000000e-01 : f32
    %279 = vector.broadcast %cst_116 : f32 to vector<16x32xf32>
    %280 = arith.mulf %279, %278 : vector<16x32xf32>
    %cst_117 = arith.constant 4.471500e-02 : f32
    %281 = vector.broadcast %cst_117 : f32 to vector<16x32xf32>
    %282 = arith.mulf %281, %278 : vector<16x32xf32>
    %283 = arith.mulf %282, %278 : vector<16x32xf32>
    %284 = arith.mulf %283, %278 : vector<16x32xf32>
    %285 = arith.addf %278, %284 : vector<16x32xf32>
    %cst_118 = arith.constant 0.797884583 : f32
    %286 = vector.broadcast %cst_118 : f32 to vector<16x32xf32>
    %287 = arith.mulf %286, %285 : vector<16x32xf32>
    %288 = math.tanh %287 : vector<16x32xf32>
    %cst_119 = arith.constant 1.000000e+00 : f32
    %289 = vector.broadcast %cst_119 : f32 to vector<16x32xf32>
    %290 = arith.addf %289, %288 : vector<16x32xf32>
    %291 = arith.mulf %280, %290 : vector<16x32xf32>
    %c456 = arith.constant 456 : index
    %c0_120 = arith.constant 0 : index
    %292 = vector.load %arg5[%c456, %c0_120] : memref<640x32xf32, #tpu.memory_space<vmem>>, vector<1x32xf32>
    %c464 = arith.constant 464 : index
    %c0_121 = arith.constant 0 : index
    %293 = vector.load %arg5[%c464, %c0_121] : memref<640x32xf32, #tpu.memory_space<vmem>>, vector<1x32xf32>
    %cst_122 = arith.constant dense<0.000000e+00> : vector<16xf32>
    %294 = vector.multi_reduction <add>, %291, %cst_122 [1] : vector<16x32xf32> to vector<16xf32>
    %295 = vector.shape_cast %294 : vector<16xf32> to vector<16x1xf32>
    %cst_123 = arith.constant dense<0.000000e+00> : vector<1xf32>
    %296 = vector.multi_reduction <add>, %295, %cst_123 [0] : vector<16x1xf32> to vector<1xf32>
    %297 = vector.shape_cast %296 : vector<1xf32> to vector<1x1xf32>
    %cst_124 = arith.constant 0.001953125 : f32
    %298 = vector.broadcast %cst_124 : f32 to vector<1x1xf32>
    %299 = arith.mulf %297, %298 : vector<1x1xf32>
    %300 = vector.broadcast %299 : vector<1x1xf32> to vector<16x32xf32>
    %301 = arith.subf %291, %300 : vector<16x32xf32>
    %302 = arith.mulf %301, %301 : vector<16x32xf32>
    %cst_125 = arith.constant dense<0.000000e+00> : vector<16xf32>
    %303 = vector.multi_reduction <add>, %302, %cst_125 [1] : vector<16x32xf32> to vector<16xf32>
    %304 = vector.shape_cast %303 : vector<16xf32> to vector<16x1xf32>
    %cst_126 = arith.constant dense<0.000000e+00> : vector<1xf32>
    %305 = vector.multi_reduction <add>, %304, %cst_126 [0] : vector<16x1xf32> to vector<1xf32>
    %306 = vector.shape_cast %305 : vector<1xf32> to vector<1x1xf32>
    %cst_127 = arith.constant 0.001953125 : f32
    %307 = vector.broadcast %cst_127 : f32 to vector<1x1xf32>
    %308 = arith.mulf %306, %307 : vector<1x1xf32>
    %309 = math.sqrt %308 : vector<1x1xf32>
    %cst_128 = arith.constant 9.99999974E-6 : f32
    %310 = vector.broadcast %cst_128 : f32 to vector<1x1xf32>
    %311 = arith.addf %309, %310 : vector<1x1xf32>
    %312 = tpu.reciprocal %311 {approx = true} : vector<1x1xf32> -> vector<1x1xf32>
    %313 = vector.broadcast %312 : vector<1x1xf32> to vector<16x32xf32>
    %314 = arith.mulf %301, %313 : vector<16x32xf32>
    %315 = vector.broadcast %292 : vector<1x32xf32> to vector<16x32xf32>
    %316 = arith.mulf %314, %315 : vector<16x32xf32>
    %317 = vector.broadcast %293 : vector<1x32xf32> to vector<16x32xf32>
    %318 = arith.addf %316, %317 : vector<16x32xf32>
    %c80 = arith.constant 80 : index
    %c0_129 = arith.constant 0 : index
    %319 = vector.load %arg6[%c80, %c0_129] : memref<113x192xf32, #tpu.memory_space<vmem>>, vector<32x192xf32>
    %cst_130 = arith.constant dense<0.000000e+00> : vector<16x192xf32>
    %320 = tpu.matmul %318, %319, %cst_130 {dimension_numbers = #tpu.dot_dimension_numbers<[1], [0], [0], [1], [0, 0, 1, 1], [], []>} : vector<16x32xf32>, vector<32x192xf32>, vector<16x192xf32> -> vector<16x192xf32>
    %c112_131 = arith.constant 112 : index
    %c0_132 = arith.constant 0 : index
    %321 = vector.load %arg6[%c112_131, %c0_132] : memref<113x192xf32, #tpu.memory_space<vmem>>, vector<1x192xf32>
    %322 = vector.broadcast %321 : vector<1x192xf32> to vector<16x192xf32>
    %323 = arith.addf %320, %322 : vector<16x192xf32>
    %324 = vector.extract_strided_slice %323 {offsets = [0, 0], sizes = [16, 64], strides = [1, 1]} : vector<16x192xf32> to vector<16x64xf32>
    %325 = vector.extract_strided_slice %323 {offsets = [0, 64], sizes = [16, 64], strides = [1, 1]} : vector<16x192xf32> to vector<16x64xf32>
    %326 = vector.extract_strided_slice %323 {offsets = [0, 128], sizes = [16, 64], strides = [1, 1]} : vector<16x192xf32> to vector<16x64xf32>
    %c72_133 = arith.constant 72 : index
    %c0_134 = arith.constant 0 : index
    %327 = vector.load %arg7[%c72_133, %c0_134] : memref<104x64xf32, #tpu.memory_space<vmem>>, vector<32x64xf32>
    %cst_135 = arith.constant dense<0.000000e+00> : vector<32x64xf32>
    %328 = tpu.matmul %35, %327, %cst_135 {dimension_numbers = #tpu.dot_dimension_numbers<[1], [0], [0], [1], [0, 0, 1, 1], [], []>} : vector<32x32xf32>, vector<32x64xf32>, vector<32x64xf32> -> vector<32x64xf32>
    %cst_136 = arith.constant dense<0.000000e+00> : vector<32x64xf32>
    %329 = tpu.matmul %22, %324, %cst_136 {dimension_numbers = #tpu.dot_dimension_numbers<[1], [0], [0], [1], [0, 0, 1, 1], [], []>} : vector<32x16xf32>, vector<16x64xf32>, vector<32x64xf32> -> vector<32x64xf32>
    %cst_137 = arith.constant dense<0.000000e+00> : vector<32x64xf32>
    %330 = tpu.matmul %17, %325, %cst_137 {dimension_numbers = #tpu.dot_dimension_numbers<[1], [0], [0], [1], [0, 0, 1, 1], [], []>} : vector<32x16xf32>, vector<16x64xf32>, vector<32x64xf32> -> vector<32x64xf32>
    %331 = arith.addf %330, %328 : vector<32x64xf32>
    %cst_138 = arith.constant dense<0.000000e+00> : vector<32x64xf32>
    %332 = tpu.matmul %17, %326, %cst_138 {dimension_numbers = #tpu.dot_dimension_numbers<[1], [0], [0], [1], [0, 0, 1, 1], [], []>} : vector<32x16xf32>, vector<16x64xf32>, vector<32x64xf32> -> vector<32x64xf32>
    %333 = arith.addf %332, %328 : vector<32x64xf32>
    %334 = arith.mulf %329, %331 : vector<32x64xf32>
    %cst_139 = arith.constant dense<0.000000e+00> : vector<32x8xf32>
    %335 = tpu.matmul %334, %29, %cst_139 {dimension_numbers = #tpu.dot_dimension_numbers<[1], [0], [0], [1], [0, 0, 1, 1], [], []>} : vector<32x64xf32>, vector<64x8xf32>, vector<32x8xf32> -> vector<32x8xf32>
    %cst_140 = arith.constant dense<0xFF800000> : vector<8xf32>
    %336 = vector.multi_reduction <maximumf>, %335, %cst_140 [0] : vector<32x8xf32> to vector<8xf32>
    %337 = vector.shape_cast %336 : vector<8xf32> to vector<1x8xf32>
    %338 = vector.broadcast %337 : vector<1x8xf32> to vector<32x8xf32>
    %339 = arith.subf %335, %338 : vector<32x8xf32>
    %340 = math.exp %339 : vector<32x8xf32>
    %cst_141 = arith.constant dense<0.000000e+00> : vector<16x8xf32>
    %341 = tpu.matmul %28, %340, %cst_141 {dimension_numbers = #tpu.dot_dimension_numbers<[1], [0], [0], [1], [0, 0, 1, 1], [], []>} : vector<16x32xf32>, vector<32x8xf32>, vector<16x8xf32> -> vector<16x8xf32>
    %cst_142 = arith.constant dense<0.000000e+00> : vector<32x8xf32>
    %342 = tpu.matmul %22, %341, %cst_142 {dimension_numbers = #tpu.dot_dimension_numbers<[1], [0], [0], [1], [0, 0, 1, 1], [], []>} : vector<32x16xf32>, vector<16x8xf32>, vector<32x8xf32> -> vector<32x8xf32>
    %cst_143 = arith.constant 1.000000e-16 : f32
    %343 = vector.broadcast %cst_143 : f32 to vector<32x8xf32>
    %344 = arith.addf %342, %343 : vector<32x8xf32>
    %345 = tpu.reciprocal %344 {approx = true} : vector<32x8xf32> -> vector<32x8xf32>
    %346 = arith.mulf %340, %345 : vector<32x8xf32>
    %cst_144 = arith.constant dense<0.000000e+00> : vector<32x64xf32>
    %347 = tpu.matmul %346, %30, %cst_144 {dimension_numbers = #tpu.dot_dimension_numbers<[1], [0], [0], [1], [0, 0, 1, 1], [], []>} : vector<32x8xf32>, vector<8x64xf32>, vector<32x64xf32> -> vector<32x64xf32>
    %348 = arith.mulf %333, %347 : vector<32x64xf32>
    %cst_145 = arith.constant dense<0.000000e+00> : vector<16x64xf32>
    %349 = tpu.matmul %28, %348, %cst_145 {dimension_numbers = #tpu.dot_dimension_numbers<[1], [0], [0], [1], [0, 0, 1, 1], [], []>} : vector<16x32xf32>, vector<32x64xf32>, vector<16x64xf32> -> vector<16x64xf32>
    %cst_146 = arith.constant dense<0.000000e+00> : vector<16x32xf32>
    %350 = tpu.matmul %349, %31, %cst_146 {dimension_numbers = #tpu.dot_dimension_numbers<[1], [0], [0], [1], [0, 0, 1, 1], [], []>} : vector<16x64xf32>, vector<64x32xf32>, vector<16x32xf32> -> vector<16x32xf32>
    %351 = arith.addf %350, %291 : vector<16x32xf32>
    %c480 = arith.constant 480 : index
    %c0_147 = arith.constant 0 : index
    %352 = vector.load %arg5[%c480, %c0_147] : memref<640x32xf32, #tpu.memory_space<vmem>>, vector<1x32xf32>
    %c488 = arith.constant 488 : index
    %c0_148 = arith.constant 0 : index
    %353 = vector.load %arg5[%c488, %c0_148] : memref<640x32xf32, #tpu.memory_space<vmem>>, vector<1x32xf32>
    %cst_149 = arith.constant dense<0.000000e+00> : vector<16xf32>
    %354 = vector.multi_reduction <add>, %351, %cst_149 [1] : vector<16x32xf32> to vector<16xf32>
    %355 = vector.shape_cast %354 : vector<16xf32> to vector<16x1xf32>
    %cst_150 = arith.constant dense<0.000000e+00> : vector<1xf32>
    %356 = vector.multi_reduction <add>, %355, %cst_150 [0] : vector<16x1xf32> to vector<1xf32>
    %357 = vector.shape_cast %356 : vector<1xf32> to vector<1x1xf32>
    %cst_151 = arith.constant 0.001953125 : f32
    %358 = vector.broadcast %cst_151 : f32 to vector<1x1xf32>
    %359 = arith.mulf %357, %358 : vector<1x1xf32>
    %360 = vector.broadcast %359 : vector<1x1xf32> to vector<16x32xf32>
    %361 = arith.subf %351, %360 : vector<16x32xf32>
    %362 = arith.mulf %361, %361 : vector<16x32xf32>
    %cst_152 = arith.constant dense<0.000000e+00> : vector<16xf32>
    %363 = vector.multi_reduction <add>, %362, %cst_152 [1] : vector<16x32xf32> to vector<16xf32>
    %364 = vector.shape_cast %363 : vector<16xf32> to vector<16x1xf32>
    %cst_153 = arith.constant dense<0.000000e+00> : vector<1xf32>
    %365 = vector.multi_reduction <add>, %364, %cst_153 [0] : vector<16x1xf32> to vector<1xf32>
    %366 = vector.shape_cast %365 : vector<1xf32> to vector<1x1xf32>
    %cst_154 = arith.constant 0.001953125 : f32
    %367 = vector.broadcast %cst_154 : f32 to vector<1x1xf32>
    %368 = arith.mulf %366, %367 : vector<1x1xf32>
    %369 = math.sqrt %368 : vector<1x1xf32>
    %cst_155 = arith.constant 9.99999974E-6 : f32
    %370 = vector.broadcast %cst_155 : f32 to vector<1x1xf32>
    %371 = arith.addf %369, %370 : vector<1x1xf32>
    %372 = tpu.reciprocal %371 {approx = true} : vector<1x1xf32> -> vector<1x1xf32>
    %373 = vector.broadcast %372 : vector<1x1xf32> to vector<16x32xf32>
    %374 = arith.mulf %361, %373 : vector<16x32xf32>
    %375 = vector.broadcast %352 : vector<1x32xf32> to vector<16x32xf32>
    %376 = arith.mulf %374, %375 : vector<16x32xf32>
    %377 = vector.broadcast %353 : vector<1x32xf32> to vector<16x32xf32>
    %378 = arith.addf %376, %377 : vector<16x32xf32>
    %c576 = arith.constant 576 : index
    %c0_156 = arith.constant 0 : index
    %379 = vector.load %arg5[%c576, %c0_156] : memref<640x32xf32, #tpu.memory_space<vmem>>, vector<32x32xf32>
    %cst_157 = arith.constant dense<0.000000e+00> : vector<16x32xf32>
    %380 = tpu.matmul %378, %379, %cst_157 {dimension_numbers = #tpu.dot_dimension_numbers<[1], [0], [0], [1], [0, 0, 1, 1], [], []>} : vector<16x32xf32>, vector<32x32xf32>, vector<16x32xf32> -> vector<16x32xf32>
    %c496 = arith.constant 496 : index
    %c0_158 = arith.constant 0 : index
    %381 = vector.load %arg5[%c496, %c0_158] : memref<640x32xf32, #tpu.memory_space<vmem>>, vector<1x32xf32>
    %382 = vector.broadcast %381 : vector<1x32xf32> to vector<16x32xf32>
    %383 = arith.addf %380, %382 : vector<16x32xf32>
    %cst_159 = arith.constant 5.000000e-01 : f32
    %384 = vector.broadcast %cst_159 : f32 to vector<16x32xf32>
    %385 = arith.mulf %384, %383 : vector<16x32xf32>
    %cst_160 = arith.constant 4.471500e-02 : f32
    %386 = vector.broadcast %cst_160 : f32 to vector<16x32xf32>
    %387 = arith.mulf %386, %383 : vector<16x32xf32>
    %388 = arith.mulf %387, %383 : vector<16x32xf32>
    %389 = arith.mulf %388, %383 : vector<16x32xf32>
    %390 = arith.addf %383, %389 : vector<16x32xf32>
    %cst_161 = arith.constant 0.797884583 : f32
    %391 = vector.broadcast %cst_161 : f32 to vector<16x32xf32>
    %392 = arith.mulf %391, %390 : vector<16x32xf32>
    %393 = math.tanh %392 : vector<16x32xf32>
    %cst_162 = arith.constant 1.000000e+00 : f32
    %394 = vector.broadcast %cst_162 : f32 to vector<16x32xf32>
    %395 = arith.addf %394, %393 : vector<16x32xf32>
    %396 = arith.mulf %385, %395 : vector<16x32xf32>
    %c608 = arith.constant 608 : index
    %c0_163 = arith.constant 0 : index
    %397 = vector.load %arg5[%c608, %c0_163] : memref<640x32xf32, #tpu.memory_space<vmem>>, vector<32x32xf32>
    %cst_164 = arith.constant dense<0.000000e+00> : vector<16x32xf32>
    %398 = tpu.matmul %396, %397, %cst_164 {dimension_numbers = #tpu.dot_dimension_numbers<[1], [0], [0], [1], [0, 0, 1, 1], [], []>} : vector<16x32xf32>, vector<32x32xf32>, vector<16x32xf32> -> vector<16x32xf32>
    %c504 = arith.constant 504 : index
    %c0_165 = arith.constant 0 : index
    %399 = vector.load %arg5[%c504, %c0_165] : memref<640x32xf32, #tpu.memory_space<vmem>>, vector<1x32xf32>
    %400 = vector.broadcast %399 : vector<1x32xf32> to vector<16x32xf32>
    %401 = arith.addf %398, %400 : vector<16x32xf32>
    %402 = arith.addf %401, %351 : vector<16x32xf32>
    %c0_166 = arith.constant 0 : index
    %c0_167 = arith.constant 0 : index
    %403 = vector.load %arg9[%c0_166, %c0_167] : memref<33x128xf32, #tpu.memory_space<vmem>>, vector<32x128xf32>
    %cst_168 = arith.constant dense<0.000000e+00> : vector<16x128xf32>
    %404 = tpu.matmul %402, %403, %cst_168 {dimension_numbers = #tpu.dot_dimension_numbers<[1], [0], [0], [1], [0, 0, 1, 1], [], []>} : vector<16x32xf32>, vector<32x128xf32>, vector<16x128xf32> -> vector<16x128xf32>
    %c32_169 = arith.constant 32 : index
    %c0_170 = arith.constant 0 : index
    %405 = vector.load %arg9[%c32_169, %c0_170] : memref<33x128xf32, #tpu.memory_space<vmem>>, vector<1x128xf32>
    %406 = vector.broadcast %405 : vector<1x128xf32> to vector<16x128xf32>
    %407 = arith.addf %404, %406 : vector<16x128xf32>
    %c0_171 = arith.constant 0 : index
    %c0_172 = arith.constant 0 : index
    %408 = vector.load %arg10[%c0_171, %c0_172] : memref<16x128xf32, #tpu.memory_space<vmem>>, vector<16x128xf32>
    tpu.vector_store %arg10[%c0_171, %c0_172], %407 {strides = array<i32>} : memref<16x128xf32, #tpu.memory_space<vmem>>, vector<16x128xf32>,
    return
  }
}

</mosaic_0001>

<llo_original>
// kernel: _lambda_.1
$region0: #{_lambda_.1}
  #allocation0 [shape = 'u32[]', space=smem, size = 0x4, offset = 0x4, fixed_abs, tag = 'smem constant byte address 0x4 - core index']
  #allocation1 [shape = 'u32[72,128]{1,0:T(1,128)}', space=vmem, size = 0x9000, scoped, tag = 'internal scratch']
  %s0 = inlined_call_operand.vmem [shape: s32[16,1], index: 0, kind: input, shape index: {}]
  %s1 = inlined_call_operand.vmem [shape: s32[32,1], index: 1, kind: input, shape index: {}]
  %s2 = inlined_call_operand.vmem [shape: s32[32,1], index: 2, kind: input, shape index: {}]
  %s3 = inlined_call_operand.vmem [shape: s32[32,1], index: 3, kind: input, shape index: {}]
  %s4 = inlined_call_operand.vmem [shape: s32[1,32], index: 4, kind: input, shape index: {}]
  %s5 = inlined_call_operand.hbm [shape: f32[640,32], index: 5, kind: input, shape index: {}]
  %s6 = inlined_call_operand.hbm [shape: f32[113,192], index: 6, kind: input, shape index: {}]
  %s7 = inlined_call_operand.hbm [shape: f32[104,64], index: 7, kind: input, shape index: {}]
  %s8 = inlined_call_operand.vmem [shape: f32[64,8], index: 8, kind: input, shape index: {}]
  %s9 = inlined_call_operand.vmem [shape: f32[33,128], index: 9, kind: input, shape index: {}]
  %s10 = inlined_call_operand.hbm [shape: f32[16,128], index: 10, kind: output, shape index: {}]
  %s11 = sld [smem:[#allocation0]]
  $region62: #{_lambda_.1} parent=0
    _
  %s13 = ssub.s32 1, %s11
  %s14 = scalar_select 0, %s13, %s11
  $region1: #{_lambda_.1} parent=0
    #allocation2 [shape = 'u8[327680]{0}', space=vmem, size = 0x50000, scoped, tag = 'input window, operand 5, single buffered']
    #allocation3 [shape = 's32[1]{0}', space=sflag, size = 0x4, scoped, tag = 'scoped memory for _lambda_.1']
    #allocation4 [shape = 's32[1]{0}', space=sflag, size = 0x4, scoped, tag = 'scoped memory for _lambda_.1']
    #allocation5 [shape = 'u8[122880]{0}', space=vmem, size = 0x1e000, scoped, tag = 'input window, operand 6, single buffered']
    #allocation6 [shape = 's32[1]{0}', space=sflag, size = 0x4, scoped, tag = 'scoped memory for _lambda_.1']
    #allocation7 [shape = 'u8[53248]{0}', space=vmem, size = 0xd000, scoped, tag = 'input window, operand 7, single buffered']
    #allocation8 [shape = 'u8[8192]{0}', space=vmem, size = 0x2000, scoped, tag = 'output window, operand 0, single buffered']
    %15 = vsyncpa [#allocation3], 0
    %16 = vsyncpa [#allocation6], 0
    %17 = vsyncpa [#allocation4], 0
    // Predicated region
    $region2: #{_lambda_.1} parent=1 // pred_check
      _
    $region3: #{_lambda_.1} parent=1 // pred_check_branch
      %19 = sbr.rel (0) target = $region5
    $region4: #{_lambda_.1} parent=1 // pred_region
      _
    $region5: #{_lambda_.1} parent=1 // pred_fallthru
      _
    // Predicated region
    $region6: #{_lambda_.1} parent=1 // pred_check
      _
    $region7: #{_lambda_.1} parent=1 // pred_check_branch
      %21 = sbr.rel (0) target = $region9
    $region8: #{_lambda_.1} parent=1 // pred_region
      _
    $region9: #{_lambda_.1} parent=1 // pred_fallthru
      _
    // Predicated region
    $region10: #{_lambda_.1} parent=1 // pred_check
      _
    $region11: #{_lambda_.1} parent=1 // pred_check_branch
      %23 = sbr.rel (0) target = $region13
    $region12: #{_lambda_.1} parent=1 // pred_region
      _
    $region13: #{_lambda_.1} parent=1 // pred_fallthru
      _
    // Predicated region
    $region14: #{_lambda_.1} parent=1 // pred_check
      _
    $region15: #{_lambda_.1} parent=1 // pred_check_branch
      %25 = sbr.rel (0) target = $region17
    $region16: #{_lambda_.1} parent=1 // pred_region
      _
    $region17: #{_lambda_.1} parent=1 // pred_fallthru
      _
    // Predicated region
    $region18: #{_lambda_.1} parent=1 // pred_check
      _
    $region19: #{_lambda_.1} parent=1 // pred_check_branch
      %27 = sbr.rel (0) target = $region21
    $region20: #{_lambda_.1} parent=1 // pred_region
      _
    $region21: #{_lambda_.1} parent=1 // pred_fallthru
      _
    // Predicated region
    $region22: #{_lambda_.1} parent=1 // pred_check
      _
    $region23: #{_lambda_.1} parent=1 // pred_check_branch
      %29 = sbr.rel (0) target = $region25
    $region24: #{_lambda_.1} parent=1 // pred_region
      %31 = vsyncadd [#allocation3], 0
      %s32 = sshll.u32 %s5, 4
      %s33 = int_to_ptr.hbm [resolvable:$true] %s32
      %s34 = sshll.u32 [#allocation2], 4
      %s35 = int_to_ptr.vmem [resolvable:$true] %s34
      %40 = dma.hbm_to_vmem [thread:$0]  %s33, 10240, %s35, [#allocation3], 128, 128, 8
    $region25: #{_lambda_.1} parent=1 // pred_fallthru
      _
    // Predicated region
    $region26: #{_lambda_.1} parent=1 // pred_check
      _
    $region27: #{_lambda_.1} parent=1 // pred_check_branch
      %42 = sbr.rel (0) target = $region29
    $region28: #{_lambda_.1} parent=1 // pred_region
      %44 = vsyncadd [#allocation6], 0
      %s45 = sshll.u32 %s6, 4
      %s46 = int_to_ptr.hbm [resolvable:$true] %s45
      %s47 = sshll.u32 [#allocation5], 4
      %s48 = int_to_ptr.vmem [resolvable:$true] %s47
      %53 = dma.hbm_to_vmem [thread:$0]  %s46, 3840, %s48, [#allocation6], 256, 256, 16
    $region29: #{_lambda_.1} parent=1 // pred_fallthru
      _
    // Predicated region
    $region30: #{_lambda_.1} parent=1 // pred_check
      _
    $region31: #{_lambda_.1} parent=1 // pred_check_branch
      %55 = sbr.rel (0) target = $region33
    $region32: #{_lambda_.1} parent=1 // pred_region
      %57 = vsyncadd [#allocation6], 0
      %s58 = sshll.u32 %s7, 4
      %s59 = int_to_ptr.hbm [resolvable:$true] %s58
      %s60 = sshll.u32 [#allocation7], 4
      %s61 = int_to_ptr.vmem [resolvable:$true] %s60
      %66 = dma.hbm_to_vmem [thread:$0]  %s59, 1664, %s61, [#allocation6], 128, 128, 8
    $region33: #{_lambda_.1} parent=1 // pred_fallthru
      _
    // Predicated region
    $region34: #{_lambda_.1} parent=1 // pred_check
      _
    $region35: #{_lambda_.1} parent=1 // pred_check_branch
      %68 = sbr.rel (0) target = $region37
    $region36: #{_lambda_.1} parent=1 // pred_region
      _
    $region37: #{_lambda_.1} parent=1 // pred_fallthru
      _
    // Predicated region
    $region38: #{_lambda_.1} parent=1 // pred_check
      _
    $region39: #{_lambda_.1} parent=1 // pred_check_branch
      %70 = sbr.rel (0) target = $region41
    $region40: #{_lambda_.1} parent=1 // pred_region
      _
    $region41: #{_lambda_.1} parent=1 // pred_fallthru
      _
    // Predicated region
    $region42: #{_lambda_.1} parent=1 // pred_check
      _
    $region43: #{_lambda_.1} parent=1 // pred_check_branch
      %72 = sbr.rel (0) target = $region45
    $region44: #{_lambda_.1} parent=1 // pred_region
      %74 = dma.done [#allocation3], 10240
    $region45: #{_lambda_.1} parent=1 // pred_fallthru
      _
    // Predicated region
    $region46: #{_lambda_.1} parent=1 // pred_check
      _
    $region47: #{_lambda_.1} parent=1 // pred_check_branch
      %76 = sbr.rel (0) target = $region49
    $region48: #{_lambda_.1} parent=1 // pred_region
      %78 = dma.done [#allocation6], 3840
    $region49: #{_lambda_.1} parent=1 // pred_fallthru
      _
    // Predicated region
    $region50: #{_lambda_.1} parent=1 // pred_check
      _
    $region51: #{_lambda_.1} parent=1 // pred_check_branch
      %80 = sbr.rel (0) target = $region53
    $region52: #{_lambda_.1} parent=1 // pred_region
      %82 = dma.done [#allocation6], 1664
    $region53: #{_lambda_.1} parent=1 // pred_fallthru
      _
    %v83 = vlaneseq
    %v84 = vand.u32 %v83, 127
    %v85 = vld [vmem:[%s0] sm:$0xff]
    %v86 = vld [vmem:[%s0 + $0x8] sm:$0xff]
    %87 = vset.pattern.permute.xlu0 0
    %88 = vperm.xlu0 %87, %v85
    %v89 = vpop.permute.xlu0 %88
    %90 = vset.pattern.permute.xlu0 0
    %91 = vperm.xlu0 %90, %v86
    %v92 = vpop.permute.xlu0 %91
    %vm93 = vcmp.eq.s32.totalorder %v84, %v89
    %vm94 = vcmp.eq.s32.totalorder %v84, %v92
    %v95 = vsel %vm93, 1, 0
    %v96 = vsel %vm94, 1, 0
    %v97 = vcvt.s32.f32 %v95
    %v98 = vcvt.s32.f32 %v96
    %v99 = vld [vmem:[%s1] sm:$0xff]
    %v100 = vld [vmem:[%s1 + $0x8] sm:$0xff]
    %v101 = vld [vmem:[%s1 + $0x10] sm:$0xff]
    %v102 = vld [vmem:[%s1 + $0x18] sm:$0xff]
    %103 = vset.pattern.permute.xlu0 0
    %104 = vperm.xlu0 %103, %v99
    %v105 = vpop.permute.xlu0 %104
    %106 = vset.pattern.permute.xlu0 0
    %107 = vperm.xlu0 %106, %v100
    %v108 = vpop.permute.xlu0 %107
    %109 = vset.pattern.permute.xlu0 0
    %110 = vperm.xlu0 %109, %v101
    %v111 = vpop.permute.xlu0 %110
    %112 = vset.pattern.permute.xlu0 0
    %113 = vperm.xlu0 %112, %v102
    %v114 = vpop.permute.xlu0 %113
    %vm115 = vcmp.eq.s32.totalorder %v84, %v105
    %vm116 = vcmp.eq.s32.totalorder %v84, %v108
    %vm117 = vcmp.eq.s32.totalorder %v84, %v111
    %vm118 = vcmp.eq.s32.totalorder %v84, %v114
    %v119 = vsel %vm115, 1, 0
    %v120 = vsel %vm116, 1, 0
    %v121 = vsel %vm117, 1, 0
    %v122 = vsel %vm118, 1, 0
    %v123 = vcvt.s32.f32 %v119
    %v124 = vcvt.s32.f32 %v120
    %v125 = vcvt.s32.f32 %v121
    %v126 = vcvt.s32.f32 %v122
    %v127 = vld [vmem:[%s2] sm:$0xff]
    %v128 = vld [vmem:[%s2 + $0x8] sm:$0xff]
    %v129 = vld [vmem:[%s2 + $0x10] sm:$0xff]
    %v130 = vld [vmem:[%s2 + $0x18] sm:$0xff]
    %131 = vset.pattern.permute.xlu0 0
    %132 = vperm.xlu0 %131, %v127
    %v133 = vpop.permute.xlu0 %132
    %134 = vset.pattern.permute.xlu0 0
    %135 = vperm.xlu0 %134, %v128
    %v136 = vpop.permute.xlu0 %135
    %137 = vset.pattern.permute.xlu0 0
    %138 = vperm.xlu0 %137, %v129
    %v139 = vpop.permute.xlu0 %138
    %140 = vset.pattern.permute.xlu0 0
    %141 = vperm.xlu0 %140, %v130
    %v142 = vpop.permute.xlu0 %141
    %vm143 = vcmp.eq.s32.totalorder %v84, %v133
    %vm144 = vcmp.eq.s32.totalorder %v84, %v136
    %vm145 = vcmp.eq.s32.totalorder %v84, %v139
    %vm146 = vcmp.eq.s32.totalorder %v84, %v142
    %v147 = vsel %vm143, 1, 0
    %v148 = vsel %vm144, 1, 0
    %v149 = vsel %vm145, 1, 0
    %v150 = vsel %vm146, 1, 0
    %v151 = vcvt.s32.f32 %v147
    %v152 = vcvt.s32.f32 %v148
    %v153 = vcvt.s32.f32 %v149
    %v154 = vcvt.s32.f32 %v150
    %v155 = vld [vmem:[%s3] sm:$0xff]
    %v156 = vld [vmem:[%s3 + $0x8] sm:$0xff]
    %v157 = vld [vmem:[%s3 + $0x10] sm:$0xff]
    %v158 = vld [vmem:[%s3 + $0x18] sm:$0xff]
    %159 = vset.pattern.permute.xlu0 0
    %160 = vperm.xlu0 %159, %v155
    %v161 = vpop.permute.xlu0 %160
    %162 = vset.pattern.permute.xlu0 0
    %163 = vperm.xlu0 %162, %v156
    %v164 = vpop.permute.xlu0 %163
    %165 = vset.pattern.permute.xlu0 0
    %166 = vperm.xlu0 %165, %v157
    %v167 = vpop.permute.xlu0 %166
    %168 = vset.pattern.permute.xlu0 0
    %169 = vperm.xlu0 %168, %v158
    %v170 = vpop.permute.xlu0 %169
    %vm171 = vcmp.eq.s32.totalorder %v84, %v161
    %vm172 = vcmp.eq.s32.totalorder %v84, %v164
    %vm173 = vcmp.eq.s32.totalorder %v84, %v167
    %vm174 = vcmp.eq.s32.totalorder %v84, %v170
    %v175 = vsel %vm171, 1, 0
    %v176 = vsel %vm172, 1, 0
    %v177 = vsel %vm173, 1, 0
    %v178 = vsel %vm174, 1, 0
    %v179 = vcvt.s32.f32 %v175
    %v180 = vcvt.s32.f32 %v176
    %v181 = vcvt.s32.f32 %v177
    %v182 = vcvt.s32.f32 %v178
    %v183 = vlaneseq
    %v184 = vshrl.u32 %v183, 7
    %v185 = vadd.s32 %v184, 8
    %v186 = vld [vmem:[%s4] sm:$0x1]
    %v187 = vperm.slane %v186, 0
    %vm188 = vcmp.eq.s32.totalorder %v184, %v187
    %vm189 = vcmp.eq.s32.totalorder %v185, %v187
    %v190 = vsel %vm188, 1, 0
    %v191 = vsel %vm189, 1, 0
    %v192 = vcvt.s32.f32 %v190
    %v193 = vcvt.s32.f32 %v191
    %v194 = vld [vmem:[%s8] sm:$0xff]
    %v195 = vld [vmem:[%s8 + $0x8] sm:$0xff]
    %v196 = vld [vmem:[%s8 + $0x10] sm:$0xff]
    %v197 = vld [vmem:[%s8 + $0x18] sm:$0xff]
    %v198 = vld [vmem:[%s8 + $0x20] sm:$0xff]
    %v199 = vld [vmem:[%s8 + $0x28] sm:$0xff]
    %v200 = vld [vmem:[%s8 + $0x30] sm:$0xff]
    %v201 = vld [vmem:[%s8 + $0x38] sm:$0xff]
    %v202 = vld [vmem:[#allocation7] sm:$0xff]
    %v203 = vld [vmem:[#allocation2 + $0x18] sm:$0xff]
    %v204 = vld [vmem:[#allocation2 + $0x20] sm:$0xff]
    %v205 = vld [vmem:[#allocation2 + $0x28] sm:$0xff]
    %v206 = vld [vmem:[#allocation2 + $0x30] sm:$0xff]
    %v207 = vld [vmem:[#allocation2 + $0x38] sm:$0xff]
    %v208 = vld [vmem:[#allocation2 + $0x40] sm:$0xff]
    %v209 = vld [vmem:[#allocation2 + $0x48] sm:$0xff]
    %v210 = vld [vmem:[#allocation2 + $0x50] sm:$0xff]
    %v211 = vld [vmem:[#allocation2] sm:$0xff]
    %v212 = vld [vmem:[#allocation2 + $0x8] sm:$0xff]
    %vm213 = vcmask 130048
    %v215 = vsel %vm213, %v97, 0
    %v218 = vsel %vm213, %v98, 0
    %220 = vmatpush.msra.mxu0 0.0
    %221 = vmatpush.msra.mxu0 0.0
    %222 = vmatpush.msra.mxu0 0.0
    %223 = vmatpush.msra.mxu0 0.0
    %224 = vmatpush.msra.mxu0 0.0
    %225 = vmatpush.msra.mxu0 0.0
    %226 = vmatpush.msra.mxu0 0.0
    %227 = vmatpush.msra.mxu0 0.0
    %228 = vmatpush.msra.mxu0 0.0
    %229 = vmatpush.msra.mxu0 0.0
    %230 = vmatpush.msra.mxu0 0.0
    %231 = vmatpush.msra.mxu0 0.0
    %232 = vmatpush.msra.mxu0 0.0
    %233 = vmatpush.msra.mxu0 0.0
    %234 = vmatpush.msra.mxu0 %v212
    %235 = vmatpush.msra.mxu0 %v211
    %236 = vmatmul.f32.gmra.mxu0 %v215
    %v237 = vpop.f32.mrf.mxu0
    %v238 = vadd.f32 0.0, %v237
    %239 = vmatmul.f32.gmra.mxu0 %v218
    %v240 = vpop.f32.mrf.mxu0
    %v241 = vadd.f32 0.0, %v240
    %242 = vdwg.mxu0
    %v243 = vld [vmem:[#allocation2 + $0x10] sm:$0xff]
    %vm244 = vcmask 64512
    %v246 = vsel %vm244, %v123, 0
    %v249 = vsel %vm244, %v124, 0
    %v252 = vsel %vm244, %v125, 0
    %v255 = vsel %vm244, %v126, 0
    %257 = vmatpush.msra.mxu0 0.0
    %258 = vmatpush.msra.mxu0 0.0
    %259 = vmatpush.msra.mxu0 0.0
    %260 = vmatpush.msra.mxu0 0.0
    %261 = vmatpush.msra.mxu0 0.0
    %262 = vmatpush.msra.mxu0 0.0
    %263 = vmatpush.msra.mxu0 0.0
    %264 = vmatpush.msra.mxu0 0.0
    %265 = vmatpush.msra.mxu0 0.0
    %266 = vmatpush.msra.mxu0 0.0
    %267 = vmatpush.msra.mxu0 0.0
    %268 = vmatpush.msra.mxu0 0.0
    %269 = vmatpush.msra.mxu0 0.0
    %270 = vmatpush.msra.mxu0 0.0
    %271 = vmatpush.msra.mxu0 0.0
    %272 = vmatpush.msra.mxu0 %v243
    %273 = vmatmul.f32.gmra.mxu0 %v246
    %v274 = vpop.f32.mrf.mxu0
    %v275 = vadd.f32 0.0, %v274
    %276 = vmatmul.f32.gmra.mxu0 %v249
    %v277 = vpop.f32.mrf.mxu0
    %v278 = vadd.f32 0.0, %v277
    %279 = vmatmul.f32.gmra.mxu0 %v252
    %v280 = vpop.f32.mrf.mxu0
    %v281 = vadd.f32 0.0, %v280
    %282 = vmatmul.f32.gmra.mxu0 %v255
    %v283 = vpop.f32.mrf.mxu0
    %v284 = vadd.f32 0.0, %v283
    %285 = vdwg.mxu0
    %v286 = vld [vmem:[#allocation2 + $0x58] sm:$0x1]
    %v287 = vld [vmem:[#allocation2 + $0x60] sm:$0x1]
    %vm288 = vcmask 261120
    %v289 = vsel %vm288, %v238, 0.0
    %290 = vadd.xlane.f32.xlu0 %v289
    %v291 = vpop.xlane.xlu0 %290
    %v292 = vsel %vm288, %v241, 0.0
    %293 = vadd.xlane.f32.xlu0 %v292
    %v294 = vpop.xlane.xlu0 %293
    %v295 = vadd.f32 %v291, %v294
    %v296 = vrot.slane %v295, 4
    %v297 = vadd.f32 %v295, %v296
    %v298 = vrot.slane %v297, 2
    %v299 = vadd.f32 %v297, %v298
    %v300 = vrot.slane %v299, 1
    %v301 = vadd.f32 %v299, %v300
    %v302 = vmul.f32 %v301, 0.001953125
    %v303 = vsub.f32 %v238, %v302
    %v304 = vsub.f32 %v241, %v302
    %v305 = vmul.f32 %v303, %v303
    %v306 = vmul.f32 %v304, %v304
    %v307 = vsel %vm288, %v305, 0.0
    %308 = vadd.xlane.f32.xlu0 %v307
    %v309 = vpop.xlane.xlu0 %308
    %v310 = vsel %vm288, %v306, 0.0
    %311 = vadd.xlane.f32.xlu0 %v310
    %v312 = vpop.xlane.xlu0 %311
    %v313 = vadd.f32 %v309, %v312
    %v314 = vrot.slane %v313, 4
    %v315 = vadd.f32 %v313, %v314
    %v316 = vrot.slane %v315, 2
    %v317 = vadd.f32 %v315, %v316
    %v318 = vrot.slane %v317, 1
    %v319 = vadd.f32 %v317, %v318
    %v320 = vmul.f32 %v319, 0.001953125
    %v321 = vrsqrt.pop %v320
    %v322 = vmul.f32 %v321, %v320
    %v323 = vmul.f32 %v322, %v321
    %v324 = vmul.f32 0.5, %v323
    %v325 = vsub.f32 1.5, %v324
    %v326 = vmul.f32 %v321, %v325
    %v327 = vmul.f32 %v320, %v326
    %vm328 = vcmp.eq.f32.partialorder %v320, inf
    %v329 = vsel %vm328, %v320, %v327
    %vm330 = vcmp.eq.f32.partialorder %v320, 0.0
    %v331 = vand.u32 %v320, 2147483648
    %v332 = vsel %vm330, %v331, %v329
    %v333 = vadd.f32 %v332, 1e-05
    %v334 = vrcp.pop %v333
    %v335 = vmul.f32 %v303, %v334
    %v336 = vmul.f32 %v304, %v334
    %v337 = vperm.slane %v286, 0
    %v338 = vmul.f32 %v335, %v337
    %v339 = vmul.f32 %v336, %v337
    %v340 = vperm.slane %v287, 0
    %v341 = vadd.f32 %v338, %v340
    %v342 = vadd.f32 %v339, %v340
    %v343 = vld [vmem:[#allocation5] sm:$0xff]
    %v344 = vld [vmem:[#allocation5 + $0x8] sm:$0xff]
    %v345 = vld [vmem:[#allocation5 + $0x10] sm:$0xff]
    %v346 = vld [vmem:[#allocation5 + $0x18] sm:$0xff]
    %v347 = vld [vmem:[#allocation5 + $0x20] sm:$0xff]
    %v348 = vld [vmem:[#allocation5 + $0x28] sm:$0xff]
    %v349 = vld [vmem:[#allocation5 + $0x30] sm:$0xff]
    %v350 = vld [vmem:[#allocation5 + $0x38] sm:$0xff]
    %s351 = scalar_lea.vmem [#allocation5], 64
    %v352 = vld [vmem:[%s351] ss:$8 sm:$0x3]
    %v354 = vperm.slane %v352, 0
    %v355 = vperm.slane %v352, 1
    %v359 = vsel %vm288, %v341, 0
    %v362 = vsel %vm288, %v342, 0
    %364 = vmatpush.msra.mxu0 0.0
    %365 = vmatpush.msra.mxu0 0.0
    %366 = vmatpush.msra.mxu0 0.0
    %367 = vmatpush.msra.mxu0 0.0
    %368 = vmatpush.msra.mxu0 0.0
    %369 = vmatpush.msra.mxu0 0.0
    %370 = vmatpush.msra.mxu0 0.0
    %371 = vmatpush.msra.mxu0 0.0
    %372 = vmatpush.msra.mxu0 0.0
    %373 = vmatpush.msra.mxu0 0.0
    %374 = vmatpush.msra.mxu0 0.0
    %375 = vmatpush.msra.mxu0 0.0
    %376 = vmatpush.msra.mxu0 %v349
    %377 = vmatpush.msra.mxu0 %v347
    %378 = vmatpush.msra.mxu0 %v345
    %379 = vmatpush.msra.mxu0 %v343
    %380 = vmatmul.f32.gmra.mxu0 %v359
    %v381 = vpop.f32.mrf.mxu0
    %v382 = vadd.f32 %v354, %v381
    %383 = vmatmul.f32.gmra.mxu0 %v362
    %v384 = vpop.f32.mrf.mxu0
    %v385 = vadd.f32 %v354, %v384
    %386 = vdwg.mxu0
    %387 = vmatpush.msra.mxu0 0.0
    %388 = vmatpush.msra.mxu0 0.0
    %389 = vmatpush.msra.mxu0 0.0
    %390 = vmatpush.msra.mxu0 0.0
    %391 = vmatpush.msra.mxu0 0.0
    %392 = vmatpush.msra.mxu0 0.0
    %393 = vmatpush.msra.mxu0 0.0
    %394 = vmatpush.msra.mxu0 0.0
    %395 = vmatpush.msra.mxu0 0.0
    %396 = vmatpush.msra.mxu0 0.0
    %397 = vmatpush.msra.mxu0 0.0
    %398 = vmatpush.msra.mxu0 0.0
    %399 = vmatpush.msra.mxu0 %v350
    %400 = vmatpush.msra.mxu0 %v348
    %401 = vmatpush.msra.mxu0 %v346
    %402 = vmatpush.msra.mxu0 %v344
    %403 = vmatmul.f32.gmra.mxu0 %v359
    %v404 = vpop.f32.mrf.mxu0
    %v405 = vadd.f32 %v355, %v404
    %406 = vmatmul.f32.gmra.mxu0 %v362
    %v407 = vpop.f32.mrf.mxu0
    %v408 = vadd.f32 %v355, %v407
    %409 = vdwg.mxu0
    %v410 = vld [vmem:[#allocation7 + $0x8] sm:$0xff]
    %v411 = vld [vmem:[#allocation7 + $0x10] sm:$0xff]
    %v412 = vld [vmem:[#allocation7 + $0x18] sm:$0xff]
    %v413 = vld [vmem:[#allocation7 + $0x20] sm:$0xff]
    %v415 = vsel %vm288, %v275, 0
    %v418 = vsel %vm288, %v278, 0
    %v421 = vsel %vm288, %v281, 0
    %v424 = vsel %vm288, %v284, 0
    %426 = vmatpush.msra.mxu0 0.0
    %427 = vmatpush.msra.mxu0 0.0
    %428 = vmatpush.msra.mxu0 0.0
    %429 = vmatpush.msra.mxu0 0.0
    %430 = vmatpush.msra.mxu0 0.0
    %431 = vmatpush.msra.mxu0 0.0
    %432 = vmatpush.msra.mxu0 0.0
    %433 = vmatpush.msra.mxu0 0.0
    %434 = vmatpush.msra.mxu0 0.0
    %435 = vmatpush.msra.mxu0 0.0
    %436 = vmatpush.msra.mxu0 0.0
    %437 = vmatpush.msra.mxu0 0.0
    %438 = vmatpush.msra.mxu0 %v413
    %439 = vmatpush.msra.mxu0 %v412
    %440 = vmatpush.msra.mxu0 %v411
    %441 = vmatpush.msra.mxu0 %v410
    %442 = vmatmul.f32.gmra.mxu0 %v415
    %v443 = vpop.f32.mrf.mxu0
    %v444 = vadd.f32 0.0, %v443
    %445 = vmatmul.f32.gmra.mxu0 %v418
    %v446 = vpop.f32.mrf.mxu0
    %v447 = vadd.f32 0.0, %v446
    %448 = vmatmul.f32.gmra.mxu0 %v421
    %v449 = vpop.f32.mrf.mxu0
    %v450 = vadd.f32 0.0, %v449
    %451 = vmatmul.f32.gmra.mxu0 %v424
    %v452 = vpop.f32.mrf.mxu0
    %v453 = vadd.f32 0.0, %v452
    %454 = vdwg.mxu0
    %v456 = vsel %vm213, %v179, 0
    %v459 = vsel %vm213, %v180, 0
    %v462 = vsel %vm213, %v181, 0
    %v465 = vsel %vm213, %v182, 0
    %467 = vmatpush.msra.mxu0 0.0
    %468 = vmatpush.msra.mxu0 0.0
    %469 = vmatpush.msra.mxu0 0.0
    %470 = vmatpush.msra.mxu0 0.0
    %471 = vmatpush.msra.mxu0 0.0
    %472 = vmatpush.msra.mxu0 0.0
    %473 = vmatpush.msra.mxu0 0.0
    %474 = vmatpush.msra.mxu0 0.0
    %475 = vmatpush.msra.mxu0 0.0
    %476 = vmatpush.msra.mxu0 0.0
    %477 = vmatpush.msra.mxu0 0.0
    %478 = vmatpush.msra.mxu0 0.0
    %479 = vmatpush.msra.mxu0 0.0
    %480 = vmatpush.msra.mxu0 0.0
    %481 = vmatpush.msra.mxu0 %v385
    %482 = vmatpush.msra.mxu0 %v382
    %483 = vmatmul.f32.gmra.mxu0 %v456
    %v484 = vpop.f32.mrf.mxu0
    %v485 = vadd.f32 0.0, %v484
    %486 = vmatmul.f32.gmra.mxu0 %v459
    %v487 = vpop.f32.mrf.mxu0
    %v488 = vadd.f32 0.0, %v487
    %489 = vmatmul.f32.gmra.mxu0 %v462
    %v490 = vpop.f32.mrf.mxu0
    %v491 = vadd.f32 0.0, %v490
    %492 = vmatmul.f32.gmra.mxu0 %v465
    %v493 = vpop.f32.mrf.mxu0
    %v494 = vadd.f32 0.0, %v493
    %495 = vdwg.mxu0
    %498 = vrot.lane.b32.xlu0 %v382, 64
    %v499 = vpop.permute.xlu0 %498
    %500 = vrot.lane.b32.xlu0 %v385, 64
    %v501 = vpop.permute.xlu0 %500
    %v505 = vsel %vm213, %v151, 0
    %v508 = vsel %vm213, %v152, 0
    %v511 = vsel %vm213, %v153, 0
    %v514 = vsel %vm213, %v154, 0
    %516 = vmatpush.msra.mxu0 0.0
    %517 = vmatpush.msra.mxu0 0.0
    %518 = vmatpush.msra.mxu0 0.0
    %519 = vmatpush.msra.mxu0 0.0
    %520 = vmatpush.msra.mxu0 0.0
    %521 = vmatpush.msra.mxu0 0.0
    %522 = vmatpush.msra.mxu0 0.0
    %523 = vmatpush.msra.mxu0 0.0
    %524 = vmatpush.msra.mxu0 0.0
    %525 = vmatpush.msra.mxu0 0.0
    %526 = vmatpush.msra.mxu0 0.0
    %527 = vmatpush.msra.mxu0 0.0
    %528 = vmatpush.msra.mxu0 0.0
    %529 = vmatpush.msra.mxu0 0.0
    %530 = vmatpush.msra.mxu0 %v501
    %531 = vmatpush.msra.mxu0 %v499
    %532 = vmatmul.f32.gmra.mxu0 %v505
    %v533 = vpop.f32.mrf.mxu0
    %v534 = vadd.f32 %v444, %v533
    %535 = vmatmul.f32.gmra.mxu0 %v508
    %v536 = vpop.f32.mrf.mxu0
    %v537 = vadd.f32 %v447, %v536
    %538 = vmatmul.f32.gmra.mxu0 %v511
    %v539 = vpop.f32.mrf.mxu0
    %v540 = vadd.f32 %v450, %v539
    %541 = vmatmul.f32.gmra.mxu0 %v514
    %v542 = vpop.f32.mrf.mxu0
    %v543 = vadd.f32 %v453, %v542
    %544 = vdwg.mxu0
    %545 = vmatpush.msra.mxu0 0.0
    %546 = vmatpush.msra.mxu0 0.0
    %547 = vmatpush.msra.mxu0 0.0
    %548 = vmatpush.msra.mxu0 0.0
    %549 = vmatpush.msra.mxu0 0.0
    %550 = vmatpush.msra.mxu0 0.0
    %551 = vmatpush.msra.mxu0 0.0
    %552 = vmatpush.msra.mxu0 0.0
    %553 = vmatpush.msra.mxu0 0.0
    %554 = vmatpush.msra.mxu0 0.0
    %555 = vmatpush.msra.mxu0 0.0
    %556 = vmatpush.msra.mxu0 0.0
    %557 = vmatpush.msra.mxu0 0.0
    %558 = vmatpush.msra.mxu0 0.0
    %559 = vmatpush.msra.mxu0 %v408
    %560 = vmatpush.msra.mxu0 %v405
    %561 = vmatmul.f32.gmra.mxu0 %v505
    %v562 = vpop.f32.mrf.mxu0
    %v563 = vadd.f32 %v444, %v562
    %564 = vmatmul.f32.gmra.mxu0 %v508
    %v565 = vpop.f32.mrf.mxu0
    %v566 = vadd.f32 %v447, %v565
    %567 = vmatmul.f32.gmra.mxu0 %v511
    %v568 = vpop.f32.mrf.mxu0
    %v569 = vadd.f32 %v450, %v568
    %570 = vmatmul.f32.gmra.mxu0 %v514
    %v571 = vpop.f32.mrf.mxu0
    %v572 = vadd.f32 %v453, %v571
    %573 = vdwg.mxu0
    %v574 = vmul.f32 %v485, %v534
    %v575 = vmul.f32 %v488, %v537
    %v576 = vmul.f32 %v491, %v540
    %v577 = vmul.f32 %v494, %v543
    %vm578 = vcmask 523264
    %v580 = vsel %vm578, %v574, 0
    %v583 = vsel %vm578, %v575, 0
    %v586 = vsel %vm578, %v576, 0
    %v589 = vsel %vm578, %v577, 0
    %591 = vmatpush.msra.mxu0 0.0
    %592 = vmatpush.msra.mxu0 0.0
    %593 = vmatpush.msra.mxu0 0.0
    %594 = vmatpush.msra.mxu0 0.0
    %595 = vmatpush.msra.mxu0 0.0
    %596 = vmatpush.msra.mxu0 0.0
    %597 = vmatpush.msra.mxu0 0.0
    %598 = vmatpush.msra.mxu0 0.0
    %599 = vmatpush.msra.mxu0 %v201
    %600 = vmatpush.msra.mxu0 %v200
    %601 = vmatpush.msra.mxu0 %v199
    %602 = vmatpush.msra.mxu0 %v198
    %603 = vmatpush.msra.mxu0 %v197
    %604 = vmatpush.msra.mxu0 %v196
    %605 = vmatpush.msra.mxu0 %v195
    %606 = vmatpush.msra.mxu0 %v194
    %607 = vmatmul.f32.gmra.mxu0 %v580
    %v608 = vpop.f32.mrf.mxu0
    %v609 = vadd.f32 0.0, %v608
    %610 = vmatmul.f32.gmra.mxu0 %v583
    %v611 = vpop.f32.mrf.mxu0
    %v612 = vadd.f32 0.0, %v611
    %613 = vmatmul.f32.gmra.mxu0 %v586
    %v614 = vpop.f32.mrf.mxu0
    %v615 = vadd.f32 0.0, %v614
    %616 = vmatmul.f32.gmra.mxu0 %v589
    %v617 = vpop.f32.mrf.mxu0
    %v618 = vadd.f32 0.0, %v617
    %619 = vdwg.mxu0
    %v620 = vsel %vm244, %v609, -inf
    %v621 = vsel %vm244, %v612, -inf
    %v622 = vsel %vm244, %v615, -inf
    %v623 = vsel %vm244, %v618, -inf
    %v624 = vmax.f32 %v620, %v621
    %v625 = vmax.f32 %v622, %v623
    %v626 = vmax.f32 %v624, %v625
    %v627 = vrot.slane %v626, 4
    %v628 = vmax.f32 %v626, %v627
    %v629 = vrot.slane %v628, 2
    %v630 = vmax.f32 %v628, %v629
    %v631 = vrot.slane %v630, 1
    %v632 = vmax.f32 %v630, %v631
    %v633 = vsub.f32 %v609, %v632
    %v634 = vsub.f32 %v612, %v632
    %v635 = vsub.f32 %v615, %v632
    %v636 = vsub.f32 %v618, %v632
    %v637 = vmul.f32 %v633, 1.442695
    %v638 = vpow.pop %v637
    %v639 = vmul.f32 %v634, 1.442695
    %v640 = vpow.pop %v639
    %v641 = vmul.f32 %v635, 1.442695
    %v642 = vpow.pop %v641
    %v643 = vmul.f32 %v636, 1.442695
    %v644 = vpow.pop %v643
    %v646 = vsel %vm288, %v192, 0
    %v649 = vsel %vm288, %v193, 0
    %651 = vmatpush.msra.mxu0 0.0
    %652 = vmatpush.msra.mxu0 0.0
    %653 = vmatpush.msra.mxu0 0.0
    %654 = vmatpush.msra.mxu0 0.0
    %655 = vmatpush.msra.mxu0 0.0
    %656 = vmatpush.msra.mxu0 0.0
    %657 = vmatpush.msra.mxu0 0.0
    %658 = vmatpush.msra.mxu0 0.0
    %659 = vmatpush.msra.mxu0 0.0
    %660 = vmatpush.msra.mxu0 0.0
    %661 = vmatpush.msra.mxu0 0.0
    %662 = vmatpush.msra.mxu0 0.0
    %663 = vmatpush.msra.mxu0 %v644
    %664 = vmatpush.msra.mxu0 %v642
    %665 = vmatpush.msra.mxu0 %v640
    %666 = vmatpush.msra.mxu0 %v638
    %667 = vmatmul.f32.gmra.mxu0 %v646
    %v668 = vpop.f32.mrf.mxu0
    %v669 = vadd.f32 0.0, %v668
    %670 = vmatmul.f32.gmra.mxu0 %v649
    %v671 = vpop.f32.mrf.mxu0
    %v672 = vadd.f32 0.0, %v671
    %673 = vdwg.mxu0
    %674 = vmatpush.msra.mxu0 0.0
    %675 = vmatpush.msra.mxu0 0.0
    %676 = vmatpush.msra.mxu0 0.0
    %677 = vmatpush.msra.mxu0 0.0
    %678 = vmatpush.msra.mxu0 0.0
    %679 = vmatpush.msra.mxu0 0.0
    %680 = vmatpush.msra.mxu0 0.0
    %681 = vmatpush.msra.mxu0 0.0
    %682 = vmatpush.msra.mxu0 0.0
    %683 = vmatpush.msra.mxu0 0.0
    %684 = vmatpush.msra.mxu0 0.0
    %685 = vmatpush.msra.mxu0 0.0
    %686 = vmatpush.msra.mxu0 0.0
    %687 = vmatpush.msra.mxu0 0.0
    %688 = vmatpush.msra.mxu0 %v672
    %689 = vmatpush.msra.mxu0 %v669
    %690 = vmatmul.f32.gmra.mxu0 %v456
    %v691 = vpop.f32.mrf.mxu0
    %v692 = vadd.f32 1e-16, %v691
    %693 = vmatmul.f32.gmra.mxu0 %v459
    %v694 = vpop.f32.mrf.mxu0
    %v695 = vadd.f32 1e-16, %v694
    %696 = vmatmul.f32.gmra.mxu0 %v462
    %v697 = vpop.f32.mrf.mxu0
    %v698 = vadd.f32 1e-16, %v697
    %699 = vmatmul.f32.gmra.mxu0 %v465
    %v700 = vpop.f32.mrf.mxu0
    %v701 = vadd.f32 1e-16, %v700
    %702 = vdwg.mxu0
    %v703 = vrcp.pop %v692
    %v704 = vrcp.pop %v695
    %v705 = vrcp.pop %v698
    %v706 = vrcp.pop %v701
    %v707 = vmul.f32 %v638, %v703
    %v708 = vmul.f32 %v640, %v704
    %v709 = vmul.f32 %v642, %v705
    %v710 = vmul.f32 %v644, %v706
    %v712 = vsel %vm244, %v707, 0
    %v715 = vsel %vm244, %v708, 0
    %v718 = vsel %vm244, %v709, 0
    %v721 = vsel %vm244, %v710, 0
    %723 = vmatpush.msra.mxu0 0.0
    %724 = vmatpush.msra.mxu0 0.0
    %725 = vmatpush.msra.mxu0 0.0
    %726 = vmatpush.msra.mxu0 0.0
    %727 = vmatpush.msra.mxu0 0.0
    %728 = vmatpush.msra.mxu0 0.0
    %729 = vmatpush.msra.mxu0 0.0
    %730 = vmatpush.msra.mxu0 0.0
    %731 = vmatpush.msra.mxu0 0.0
    %732 = vmatpush.msra.mxu0 0.0
    %733 = vmatpush.msra.mxu0 0.0
    %734 = vmatpush.msra.mxu0 0.0
    %735 = vmatpush.msra.mxu0 0.0
    %736 = vmatpush.msra.mxu0 0.0
    %737 = vmatpush.msra.mxu0 0.0
    %738 = vmatpush.msra.mxu0 %v202
    %739 = vmatmul.f32.gmra.mxu0 %v712
    %v740 = vpop.f32.mrf.mxu0
    %v741 = vadd.f32 0.0, %v740
    %742 = vmatmul.f32.gmra.mxu0 %v715
    %v743 = vpop.f32.mrf.mxu0
    %v744 = vadd.f32 0.0, %v743
    %745 = vmatmul.f32.gmra.mxu0 %v718
    %v746 = vpop.f32.mrf.mxu0
    %v747 = vadd.f32 0.0, %v746
    %748 = vmatmul.f32.gmra.mxu0 %v721
    %v749 = vpop.f32.mrf.mxu0
    %v750 = vadd.f32 0.0, %v749
    %751 = vdwg.mxu0
    %v752 = vmul.f32 %v563, %v741
    %v753 = vmul.f32 %v566, %v744
    %v754 = vmul.f32 %v569, %v747
    %v755 = vmul.f32 %v572, %v750
    %756 = vmatpush.msra.mxu0 0.0
    %757 = vmatpush.msra.mxu0 0.0
    %758 = vmatpush.msra.mxu0 0.0
    %759 = vmatpush.msra.mxu0 0.0
    %760 = vmatpush.msra.mxu0 0.0
    %761 = vmatpush.msra.mxu0 0.0
    %762 = vmatpush.msra.mxu0 0.0
    %763 = vmatpush.msra.mxu0 0.0
    %764 = vmatpush.msra.mxu0 0.0
    %765 = vmatpush.msra.mxu0 0.0
    %766 = vmatpush.msra.mxu0 0.0
    %767 = vmatpush.msra.mxu0 0.0
    %768 = vmatpush.msra.mxu0 %v755
    %769 = vmatpush.msra.mxu0 %v754
    %770 = vmatpush.msra.mxu0 %v753
    %771 = vmatpush.msra.mxu0 %v752
    %772 = vmatmul.f32.gmra.mxu0 %v646
    %v773 = vpop.f32.mrf.mxu0
    %v774 = vadd.f32 0.0, %v773
    %775 = vmatmul.f32.gmra.mxu0 %v649
    %v776 = vpop.f32.mrf.mxu0
    %v777 = vadd.f32 0.0, %v776
    %778 = vdwg.mxu0
    %v779 = vld [vmem:[#allocation2 + $0x90] sm:$0xff]
    %v780 = vld [vmem:[#allocation2 + $0x98] sm:$0xff]
    %v781 = vld [vmem:[#allocation2 + $0xa0] sm:$0xff]
    %v782 = vld [vmem:[#allocation2 + $0xa8] sm:$0xff]
    %v783 = vld [vmem:[#allocation2 + $0xb0] sm:$0xff]
    %v784 = vld [vmem:[#allocation2 + $0xb8] sm:$0xff]
    %v785 = vld [vmem:[#allocation2 + $0xc0] sm:$0xff]
    %v786 = vld [vmem:[#allocation2 + $0xc8] sm:$0xff]
    %v787 = vld [vmem:[#allocation2 + $0x68] sm:$0x1]
    %v788 = vperm.slane %v787, 0
    %v790 = vsel %vm578, %v774, 0
    %v793 = vsel %vm578, %v777, 0
    %795 = vmatpush.msra.mxu0 0.0
    %796 = vmatpush.msra.mxu0 0.0
    %797 = vmatpush.msra.mxu0 0.0
    %798 = vmatpush.msra.mxu0 0.0
    %799 = vmatpush.msra.mxu0 0.0
    %800 = vmatpush.msra.mxu0 0.0
    %801 = vmatpush.msra.mxu0 0.0
    %802 = vmatpush.msra.mxu0 0.0
    %803 = vmatpush.msra.mxu0 %v786
    %804 = vmatpush.msra.mxu0 %v785
    %805 = vmatpush.msra.mxu0 %v784
    %806 = vmatpush.msra.mxu0 %v783
    %807 = vmatpush.msra.mxu0 %v782
    %808 = vmatpush.msra.mxu0 %v781
    %809 = vmatpush.msra.mxu0 %v780
    %810 = vmatpush.msra.mxu0 %v779
    %811 = vmatmul.f32.gmra.mxu0 %v790
    %v812 = vpop.f32.mrf.mxu0
    %v813 = vadd.f32 %v788, %v812
    %814 = vmatmul.f32.gmra.mxu0 %v793
    %v815 = vpop.f32.mrf.mxu0
    %v816 = vadd.f32 %v788, %v815
    %817 = vdwg.mxu0
    %v818 = vadd.f32 %v813, %v238
    %v819 = vadd.f32 %v816, %v241
    %v820 = vld [vmem:[#allocation2 + $0x70] sm:$0x1]
    %v821 = vld [vmem:[#allocation2 + $0x78] sm:$0x1]
    %v822 = vsel %vm288, %v818, 0.0
    %823 = vadd.xlane.f32.xlu0 %v822
    %v824 = vpop.xlane.xlu0 %823
    %v825 = vsel %vm288, %v819, 0.0
    %826 = vadd.xlane.f32.xlu0 %v825
    %v827 = vpop.xlane.xlu0 %826
    %v828 = vadd.f32 %v824, %v827
    %v829 = vrot.slane %v828, 4
    %v830 = vadd.f32 %v828, %v829
    %v831 = vrot.slane %v830, 2
    %v832 = vadd.f32 %v830, %v831
    %v833 = vrot.slane %v832, 1
    %v834 = vadd.f32 %v832, %v833
    %v835 = vmul.f32 %v834, 0.001953125
    %v836 = vsub.f32 %v818, %v835
    %v837 = vsub.f32 %v819, %v835
    %v838 = vmul.f32 %v836, %v836
    %v839 = vmul.f32 %v837, %v837
    %v840 = vsel %vm288, %v838, 0.0
    %841 = vadd.xlane.f32.xlu0 %v840
    %v842 = vpop.xlane.xlu0 %841
    %v843 = vsel %vm288, %v839, 0.0
    %844 = vadd.xlane.f32.xlu0 %v843
    %v845 = vpop.xlane.xlu0 %844
    %v846 = vadd.f32 %v842, %v845
    %v847 = vrot.slane %v846, 4
    %v848 = vadd.f32 %v846, %v847
    %v849 = vrot.slane %v848, 2
    %v850 = vadd.f32 %v848, %v849
    %v851 = vrot.slane %v850, 1
    %v852 = vadd.f32 %v850, %v851
    %v853 = vmul.f32 %v852, 0.001953125
    %v854 = vrsqrt.pop %v853
    %v855 = vmul.f32 %v854, %v853
    %v856 = vmul.f32 %v855, %v854
    %v857 = vmul.f32 0.5, %v856
    %v858 = vsub.f32 1.5, %v857
    %v859 = vmul.f32 %v854, %v858
    %v860 = vmul.f32 %v853, %v859
    %vm861 = vcmp.eq.f32.partialorder %v853, inf
    %v862 = vsel %vm861, %v853, %v860
    %vm863 = vcmp.eq.f32.partialorder %v853, 0.0
    %v864 = vand.u32 %v853, 2147483648
    %v865 = vsel %vm863, %v864, %v862
    %v866 = vadd.f32 %v865, 1e-05
    %v867 = vrcp.pop %v866
    %v868 = vmul.f32 %v836, %v867
    %v869 = vmul.f32 %v837, %v867
    %v870 = vperm.slane %v820, 0
    %v871 = vmul.f32 %v868, %v870
    %v872 = vmul.f32 %v869, %v870
    %v873 = vperm.slane %v821, 0
    %v874 = vadd.f32 %v871, %v873
    %v875 = vadd.f32 %v872, %v873
    %v876 = vld [vmem:[#allocation2 + $0xd0] sm:$0xff]
    %v877 = vld [vmem:[#allocation2 + $0xd8] sm:$0xff]
    %v878 = vld [vmem:[#allocation2 + $0xe0] sm:$0xff]
    %v879 = vld [vmem:[#allocation2 + $0xe8] sm:$0xff]
    %v880 = vld [vmem:[#allocation2 + $0x80] sm:$0x1]
    %v881 = vperm.slane %v880, 0
    %v883 = vsel %vm288, %v874, 0
    %v886 = vsel %vm288, %v875, 0
    %888 = vmatpush.msra.mxu0 0.0
    %889 = vmatpush.msra.mxu0 0.0
    %890 = vmatpush.msra.mxu0 0.0
    %891 = vmatpush.msra.mxu0 0.0
    %892 = vmatpush.msra.mxu0 0.0
    %893 = vmatpush.msra.mxu0 0.0
    %894 = vmatpush.msra.mxu0 0.0
    %895 = vmatpush.msra.mxu0 0.0
    %896 = vmatpush.msra.mxu0 0.0
    %897 = vmatpush.msra.mxu0 0.0
    %898 = vmatpush.msra.mxu0 0.0
    %899 = vmatpush.msra.mxu0 0.0
    %900 = vmatpush.msra.mxu0 %v879
    %901 = vmatpush.msra.mxu0 %v878
    %902 = vmatpush.msra.mxu0 %v877
    %903 = vmatpush.msra.mxu0 %v876
    %904 = vmatmul.f32.gmra.mxu0 %v883
    %v905 = vpop.f32.mrf.mxu0
    %v906 = vadd.f32 %v881, %v905
    %907 = vmatmul.f32.gmra.mxu0 %v886
    %v908 = vpop.f32.mrf.mxu0
    %v909 = vadd.f32 %v881, %v908
    %910 = vdwg.mxu0
    %v911 = vmul.f32 %v906, 0.5
    %v912 = vmul.f32 %v909, 0.5
    %v913 = vmul.f32 %v906, 0.044715
    %v914 = vmul.f32 %v909, 0.044715
    %v915 = vmul.f32 %v913, %v906
    %v916 = vmul.f32 %v914, %v909
    %v917 = vmul.f32 %v915, %v906
    %v918 = vmul.f32 %v916, %v909
    %v919 = vadd.f32 %v906, %v917
    %v920 = vadd.f32 %v909, %v918
    %v921 = vmul.f32 %v919, 0.7978846
    %v922 = vmul.f32 %v920, 0.7978846
    %v923 = vtanh.pop %v921
    %v924 = vtanh.pop %v922
    %v925 = vadd.f32 %v923, 1.0
    %v926 = vadd.f32 %v924, 1.0
    %v927 = vmul.f32 %v911, %v925
    %v928 = vmul.f32 %v912, %v926
    %v929 = vld [vmem:[#allocation2 + $0xf0] sm:$0xff]
    %v930 = vld [vmem:[#allocation2 + $0xf8] sm:$0xff]
    %v931 = vld [vmem:[#allocation2 + $0x100] sm:$0xff]
    %v932 = vld [vmem:[#allocation2 + $0x108] sm:$0xff]
    %v933 = vld [vmem:[#allocation2 + $0x88] sm:$0x1]
    %v934 = vperm.slane %v933, 0
    %v936 = vsel %vm288, %v927, 0
    %v939 = vsel %vm288, %v928, 0
    %941 = vmatpush.msra.mxu0 0.0
    %942 = vmatpush.msra.mxu0 0.0
    %943 = vmatpush.msra.mxu0 0.0
    %944 = vmatpush.msra.mxu0 0.0
    %945 = vmatpush.msra.mxu0 0.0
    %946 = vmatpush.msra.mxu0 0.0
    %947 = vmatpush.msra.mxu0 0.0
    %948 = vmatpush.msra.mxu0 0.0
    %949 = vmatpush.msra.mxu0 0.0
    %950 = vmatpush.msra.mxu0 0.0
    %951 = vmatpush.msra.mxu0 0.0
    %952 = vmatpush.msra.mxu0 0.0
    %953 = vmatpush.msra.mxu0 %v932
    %954 = vmatpush.msra.mxu0 %v931
    %955 = vmatpush.msra.mxu0 %v930
    %956 = vmatpush.msra.mxu0 %v929
    %957 = vmatmul.f32.gmra.mxu0 %v936
    %v958 = vpop.f32.mrf.mxu0
    %v959 = vadd.f32 %v934, %v958
    %960 = vmatmul.f32.gmra.mxu0 %v939
    %v961 = vpop.f32.mrf.mxu0
    %v962 = vadd.f32 %v934, %v961
    %963 = vdwg.mxu0
    %v964 = vadd.f32 %v959, %v818
    %v965 = vadd.f32 %v962, %v819
    %v966 = vmul.f32 %v964, 0.5
    %v967 = vmul.f32 %v965, 0.5
    %v968 = vmul.f32 %v964, 0.044715
    %v969 = vmul.f32 %v965, 0.044715
    %v970 = vmul.f32 %v968, %v964
    %v971 = vmul.f32 %v969, %v965
    %v972 = vmul.f32 %v970, %v964
    %v973 = vmul.f32 %v971, %v965
    %v974 = vadd.f32 %v964, %v972
    %v975 = vadd.f32 %v965, %v973
    %v976 = vmul.f32 %v974, 0.7978846
    %v977 = vmul.f32 %v975, 0.7978846
    %v978 = vtanh.pop %v976
    %v979 = vtanh.pop %v977
    %v980 = vadd.f32 %v978, 1.0
    %v981 = vadd.f32 %v979, 1.0
    %v982 = vmul.f32 %v966, %v980
    %v983 = vmul.f32 %v967, %v981
    %v984 = vld [vmem:[#allocation2 + $0x110] sm:$0x1]
    %v985 = vld [vmem:[#allocation2 + $0x118] sm:$0x1]
    %v986 = vsel %vm288, %v982, 0.0
    %987 = vadd.xlane.f32.xlu0 %v986
    %v988 = vpop.xlane.xlu0 %987
    %v989 = vsel %vm288, %v983, 0.0
    %990 = vadd.xlane.f32.xlu0 %v989
    %v991 = vpop.xlane.xlu0 %990
    %v992 = vadd.f32 %v988, %v991
    %v993 = vrot.slane %v992, 4
    %v994 = vadd.f32 %v992, %v993
    %v995 = vrot.slane %v994, 2
    %v996 = vadd.f32 %v994, %v995
    %v997 = vrot.slane %v996, 1
    %v998 = vadd.f32 %v996, %v997
    %v999 = vmul.f32 %v998, 0.001953125
    %v1000 = vsub.f32 %v982, %v999
    %v1001 = vsub.f32 %v983, %v999
    %v1002 = vmul.f32 %v1000, %v1000
    %v1003 = vmul.f32 %v1001, %v1001
    %v1004 = vsel %vm288, %v1002, 0.0
    %1005 = vadd.xlane.f32.xlu0 %v1004
    %v1006 = vpop.xlane.xlu0 %1005
    %v1007 = vsel %vm288, %v1003, 0.0
    %1008 = vadd.xlane.f32.xlu0 %v1007
    %v1009 = vpop.xlane.xlu0 %1008
    %v1010 = vadd.f32 %v1006, %v1009
    %v1011 = vrot.slane %v1010, 4
    %v1012 = vadd.f32 %v1010, %v1011
    %v1013 = vrot.slane %v1012, 2
    %v1014 = vadd.f32 %v1012, %v1013
    %v1015 = vrot.slane %v1014, 1
    %v1016 = vadd.f32 %v1014, %v1015
    %v1017 = vmul.f32 %v1016, 0.001953125
    %v1018 = vrsqrt.pop %v1017
    %v1019 = vmul.f32 %v1018, %v1017
    %v1020 = vmul.f32 %v1019, %v1018
    %v1021 = vmul.f32 0.5, %v1020
    %v1022 = vsub.f32 1.5, %v1021
    %v1023 = vmul.f32 %v1018, %v1022
    %v1024 = vmul.f32 %v1017, %v1023
    %vm1025 = vcmp.eq.f32.partialorder %v1017, inf
    %v1026 = vsel %vm1025, %v1017, %v1024
    %vm1027 = vcmp.eq.f32.partialorder %v1017, 0.0
    %v1028 = vand.u32 %v1017, 2147483648
    %v1029 = vsel %vm1027, %v1028, %v1026
    %v1030 = vadd.f32 %v1029, 1e-05
    %v1031 = vrcp.pop %v1030
    %v1032 = vmul.f32 %v1000, %v1031
    %v1033 = vmul.f32 %v1001, %v1031
    %v1034 = vperm.slane %v984, 0
    %v1035 = vmul.f32 %v1032, %v1034
    %v1036 = vmul.f32 %v1033, %v1034
    %v1037 = vperm.slane %v985, 0
    %v1038 = vadd.f32 %v1035, %v1037
    %v1039 = vadd.f32 %v1036, %v1037
    %v1040 = vld [vmem:[#allocation5 + $0x50] sm:$0xff]
    %v1041 = vld [vmem:[#allocation5 + $0x58] sm:$0xff]
    %v1042 = vld [vmem:[#allocation5 + $0x60] sm:$0xff]
    %v1043 = vld [vmem:[#allocation5 + $0x68] sm:$0xff]
    %v1044 = vld [vmem:[#allocation5 + $0x70] sm:$0xff]
    %v1045 = vld [vmem:[#allocation5 + $0x78] sm:$0xff]
    %v1046 = vld [vmem:[#allocation5 + $0x80] sm:$0xff]
    %v1047 = vld [vmem:[#allocation5 + $0x88] sm:$0xff]
    %s1048 = scalar_lea.vmem [#allocation5], 144
    %v1049 = vld [vmem:[%s1048] ss:$8 sm:$0x3]
    %v1051 = vperm.slane %v1049, 0
    %v1052 = vperm.slane %v1049, 1
    %v1056 = vsel %vm288, %v1038, 0
    %v1059 = vsel %vm288, %v1039, 0
    %1061 = vmatpush.msra.mxu0 0.0
    %1062 = vmatpush.msra.mxu0 0.0
    %1063 = vmatpush.msra.mxu0 0.0
    %1064 = vmatpush.msra.mxu0 0.0
    %1065 = vmatpush.msra.mxu0 0.0
    %1066 = vmatpush.msra.mxu0 0.0
    %1067 = vmatpush.msra.mxu0 0.0
    %1068 = vmatpush.msra.mxu0 0.0
    %1069 = vmatpush.msra.mxu0 0.0
    %1070 = vmatpush.msra.mxu0 0.0
    %1071 = vmatpush.msra.mxu0 0.0
    %1072 = vmatpush.msra.mxu0 0.0
    %1073 = vmatpush.msra.mxu0 %v1046
    %1074 = vmatpush.msra.mxu0 %v1044
    %1075 = vmatpush.msra.mxu0 %v1042
    %1076 = vmatpush.msra.mxu0 %v1040
    %1077 = vmatmul.f32.gmra.mxu0 %v1056
    %v1078 = vpop.f32.mrf.mxu0
    %v1079 = vadd.f32 %v1051, %v1078
    %1080 = vmatmul.f32.gmra.mxu0 %v1059
    %v1081 = vpop.f32.mrf.mxu0
    %v1082 = vadd.f32 %v1051, %v1081
    %1083 = vdwg.mxu0
    %1084 = vmatpush.msra.mxu0 0.0
    %1085 = vmatpush.msra.mxu0 0.0
    %1086 = vmatpush.msra.mxu0 0.0
    %1087 = vmatpush.msra.mxu0 0.0
    %1088 = vmatpush.msra.mxu0 0.0
    %1089 = vmatpush.msra.mxu0 0.0
    %1090 = vmatpush.msra.mxu0 0.0
    %1091 = vmatpush.msra.mxu0 0.0
    %1092 = vmatpush.msra.mxu0 0.0
    %1093 = vmatpush.msra.mxu0 0.0
    %1094 = vmatpush.msra.mxu0 0.0
    %1095 = vmatpush.msra.mxu0 0.0
    %1096 = vmatpush.msra.mxu0 %v1047
    %1097 = vmatpush.msra.mxu0 %v1045
    %1098 = vmatpush.msra.mxu0 %v1043
    %1099 = vmatpush.msra.mxu0 %v1041
    %1100 = vmatmul.f32.gmra.mxu0 %v1056
    %v1101 = vpop.f32.mrf.mxu0
    %v1102 = vadd.f32 %v1052, %v1101
    %1103 = vmatmul.f32.gmra.mxu0 %v1059
    %v1104 = vpop.f32.mrf.mxu0
    %v1105 = vadd.f32 %v1052, %v1104
    %1106 = vdwg.mxu0
    %v1107 = vld [vmem:[#allocation7 + $0x28] sm:$0xff]
    %v1108 = vld [vmem:[#allocation7 + $0x30] sm:$0xff]
    %v1109 = vld [vmem:[#allocation7 + $0x38] sm:$0xff]
    %v1110 = vld [vmem:[#allocation7 + $0x40] sm:$0xff]
    %1111 = vmatpush.msra.mxu0 0.0
    %1112 = vmatpush.msra.mxu0 0.0
    %1113 = vmatpush.msra.mxu0 0.0
    %1114 = vmatpush.msra.mxu0 0.0
    %1115 = vmatpush.msra.mxu0 0.0
    %1116 = vmatpush.msra.mxu0 0.0
    %1117 = vmatpush.msra.mxu0 0.0
    %1118 = vmatpush.msra.mxu0 0.0
    %1119 = vmatpush.msra.mxu0 0.0
    %1120 = vmatpush.msra.mxu0 0.0
    %1121 = vmatpush.msra.mxu0 0.0
    %1122 = vmatpush.msra.mxu0 0.0
    %1123 = vmatpush.msra.mxu0 %v1110
    %1124 = vmatpush.msra.mxu0 %v1109
    %1125 = vmatpush.msra.mxu0 %v1108
    %1126 = vmatpush.msra.mxu0 %v1107
    %1127 = vmatmul.f32.gmra.mxu0 %v415
    %v1128 = vpop.f32.mrf.mxu0
    %v1129 = vadd.f32 0.0, %v1128
    %1130 = vmatmul.f32.gmra.mxu0 %v418
    %v1131 = vpop.f32.mrf.mxu0
    %v1132 = vadd.f32 0.0, %v1131
    %1133 = vmatmul.f32.gmra.mxu0 %v421
    %v1134 = vpop.f32.mrf.mxu0
    %v1135 = vadd.f32 0.0, %v1134
    %1136 = vmatmul.f32.gmra.mxu0 %v424
    %v1137 = vpop.f32.mrf.mxu0
    %v1138 = vadd.f32 0.0, %v1137
    %1139 = vdwg.mxu0
    %1140 = vmatpush.msra.mxu0 0.0
    %1141 = vmatpush.msra.mxu0 0.0
    %1142 = vmatpush.msra.mxu0 0.0
    %1143 = vmatpush.msra.mxu0 0.0
    %1144 = vmatpush.msra.mxu0 0.0
    %1145 = vmatpush.msra.mxu0 0.0
    %1146 = vmatpush.msra.mxu0 0.0
    %1147 = vmatpush.msra.mxu0 0.0
    %1148 = vmatpush.msra.mxu0 0.0
    %1149 = vmatpush.msra.mxu0 0.0
    %1150 = vmatpush.msra.mxu0 0.0
    %1151 = vmatpush.msra.mxu0 0.0
    %1152 = vmatpush.msra.mxu0 0.0
    %1153 = vmatpush.msra.mxu0 0.0
    %1154 = vmatpush.msra.mxu0 %v1082
    %1155 = vmatpush.msra.mxu0 %v1079
    %1156 = vmatmul.f32.gmra.mxu0 %v456
    %v1157 = vpop.f32.mrf.mxu0
    %v1158 = vadd.f32 0.0, %v1157
    %1159 = vmatmul.f32.gmra.mxu0 %v459
    %v1160 = vpop.f32.mrf.mxu0
    %v1161 = vadd.f32 0.0, %v1160
    %1162 = vmatmul.f32.gmra.mxu0 %v462
    %v1163 = vpop.f32.mrf.mxu0
    %v1164 = vadd.f32 0.0, %v1163
    %1165 = vmatmul.f32.gmra.mxu0 %v465
    %v1166 = vpop.f32.mrf.mxu0
    %v1167 = vadd.f32 0.0, %v1166
    %1168 = vdwg.mxu0
    %1171 = vrot.lane.b32.xlu0 %v1079, 64
    %v1172 = vpop.permute.xlu0 %1171
    %1173 = vrot.lane.b32.xlu0 %v1082, 64
    %v1174 = vpop.permute.xlu0 %1173
    %1177 = vmatpush.msra.mxu0 0.0
    %1178 = vmatpush.msra.mxu0 0.0
    %1179 = vmatpush.msra.mxu0 0.0
    %1180 = vmatpush.msra.mxu0 0.0
    %1181 = vmatpush.msra.mxu0 0.0
    %1182 = vmatpush.msra.mxu0 0.0
    %1183 = vmatpush.msra.mxu0 0.0
    %1184 = vmatpush.msra.mxu0 0.0
    %1185 = vmatpush.msra.mxu0 0.0
    %1186 = vmatpush.msra.mxu0 0.0
    %1187 = vmatpush.msra.mxu0 0.0
    %1188 = vmatpush.msra.mxu0 0.0
    %1189 = vmatpush.msra.mxu0 0.0
    %1190 = vmatpush.msra.mxu0 0.0
    %1191 = vmatpush.msra.mxu0 %v1174
    %1192 = vmatpush.msra.mxu0 %v1172
    %1193 = vmatmul.f32.gmra.mxu0 %v505
    %v1194 = vpop.f32.mrf.mxu0
    %v1195 = vadd.f32 %v1129, %v1194
    %1196 = vmatmul.f32.gmra.mxu0 %v508
    %v1197 = vpop.f32.mrf.mxu0
    %v1198 = vadd.f32 %v1132, %v1197
    %1199 = vmatmul.f32.gmra.mxu0 %v511
    %v1200 = vpop.f32.mrf.mxu0
    %v1201 = vadd.f32 %v1135, %v1200
    %1202 = vmatmul.f32.gmra.mxu0 %v514
    %v1203 = vpop.f32.mrf.mxu0
    %v1204 = vadd.f32 %v1138, %v1203
    %1205 = vdwg.mxu0
    %1206 = vmatpush.msra.mxu0 0.0
    %1207 = vmatpush.msra.mxu0 0.0
    %1208 = vmatpush.msra.mxu0 0.0
    %1209 = vmatpush.msra.mxu0 0.0
    %1210 = vmatpush.msra.mxu0 0.0
    %1211 = vmatpush.msra.mxu0 0.0
    %1212 = vmatpush.msra.mxu0 0.0
    %1213 = vmatpush.msra.mxu0 0.0
    %1214 = vmatpush.msra.mxu0 0.0
    %1215 = vmatpush.msra.mxu0 0.0
    %1216 = vmatpush.msra.mxu0 0.0
    %1217 = vmatpush.msra.mxu0 0.0
    %1218 = vmatpush.msra.mxu0 0.0
    %1219 = vmatpush.msra.mxu0 0.0
    %1220 = vmatpush.msra.mxu0 %v1105
    %1221 = vmatpush.msra.mxu0 %v1102
    %1222 = vmatmul.f32.gmra.mxu0 %v505
    %v1223 = vpop.f32.mrf.mxu0
    %v1224 = vadd.f32 %v1129, %v1223
    %1225 = vmatmul.f32.gmra.mxu0 %v508
    %v1226 = vpop.f32.mrf.mxu0
    %v1227 = vadd.f32 %v1132, %v1226
    %1228 = vmatmul.f32.gmra.mxu0 %v511
    %v1229 = vpop.f32.mrf.mxu0
    %v1230 = vadd.f32 %v1135, %v1229
    %1231 = vmatmul.f32.gmra.mxu0 %v514
    %v1232 = vpop.f32.mrf.mxu0
    %v1233 = vadd.f32 %v1138, %v1232
    %1234 = vdwg.mxu0
    %v1235 = vmul.f32 %v1158, %v1195
    %v1236 = vmul.f32 %v1161, %v1198
    %v1237 = vmul.f32 %v1164, %v1201
    %v1238 = vmul.f32 %v1167, %v1204
    %v1240 = vsel %vm578, %v1235, 0
    %v1243 = vsel %vm578, %v1236, 0
    %v1246 = vsel %vm578, %v1237, 0
    %v1249 = vsel %vm578, %v1238, 0
    %1251 = vmatpush.msra.mxu0 0.0
    %1252 = vmatpush.msra.mxu0 0.0
    %1253 = vmatpush.msra.mxu0 0.0
    %1254 = vmatpush.msra.mxu0 0.0
    %1255 = vmatpush.msra.mxu0 0.0
    %1256 = vmatpush.msra.mxu0 0.0
    %1257 = vmatpush.msra.mxu0 0.0
    %1258 = vmatpush.msra.mxu0 0.0
    %1259 = vmatpush.msra.mxu0 %v201
    %1260 = vmatpush.msra.mxu0 %v200
    %1261 = vmatpush.msra.mxu0 %v199
    %1262 = vmatpush.msra.mxu0 %v198
    %1263 = vmatpush.msra.mxu0 %v197
    %1264 = vmatpush.msra.mxu0 %v196
    %1265 = vmatpush.msra.mxu0 %v195
    %1266 = vmatpush.msra.mxu0 %v194
    %1267 = vmatmul.f32.gmra.mxu0 %v1240
    %v1268 = vpop.f32.mrf.mxu0
    %v1269 = vadd.f32 0.0, %v1268
    %1270 = vmatmul.f32.gmra.mxu0 %v1243
    %v1271 = vpop.f32.mrf.mxu0
    %v1272 = vadd.f32 0.0, %v1271
    %1273 = vmatmul.f32.gmra.mxu0 %v1246
    %v1274 = vpop.f32.mrf.mxu0
    %v1275 = vadd.f32 0.0, %v1274
    %1276 = vmatmul.f32.gmra.mxu0 %v1249
    %v1277 = vpop.f32.mrf.mxu0
    %v1278 = vadd.f32 0.0, %v1277
    %1279 = vdwg.mxu0
    %v1280 = vsel %vm244, %v1269, -inf
    %v1281 = vsel %vm244, %v1272, -inf
    %v1282 = vsel %vm244, %v1275, -inf
    %v1283 = vsel %vm244, %v1278, -inf
    %v1284 = vmax.f32 %v1280, %v1281
    %v1285 = vmax.f32 %v1282, %v1283
    %v1286 = vmax.f32 %v1284, %v1285
    %v1287 = vrot.slane %v1286, 4
    %v1288 = vmax.f32 %v1286, %v1287
    %v1289 = vrot.slane %v1288, 2
    %v1290 = vmax.f32 %v1288, %v1289
    %v1291 = vrot.slane %v1290, 1
    %v1292 = vmax.f32 %v1290, %v1291
    %v1293 = vsub.f32 %v1269, %v1292
    %v1294 = vsub.f32 %v1272, %v1292
    %v1295 = vsub.f32 %v1275, %v1292
    %v1296 = vsub.f32 %v1278, %v1292
    %v1297 = vmul.f32 %v1293, 1.442695
    %v1298 = vpow.pop %v1297
    %v1299 = vmul.f32 %v1294, 1.442695
    %v1300 = vpow.pop %v1299
    %v1301 = vmul.f32 %v1295, 1.442695
    %v1302 = vpow.pop %v1301
    %v1303 = vmul.f32 %v1296, 1.442695
    %v1304 = vpow.pop %v1303
    %1305 = vmatpush.msra.mxu0 0.0
    %1306 = vmatpush.msra.mxu0 0.0
    %1307 = vmatpush.msra.mxu0 0.0
    %1308 = vmatpush.msra.mxu0 0.0
    %1309 = vmatpush.msra.mxu0 0.0
    %1310 = vmatpush.msra.mxu0 0.0
    %1311 = vmatpush.msra.mxu0 0.0
    %1312 = vmatpush.msra.mxu0 0.0
    %1313 = vmatpush.msra.mxu0 0.0
    %1314 = vmatpush.msra.mxu0 0.0
    %1315 = vmatpush.msra.mxu0 0.0
    %1316 = vmatpush.msra.mxu0 0.0
    %1317 = vmatpush.msra.mxu0 %v1304
    %1318 = vmatpush.msra.mxu0 %v1302
    %1319 = vmatpush.msra.mxu0 %v1300
    %1320 = vmatpush.msra.mxu0 %v1298
    %1321 = vmatmul.f32.gmra.mxu0 %v646
    %v1322 = vpop.f32.mrf.mxu0
    %v1323 = vadd.f32 0.0, %v1322
    %1324 = vmatmul.f32.gmra.mxu0 %v649
    %v1325 = vpop.f32.mrf.mxu0
    %v1326 = vadd.f32 0.0, %v1325
    %1327 = vdwg.mxu0
    %1328 = vmatpush.msra.mxu0 0.0
    %1329 = vmatpush.msra.mxu0 0.0
    %1330 = vmatpush.msra.mxu0 0.0
    %1331 = vmatpush.msra.mxu0 0.0
    %1332 = vmatpush.msra.mxu0 0.0
    %1333 = vmatpush.msra.mxu0 0.0
    %1334 = vmatpush.msra.mxu0 0.0
    %1335 = vmatpush.msra.mxu0 0.0
    %1336 = vmatpush.msra.mxu0 0.0
    %1337 = vmatpush.msra.mxu0 0.0
    %1338 = vmatpush.msra.mxu0 0.0
    %1339 = vmatpush.msra.mxu0 0.0
    %1340 = vmatpush.msra.mxu0 0.0
    %1341 = vmatpush.msra.mxu0 0.0
    %1342 = vmatpush.msra.mxu0 %v1326
    %1343 = vmatpush.msra.mxu0 %v1323
    %1344 = vmatmul.f32.gmra.mxu0 %v456
    %v1345 = vpop.f32.mrf.mxu0
    %v1346 = vadd.f32 1e-16, %v1345
    %1347 = vmatmul.f32.gmra.mxu0 %v459
    %v1348 = vpop.f32.mrf.mxu0
    %v1349 = vadd.f32 1e-16, %v1348
    %1350 = vmatmul.f32.gmra.mxu0 %v462
    %v1351 = vpop.f32.mrf.mxu0
    %v1352 = vadd.f32 1e-16, %v1351
    %1353 = vmatmul.f32.gmra.mxu0 %v465
    %v1354 = vpop.f32.mrf.mxu0
    %v1355 = vadd.f32 1e-16, %v1354
    %1356 = vdwg.mxu0
    %v1357 = vrcp.pop %v1346
    %v1358 = vrcp.pop %v1349
    %v1359 = vrcp.pop %v1352
    %v1360 = vrcp.pop %v1355
    %v1361 = vmul.f32 %v1298, %v1357
    %v1362 = vmul.f32 %v1300, %v1358
    %v1363 = vmul.f32 %v1302, %v1359
    %v1364 = vmul.f32 %v1304, %v1360
    %v1366 = vsel %vm244, %v1361, 0
    %v1369 = vsel %vm244, %v1362, 0
    %v1372 = vsel %vm244, %v1363, 0
    %v1375 = vsel %vm244, %v1364, 0
    %1377 = vmatpush.msra.mxu0 0.0
    %1378 = vmatpush.msra.mxu0 0.0
    %1379 = vmatpush.msra.mxu0 0.0
    %1380 = vmatpush.msra.mxu0 0.0
    %1381 = vmatpush.msra.mxu0 0.0
    %1382 = vmatpush.msra.mxu0 0.0
    %1383 = vmatpush.msra.mxu0 0.0
    %1384 = vmatpush.msra.mxu0 0.0
    %1385 = vmatpush.msra.mxu0 0.0
    %1386 = vmatpush.msra.mxu0 0.0
    %1387 = vmatpush.msra.mxu0 0.0
    %1388 = vmatpush.msra.mxu0 0.0
    %1389 = vmatpush.msra.mxu0 0.0
    %1390 = vmatpush.msra.mxu0 0.0
    %1391 = vmatpush.msra.mxu0 0.0
    %1392 = vmatpush.msra.mxu0 %v202
    %1393 = vmatmul.f32.gmra.mxu0 %v1366
    %v1394 = vpop.f32.mrf.mxu0
    %v1395 = vadd.f32 0.0, %v1394
    %1396 = vmatmul.f32.gmra.mxu0 %v1369
    %v1397 = vpop.f32.mrf.mxu0
    %v1398 = vadd.f32 0.0, %v1397
    %1399 = vmatmul.f32.gmra.mxu0 %v1372
    %v1400 = vpop.f32.mrf.mxu0
    %v1401 = vadd.f32 0.0, %v1400
    %1402 = vmatmul.f32.gmra.mxu0 %v1375
    %v1403 = vpop.f32.mrf.mxu0
    %v1404 = vadd.f32 0.0, %v1403
    %1405 = vdwg.mxu0
    %v1406 = vmul.f32 %v1224, %v1395
    %v1407 = vmul.f32 %v1227, %v1398
    %v1408 = vmul.f32 %v1230, %v1401
    %v1409 = vmul.f32 %v1233, %v1404
    %1410 = vmatpush.msra.mxu0 0.0
    %1411 = vmatpush.msra.mxu0 0.0
    %1412 = vmatpush.msra.mxu0 0.0
    %1413 = vmatpush.msra.mxu0 0.0
    %1414 = vmatpush.msra.mxu0 0.0
    %1415 = vmatpush.msra.mxu0 0.0
    %1416 = vmatpush.msra.mxu0 0.0
    %1417 = vmatpush.msra.mxu0 0.0
    %1418 = vmatpush.msra.mxu0 0.0
    %1419 = vmatpush.msra.mxu0 0.0
    %1420 = vmatpush.msra.mxu0 0.0
    %1421 = vmatpush.msra.mxu0 0.0
    %1422 = vmatpush.msra.mxu0 %v1409
    %1423 = vmatpush.msra.mxu0 %v1408
    %1424 = vmatpush.msra.mxu0 %v1407
    %1425 = vmatpush.msra.mxu0 %v1406
    %1426 = vmatmul.f32.gmra.mxu0 %v646
    %v1427 = vpop.f32.mrf.mxu0
    %v1428 = vadd.f32 0.0, %v1427
    %1429 = vmatmul.f32.gmra.mxu0 %v649
    %v1430 = vpop.f32.mrf.mxu0
    %v1431 = vadd.f32 0.0, %v1430
    %1432 = vdwg.mxu0
    %v1433 = vld [vmem:[#allocation2 + $0x148] sm:$0xff]
    %v1434 = vld [vmem:[#allocation2 + $0x150] sm:$0xff]
    %v1435 = vld [vmem:[#allocation2 + $0x158] sm:$0xff]
    %v1436 = vld [vmem:[#allocation2 + $0x160] sm:$0xff]
    %v1437 = vld [vmem:[#allocation2 + $0x168] sm:$0xff]
    %v1438 = vld [vmem:[#allocation2 + $0x170] sm:$0xff]
    %v1439 = vld [vmem:[#allocation2 + $0x178] sm:$0xff]
    %v1440 = vld [vmem:[#allocation2 + $0x180] sm:$0xff]
    %v1441 = vld [vmem:[#allocation2 + $0x120] sm:$0x1]
    %v1442 = vperm.slane %v1441, 0
    %v1444 = vsel %vm578, %v1428, 0
    %v1447 = vsel %vm578, %v1431, 0
    %1449 = vmatpush.msra.mxu0 0.0
    %1450 = vmatpush.msra.mxu0 0.0
    %1451 = vmatpush.msra.mxu0 0.0
    %1452 = vmatpush.msra.mxu0 0.0
    %1453 = vmatpush.msra.mxu0 0.0
    %1454 = vmatpush.msra.mxu0 0.0
    %1455 = vmatpush.msra.mxu0 0.0
    %1456 = vmatpush.msra.mxu0 0.0
    %1457 = vmatpush.msra.mxu0 %v1440
    %1458 = vmatpush.msra.mxu0 %v1439
    %1459 = vmatpush.msra.mxu0 %v1438
    %1460 = vmatpush.msra.mxu0 %v1437
    %1461 = vmatpush.msra.mxu0 %v1436
    %1462 = vmatpush.msra.mxu0 %v1435
    %1463 = vmatpush.msra.mxu0 %v1434
    %1464 = vmatpush.msra.mxu0 %v1433
    %1465 = vmatmul.f32.gmra.mxu0 %v1444
    %v1466 = vpop.f32.mrf.mxu0
    %v1467 = vadd.f32 %v1442, %v1466
    %1468 = vmatmul.f32.gmra.mxu0 %v1447
    %v1469 = vpop.f32.mrf.mxu0
    %v1470 = vadd.f32 %v1442, %v1469
    %1471 = vdwg.mxu0
    %v1472 = vadd.f32 %v1467, %v982
    %v1473 = vadd.f32 %v1470, %v983
    %v1474 = vld [vmem:[#allocation2 + $0x128] sm:$0x1]
    %v1475 = vld [vmem:[#allocation2 + $0x130] sm:$0x1]
    %v1476 = vsel %vm288, %v1472, 0.0
    %1477 = vadd.xlane.f32.xlu0 %v1476
    %v1478 = vpop.xlane.xlu0 %1477
    %v1479 = vsel %vm288, %v1473, 0.0
    %1480 = vadd.xlane.f32.xlu0 %v1479
    %v1481 = vpop.xlane.xlu0 %1480
    %v1482 = vadd.f32 %v1478, %v1481
    %v1483 = vrot.slane %v1482, 4
    %v1484 = vadd.f32 %v1482, %v1483
    %v1485 = vrot.slane %v1484, 2
    %v1486 = vadd.f32 %v1484, %v1485
    %v1487 = vrot.slane %v1486, 1
    %v1488 = vadd.f32 %v1486, %v1487
    %v1489 = vmul.f32 %v1488, 0.001953125
    %v1490 = vsub.f32 %v1472, %v1489
    %v1491 = vsub.f32 %v1473, %v1489
    %v1492 = vmul.f32 %v1490, %v1490
    %v1493 = vmul.f32 %v1491, %v1491
    %v1494 = vsel %vm288, %v1492, 0.0
    %1495 = vadd.xlane.f32.xlu0 %v1494
    %v1496 = vpop.xlane.xlu0 %1495
    %v1497 = vsel %vm288, %v1493, 0.0
    %1498 = vadd.xlane.f32.xlu0 %v1497
    %v1499 = vpop.xlane.xlu0 %1498
    %v1500 = vadd.f32 %v1496, %v1499
    %v1501 = vrot.slane %v1500, 4
    %v1502 = vadd.f32 %v1500, %v1501
    %v1503 = vrot.slane %v1502, 2
    %v1504 = vadd.f32 %v1502, %v1503
    %v1505 = vrot.slane %v1504, 1
    %v1506 = vadd.f32 %v1504, %v1505
    %v1507 = vmul.f32 %v1506, 0.001953125
    %v1508 = vrsqrt.pop %v1507
    %v1509 = vmul.f32 %v1508, %v1507
    %v1510 = vmul.f32 %v1509, %v1508
    %v1511 = vmul.f32 0.5, %v1510
    %v1512 = vsub.f32 1.5, %v1511
    %v1513 = vmul.f32 %v1508, %v1512
    %v1514 = vmul.f32 %v1507, %v1513
    %vm1515 = vcmp.eq.f32.partialorder %v1507, inf
    %v1516 = vsel %vm1515, %v1507, %v1514
    %vm1517 = vcmp.eq.f32.partialorder %v1507, 0.0
    %v1518 = vand.u32 %v1507, 2147483648
    %v1519 = vsel %vm1517, %v1518, %v1516
    %v1520 = vadd.f32 %v1519, 1e-05
    %v1521 = vrcp.pop %v1520
    %v1522 = vmul.f32 %v1490, %v1521
    %v1523 = vmul.f32 %v1491, %v1521
    %v1524 = vperm.slane %v1474, 0
    %v1525 = vmul.f32 %v1522, %v1524
    %v1526 = vmul.f32 %v1523, %v1524
    %v1527 = vperm.slane %v1475, 0
    %v1528 = vadd.f32 %v1525, %v1527
    %v1529 = vadd.f32 %v1526, %v1527
    %v1530 = vld [vmem:[#allocation2 + $0x188] sm:$0xff]
    %v1531 = vld [vmem:[#allocation2 + $0x190] sm:$0xff]
    %v1532 = vld [vmem:[#allocation2 + $0x198] sm:$0xff]
    %v1533 = vld [vmem:[#allocation2 + $0x1a0] sm:$0xff]
    %v1534 = vld [vmem:[#allocation2 + $0x138] sm:$0x1]
    %v1535 = vperm.slane %v1534, 0
    %v1537 = vsel %vm288, %v1528, 0
    %v1540 = vsel %vm288, %v1529, 0
    %1542 = vmatpush.msra.mxu0 0.0
    %1543 = vmatpush.msra.mxu0 0.0
    %1544 = vmatpush.msra.mxu0 0.0
    %1545 = vmatpush.msra.mxu0 0.0
    %1546 = vmatpush.msra.mxu0 0.0
    %1547 = vmatpush.msra.mxu0 0.0
    %1548 = vmatpush.msra.mxu0 0.0
    %1549 = vmatpush.msra.mxu0 0.0
    %1550 = vmatpush.msra.mxu0 0.0
    %1551 = vmatpush.msra.mxu0 0.0
    %1552 = vmatpush.msra.mxu0 0.0
    %1553 = vmatpush.msra.mxu0 0.0
    %1554 = vmatpush.msra.mxu0 %v1533
    %1555 = vmatpush.msra.mxu0 %v1532
    %1556 = vmatpush.msra.mxu0 %v1531
    %1557 = vmatpush.msra.mxu0 %v1530
    %1558 = vmatmul.f32.gmra.mxu0 %v1537
    %v1559 = vpop.f32.mrf.mxu0
    %v1560 = vadd.f32 %v1535, %v1559
    %1561 = vmatmul.f32.gmra.mxu0 %v1540
    %v1562 = vpop.f32.mrf.mxu0
    %v1563 = vadd.f32 %v1535, %v1562
    %1564 = vdwg.mxu0
    %v1565 = vmul.f32 %v1560, 0.5
    %v1566 = vmul.f32 %v1563, 0.5
    %v1567 = vmul.f32 %v1560, 0.044715
    %v1568 = vmul.f32 %v1563, 0.044715
    %v1569 = vmul.f32 %v1567, %v1560
    %v1570 = vmul.f32 %v1568, %v1563
    %v1571 = vmul.f32 %v1569, %v1560
    %v1572 = vmul.f32 %v1570, %v1563
    %v1573 = vadd.f32 %v1560, %v1571
    %v1574 = vadd.f32 %v1563, %v1572
    %v1575 = vmul.f32 %v1573, 0.7978846
    %v1576 = vmul.f32 %v1574, 0.7978846
    %v1577 = vtanh.pop %v1575
    %v1578 = vtanh.pop %v1576
    %v1579 = vadd.f32 %v1577, 1.0
    %v1580 = vadd.f32 %v1578, 1.0
    %v1581 = vmul.f32 %v1565, %v1579
    %v1582 = vmul.f32 %v1566, %v1580
    %v1583 = vld [vmem:[#allocation2 + $0x1a8] sm:$0xff]
    %v1584 = vld [vmem:[#allocation2 + $0x1b0] sm:$0xff]
    %v1585 = vld [vmem:[#allocation2 + $0x1b8] sm:$0xff]
    %v1586 = vld [vmem:[#allocation2 + $0x1c0] sm:$0xff]
    %v1587 = vld [vmem:[#allocation2 + $0x140] sm:$0x1]
    %v1588 = vperm.slane %v1587, 0
    %v1590 = vsel %vm288, %v1581, 0
    %v1593 = vsel %vm288, %v1582, 0
    %1595 = vmatpush.msra.mxu0 0.0
    %1596 = vmatpush.msra.mxu0 0.0
    %1597 = vmatpush.msra.mxu0 0.0
    %1598 = vmatpush.msra.mxu0 0.0
    %1599 = vmatpush.msra.mxu0 0.0
    %1600 = vmatpush.msra.mxu0 0.0
    %1601 = vmatpush.msra.mxu0 0.0
    %1602 = vmatpush.msra.mxu0 0.0
    %1603 = vmatpush.msra.mxu0 0.0
    %1604 = vmatpush.msra.mxu0 0.0
    %1605 = vmatpush.msra.mxu0 0.0
    %1606 = vmatpush.msra.mxu0 0.0
    %1607 = vmatpush.msra.mxu0 %v1586
    %1608 = vmatpush.msra.mxu0 %v1585
    %1609 = vmatpush.msra.mxu0 %v1584
    %1610 = vmatpush.msra.mxu0 %v1583
    %1611 = vmatmul.f32.gmra.mxu0 %v1590
    %v1612 = vpop.f32.mrf.mxu0
    %v1613 = vadd.f32 %v1588, %v1612
    %1614 = vmatmul.f32.gmra.mxu0 %v1593
    %v1615 = vpop.f32.mrf.mxu0
    %v1616 = vadd.f32 %v1588, %v1615
    %1617 = vdwg.mxu0
    %v1618 = vadd.f32 %v1613, %v1472
    %v1619 = vadd.f32 %v1616, %v1473
    %v1620 = vmul.f32 %v1618, 0.5
    %v1621 = vmul.f32 %v1619, 0.5
    %v1622 = vmul.f32 %v1618, 0.044715
    %v1623 = vmul.f32 %v1619, 0.044715
    %v1624 = vmul.f32 %v1622, %v1618
    %v1625 = vmul.f32 %v1623, %v1619
    %v1626 = vmul.f32 %v1624, %v1618
    %v1627 = vmul.f32 %v1625, %v1619
    %v1628 = vadd.f32 %v1618, %v1626
    %v1629 = vadd.f32 %v1619, %v1627
    %v1630 = vmul.f32 %v1628, 0.7978846
    %v1631 = vmul.f32 %v1629, 0.7978846
    %v1632 = vtanh.pop %v1630
    %v1633 = vtanh.pop %v1631
    %v1634 = vadd.f32 %v1632, 1.0
    %v1635 = vadd.f32 %v1633, 1.0
    %v1636 = vmul.f32 %v1620, %v1634
    %v1637 = vmul.f32 %v1621, %v1635
    %v1638 = vld [vmem:[#allocation2 + $0x1c8] sm:$0x1]
    %v1639 = vld [vmem:[#allocation2 + $0x1d0] sm:$0x1]
    %v1640 = vsel %vm288, %v1636, 0.0
    %1641 = vadd.xlane.f32.xlu0 %v1640
    %v1642 = vpop.xlane.xlu0 %1641
    %v1643 = vsel %vm288, %v1637, 0.0
    %1644 = vadd.xlane.f32.xlu0 %v1643
    %v1645 = vpop.xlane.xlu0 %1644
    %v1646 = vadd.f32 %v1642, %v1645
    %v1647 = vrot.slane %v1646, 4
    %v1648 = vadd.f32 %v1646, %v1647
    %v1649 = vrot.slane %v1648, 2
    %v1650 = vadd.f32 %v1648, %v1649
    %v1651 = vrot.slane %v1650, 1
    %v1652 = vadd.f32 %v1650, %v1651
    %v1653 = vmul.f32 %v1652, 0.001953125
    %v1654 = vsub.f32 %v1636, %v1653
    %v1655 = vsub.f32 %v1637, %v1653
    %v1656 = vmul.f32 %v1654, %v1654
    %v1657 = vmul.f32 %v1655, %v1655
    %v1658 = vsel %vm288, %v1656, 0.0
    %1659 = vadd.xlane.f32.xlu0 %v1658
    %v1660 = vpop.xlane.xlu0 %1659
    %v1661 = vsel %vm288, %v1657, 0.0
    %1662 = vadd.xlane.f32.xlu0 %v1661
    %v1663 = vpop.xlane.xlu0 %1662
    %v1664 = vadd.f32 %v1660, %v1663
    %v1665 = vrot.slane %v1664, 4
    %v1666 = vadd.f32 %v1664, %v1665
    %v1667 = vrot.slane %v1666, 2
    %v1668 = vadd.f32 %v1666, %v1667
    %v1669 = vrot.slane %v1668, 1
    %v1670 = vadd.f32 %v1668, %v1669
    %v1671 = vmul.f32 %v1670, 0.001953125
    %v1672 = vrsqrt.pop %v1671
    %v1673 = vmul.f32 %v1672, %v1671
    %v1674 = vmul.f32 %v1673, %v1672
    %v1675 = vmul.f32 0.5, %v1674
    %v1676 = vsub.f32 1.5, %v1675
    %v1677 = vmul.f32 %v1672, %v1676
    %v1678 = vmul.f32 %v1671, %v1677
    %vm1679 = vcmp.eq.f32.partialorder %v1671, inf
    %v1680 = vsel %vm1679, %v1671, %v1678
    %vm1681 = vcmp.eq.f32.partialorder %v1671, 0.0
    %v1682 = vand.u32 %v1671, 2147483648
    %v1683 = vsel %vm1681, %v1682, %v1680
    %v1684 = vadd.f32 %v1683, 1e-05
    %v1685 = vrcp.pop %v1684
    %v1686 = vmul.f32 %v1654, %v1685
    %v1687 = vmul.f32 %v1655, %v1685
    %v1688 = vperm.slane %v1638, 0
    %v1689 = vmul.f32 %v1686, %v1688
    %v1690 = vmul.f32 %v1687, %v1688
    %v1691 = vperm.slane %v1639, 0
    %v1692 = vadd.f32 %v1689, %v1691
    %v1693 = vadd.f32 %v1690, %v1691
    %v1694 = vld [vmem:[#allocation5 + $0xa0] sm:$0xff]
    %v1695 = vld [vmem:[#allocation5 + $0xa8] sm:$0xff]
    %v1696 = vld [vmem:[#allocation5 + $0xb0] sm:$0xff]
    %v1697 = vld [vmem:[#allocation5 + $0xb8] sm:$0xff]
    %v1698 = vld [vmem:[#allocation5 + $0xc0] sm:$0xff]
    %v1699 = vld [vmem:[#allocation5 + $0xc8] sm:$0xff]
    %v1700 = vld [vmem:[#allocation5 + $0xd0] sm:$0xff]
    %v1701 = vld [vmem:[#allocation5 + $0xd8] sm:$0xff]
    %s1702 = scalar_lea.vmem [#allocation5], 224
    %v1703 = vld [vmem:[%s1702] ss:$8 sm:$0x3]
    %v1705 = vperm.slane %v1703, 0
    %v1706 = vperm.slane %v1703, 1
    %v1710 = vsel %vm288, %v1692, 0
    %v1713 = vsel %vm288, %v1693, 0
    %1715 = vmatpush.msra.mxu0 0.0
    %1716 = vmatpush.msra.mxu0 0.0
    %1717 = vmatpush.msra.mxu0 0.0
    %1718 = vmatpush.msra.mxu0 0.0
    %1719 = vmatpush.msra.mxu0 0.0
    %1720 = vmatpush.msra.mxu0 0.0
    %1721 = vmatpush.msra.mxu0 0.0
    %1722 = vmatpush.msra.mxu0 0.0
    %1723 = vmatpush.msra.mxu0 0.0
    %1724 = vmatpush.msra.mxu0 0.0
    %1725 = vmatpush.msra.mxu0 0.0
    %1726 = vmatpush.msra.mxu0 0.0
    %1727 = vmatpush.msra.mxu0 %v1700
    %1728 = vmatpush.msra.mxu0 %v1698
    %1729 = vmatpush.msra.mxu0 %v1696
    %1730 = vmatpush.msra.mxu0 %v1694
    %1731 = vmatmul.f32.gmra.mxu0 %v1710
    %v1732 = vpop.f32.mrf.mxu0
    %v1733 = vadd.f32 %v1705, %v1732
    %1734 = vmatmul.f32.gmra.mxu0 %v1713
    %v1735 = vpop.f32.mrf.mxu0
    %v1736 = vadd.f32 %v1705, %v1735
    %1737 = vdwg.mxu0
    %1738 = vmatpush.msra.mxu0 0.0
    %1739 = vmatpush.msra.mxu0 0.0
    %1740 = vmatpush.msra.mxu0 0.0
    %1741 = vmatpush.msra.mxu0 0.0
    %1742 = vmatpush.msra.mxu0 0.0
    %1743 = vmatpush.msra.mxu0 0.0
    %1744 = vmatpush.msra.mxu0 0.0
    %1745 = vmatpush.msra.mxu0 0.0
    %1746 = vmatpush.msra.mxu0 0.0
    %1747 = vmatpush.msra.mxu0 0.0
    %1748 = vmatpush.msra.mxu0 0.0
    %1749 = vmatpush.msra.mxu0 0.0
    %1750 = vmatpush.msra.mxu0 %v1701
    %1751 = vmatpush.msra.mxu0 %v1699
    %1752 = vmatpush.msra.mxu0 %v1697
    %1753 = vmatpush.msra.mxu0 %v1695
    %1754 = vmatmul.f32.gmra.mxu0 %v1710
    %v1755 = vpop.f32.mrf.mxu0
    %v1756 = vadd.f32 %v1706, %v1755
    %1757 = vmatmul.f32.gmra.mxu0 %v1713
    %v1758 = vpop.f32.mrf.mxu0
    %v1759 = vadd.f32 %v1706, %v1758
    %1760 = vdwg.mxu0
    %v1761 = vld [vmem:[#allocation7 + $0x48] sm:$0xff]
    %v1762 = vld [vmem:[#allocation7 + $0x50] sm:$0xff]
    %v1763 = vld [vmem:[#allocation7 + $0x58] sm:$0xff]
    %v1764 = vld [vmem:[#allocation7 + $0x60] sm:$0xff]
    %1765 = vmatpush.msra.mxu0 0.0
    %1766 = vmatpush.msra.mxu0 0.0
    %1767 = vmatpush.msra.mxu0 0.0
    %1768 = vmatpush.msra.mxu0 0.0
    %1769 = vmatpush.msra.mxu0 0.0
    %1770 = vmatpush.msra.mxu0 0.0
    %1771 = vmatpush.msra.mxu0 0.0
    %1772 = vmatpush.msra.mxu0 0.0
    %1773 = vmatpush.msra.mxu0 0.0
    %1774 = vmatpush.msra.mxu0 0.0
    %1775 = vmatpush.msra.mxu0 0.0
    %1776 = vmatpush.msra.mxu0 0.0
    %1777 = vmatpush.msra.mxu0 %v1764
    %1778 = vmatpush.msra.mxu0 %v1763
    %1779 = vmatpush.msra.mxu0 %v1762
    %1780 = vmatpush.msra.mxu0 %v1761
    %1781 = vmatmul.f32.gmra.mxu0 %v415
    %v1782 = vpop.f32.mrf.mxu0
    %v1783 = vadd.f32 0.0, %v1782
    %1784 = vmatmul.f32.gmra.mxu0 %v418
    %v1785 = vpop.f32.mrf.mxu0
    %v1786 = vadd.f32 0.0, %v1785
    %1787 = vmatmul.f32.gmra.mxu0 %v421
    %v1788 = vpop.f32.mrf.mxu0
    %v1789 = vadd.f32 0.0, %v1788
    %1790 = vmatmul.f32.gmra.mxu0 %v424
    %v1791 = vpop.f32.mrf.mxu0
    %v1792 = vadd.f32 0.0, %v1791
    %1793 = vdwg.mxu0
    %1794 = vmatpush.msra.mxu0 0.0
    %1795 = vmatpush.msra.mxu0 0.0
    %1796 = vmatpush.msra.mxu0 0.0
    %1797 = vmatpush.msra.mxu0 0.0
    %1798 = vmatpush.msra.mxu0 0.0
    %1799 = vmatpush.msra.mxu0 0.0
    %1800 = vmatpush.msra.mxu0 0.0
    %1801 = vmatpush.msra.mxu0 0.0
    %1802 = vmatpush.msra.mxu0 0.0
    %1803 = vmatpush.msra.mxu0 0.0
    %1804 = vmatpush.msra.mxu0 0.0
    %1805 = vmatpush.msra.mxu0 0.0
    %1806 = vmatpush.msra.mxu0 0.0
    %1807 = vmatpush.msra.mxu0 0.0
    %1808 = vmatpush.msra.mxu0 %v1736
    %1809 = vmatpush.msra.mxu0 %v1733
    %1810 = vmatmul.f32.gmra.mxu0 %v456
    %v1811 = vpop.f32.mrf.mxu0
    %v1812 = vadd.f32 0.0, %v1811
    %1813 = vmatmul.f32.gmra.mxu0 %v459
    %v1814 = vpop.f32.mrf.mxu0
    %v1815 = vadd.f32 0.0, %v1814
    %1816 = vmatmul.f32.gmra.mxu0 %v462
    %v1817 = vpop.f32.mrf.mxu0
    %v1818 = vadd.f32 0.0, %v1817
    %1819 = vmatmul.f32.gmra.mxu0 %v465
    %v1820 = vpop.f32.mrf.mxu0
    %v1821 = vadd.f32 0.0, %v1820
    %1822 = vdwg.mxu0
    %1825 = vrot.lane.b32.xlu0 %v1733, 64
    %v1826 = vpop.permute.xlu0 %1825
    %1827 = vrot.lane.b32.xlu0 %v1736, 64
    %v1828 = vpop.permute.xlu0 %1827
    %1831 = vmatpush.msra.mxu0 0.0
    %1832 = vmatpush.msra.mxu0 0.0
    %1833 = vmatpush.msra.mxu0 0.0
    %1834 = vmatpush.msra.mxu0 0.0
    %1835 = vmatpush.msra.mxu0 0.0
    %1836 = vmatpush.msra.mxu0 0.0
    %1837 = vmatpush.msra.mxu0 0.0
    %1838 = vmatpush.msra.mxu0 0.0
    %1839 = vmatpush.msra.mxu0 0.0
    %1840 = vmatpush.msra.mxu0 0.0
    %1841 = vmatpush.msra.mxu0 0.0
    %1842 = vmatpush.msra.mxu0 0.0
    %1843 = vmatpush.msra.mxu0 0.0
    %1844 = vmatpush.msra.mxu0 0.0
    %1845 = vmatpush.msra.mxu0 %v1828
    %1846 = vmatpush.msra.mxu0 %v1826
    %1847 = vmatmul.f32.gmra.mxu0 %v505
    %v1848 = vpop.f32.mrf.mxu0
    %v1849 = vadd.f32 %v1783, %v1848
    %1850 = vmatmul.f32.gmra.mxu0 %v508
    %v1851 = vpop.f32.mrf.mxu0
    %v1852 = vadd.f32 %v1786, %v1851
    %1853 = vmatmul.f32.gmra.mxu0 %v511
    %v1854 = vpop.f32.mrf.mxu0
    %v1855 = vadd.f32 %v1789, %v1854
    %1856 = vmatmul.f32.gmra.mxu0 %v514
    %v1857 = vpop.f32.mrf.mxu0
    %v1858 = vadd.f32 %v1792, %v1857
    %1859 = vdwg.mxu0
    %1860 = vmatpush.msra.mxu0 0.0
    %1861 = vmatpush.msra.mxu0 0.0
    %1862 = vmatpush.msra.mxu0 0.0
    %1863 = vmatpush.msra.mxu0 0.0
    %1864 = vmatpush.msra.mxu0 0.0
    %1865 = vmatpush.msra.mxu0 0.0
    %1866 = vmatpush.msra.mxu0 0.0
    %1867 = vmatpush.msra.mxu0 0.0
    %1868 = vmatpush.msra.mxu0 0.0
    %1869 = vmatpush.msra.mxu0 0.0
    %1870 = vmatpush.msra.mxu0 0.0
    %1871 = vmatpush.msra.mxu0 0.0
    %1872 = vmatpush.msra.mxu0 0.0
    %1873 = vmatpush.msra.mxu0 0.0
    %1874 = vmatpush.msra.mxu0 %v1759
    %1875 = vmatpush.msra.mxu0 %v1756
    %1876 = vmatmul.f32.gmra.mxu0 %v505
    %v1877 = vpop.f32.mrf.mxu0
    %v1878 = vadd.f32 %v1783, %v1877
    %1879 = vmatmul.f32.gmra.mxu0 %v508
    %v1880 = vpop.f32.mrf.mxu0
    %v1881 = vadd.f32 %v1786, %v1880
    %1882 = vmatmul.f32.gmra.mxu0 %v511
    %v1883 = vpop.f32.mrf.mxu0
    %v1884 = vadd.f32 %v1789, %v1883
    %1885 = vmatmul.f32.gmra.mxu0 %v514
    %v1886 = vpop.f32.mrf.mxu0
    %v1887 = vadd.f32 %v1792, %v1886
    %1888 = vdwg.mxu0
    %v1889 = vmul.f32 %v1812, %v1849
    %v1890 = vmul.f32 %v1815, %v1852
    %v1891 = vmul.f32 %v1818, %v1855
    %v1892 = vmul.f32 %v1821, %v1858
    %v1894 = vsel %vm578, %v1889, 0
    %v1897 = vsel %vm578, %v1890, 0
    %v1900 = vsel %vm578, %v1891, 0
    %v1903 = vsel %vm578, %v1892, 0
    %1905 = vmatpush.msra.mxu0 0.0
    %1906 = vmatpush.msra.mxu0 0.0
    %1907 = vmatpush.msra.mxu0 0.0
    %1908 = vmatpush.msra.mxu0 0.0
    %1909 = vmatpush.msra.mxu0 0.0
    %1910 = vmatpush.msra.mxu0 0.0
    %1911 = vmatpush.msra.mxu0 0.0
    %1912 = vmatpush.msra.mxu0 0.0
    %1913 = vmatpush.msra.mxu0 %v201
    %1914 = vmatpush.msra.mxu0 %v200
    %1915 = vmatpush.msra.mxu0 %v199
    %1916 = vmatpush.msra.mxu0 %v198
    %1917 = vmatpush.msra.mxu0 %v197
    %1918 = vmatpush.msra.mxu0 %v196
    %1919 = vmatpush.msra.mxu0 %v195
    %1920 = vmatpush.msra.mxu0 %v194
    %1921 = vmatmul.f32.gmra.mxu0 %v1894
    %v1922 = vpop.f32.mrf.mxu0
    %v1923 = vadd.f32 0.0, %v1922
    %1924 = vmatmul.f32.gmra.mxu0 %v1897
    %v1925 = vpop.f32.mrf.mxu0
    %v1926 = vadd.f32 0.0, %v1925
    %1927 = vmatmul.f32.gmra.mxu0 %v1900
    %v1928 = vpop.f32.mrf.mxu0
    %v1929 = vadd.f32 0.0, %v1928
    %1930 = vmatmul.f32.gmra.mxu0 %v1903
    %v1931 = vpop.f32.mrf.mxu0
    %v1932 = vadd.f32 0.0, %v1931
    %1933 = vdwg.mxu0
    %v1934 = vsel %vm244, %v1923, -inf
    %v1935 = vsel %vm244, %v1926, -inf
    %v1936 = vsel %vm244, %v1929, -inf
    %v1937 = vsel %vm244, %v1932, -inf
    %v1938 = vmax.f32 %v1934, %v1935
    %v1939 = vmax.f32 %v1936, %v1937
    %v1940 = vmax.f32 %v1938, %v1939
    %v1941 = vrot.slane %v1940, 4
    %v1942 = vmax.f32 %v1940, %v1941
    %v1943 = vrot.slane %v1942, 2
    %v1944 = vmax.f32 %v1942, %v1943
    %v1945 = vrot.slane %v1944, 1
    %v1946 = vmax.f32 %v1944, %v1945
    %v1947 = vsub.f32 %v1923, %v1946
    %v1948 = vsub.f32 %v1926, %v1946
    %v1949 = vsub.f32 %v1929, %v1946
    %v1950 = vsub.f32 %v1932, %v1946
    %v1951 = vmul.f32 %v1947, 1.442695
    %v1952 = vpow.pop %v1951
    %v1953 = vmul.f32 %v1948, 1.442695
    %v1954 = vpow.pop %v1953
    %v1955 = vmul.f32 %v1949, 1.442695
    %v1956 = vpow.pop %v1955
    %v1957 = vmul.f32 %v1950, 1.442695
    %v1958 = vpow.pop %v1957
    %1959 = vmatpush.msra.mxu0 0.0
    %1960 = vmatpush.msra.mxu0 0.0
    %1961 = vmatpush.msra.mxu0 0.0
    %1962 = vmatpush.msra.mxu0 0.0
    %1963 = vmatpush.msra.mxu0 0.0
    %1964 = vmatpush.msra.mxu0 0.0
    %1965 = vmatpush.msra.mxu0 0.0
    %1966 = vmatpush.msra.mxu0 0.0
    %1967 = vmatpush.msra.mxu0 0.0
    %1968 = vmatpush.msra.mxu0 0.0
    %1969 = vmatpush.msra.mxu0 0.0
    %1970 = vmatpush.msra.mxu0 0.0
    %1971 = vmatpush.msra.mxu0 %v1958
    %1972 = vmatpush.msra.mxu0 %v1956
    %1973 = vmatpush.msra.mxu0 %v1954
    %1974 = vmatpush.msra.mxu0 %v1952
    %1975 = vmatmul.f32.gmra.mxu0 %v646
    %v1976 = vpop.f32.mrf.mxu0
    %v1977 = vadd.f32 0.0, %v1976
    %1978 = vmatmul.f32.gmra.mxu0 %v649
    %v1979 = vpop.f32.mrf.mxu0
    %v1980 = vadd.f32 0.0, %v1979
    %1981 = vdwg.mxu0
    %1982 = vmatpush.msra.mxu0 0.0
    %1983 = vmatpush.msra.mxu0 0.0
    %1984 = vmatpush.msra.mxu0 0.0
    %1985 = vmatpush.msra.mxu0 0.0
    %1986 = vmatpush.msra.mxu0 0.0
    %1987 = vmatpush.msra.mxu0 0.0
    %1988 = vmatpush.msra.mxu0 0.0
    %1989 = vmatpush.msra.mxu0 0.0
    %1990 = vmatpush.msra.mxu0 0.0
    %1991 = vmatpush.msra.mxu0 0.0
    %1992 = vmatpush.msra.mxu0 0.0
    %1993 = vmatpush.msra.mxu0 0.0
    %1994 = vmatpush.msra.mxu0 0.0
    %1995 = vmatpush.msra.mxu0 0.0
    %1996 = vmatpush.msra.mxu0 %v1980
    %1997 = vmatpush.msra.mxu0 %v1977
    %1998 = vmatmul.f32.gmra.mxu0 %v456
    %v1999 = vpop.f32.mrf.mxu0
    %v2000 = vadd.f32 1e-16, %v1999
    %2001 = vmatmul.f32.gmra.mxu0 %v459
    %v2002 = vpop.f32.mrf.mxu0
    %v2003 = vadd.f32 1e-16, %v2002
    %2004 = vmatmul.f32.gmra.mxu0 %v462
    %v2005 = vpop.f32.mrf.mxu0
    %v2006 = vadd.f32 1e-16, %v2005
    %2007 = vmatmul.f32.gmra.mxu0 %v465
    %v2008 = vpop.f32.mrf.mxu0
    %v2009 = vadd.f32 1e-16, %v2008
    %2010 = vdwg.mxu0
    %v2011 = vrcp.pop %v2000
    %v2012 = vrcp.pop %v2003
    %v2013 = vrcp.pop %v2006
    %v2014 = vrcp.pop %v2009
    %v2015 = vmul.f32 %v1952, %v2011
    %v2016 = vmul.f32 %v1954, %v2012
    %v2017 = vmul.f32 %v1956, %v2013
    %v2018 = vmul.f32 %v1958, %v2014
    %v2020 = vsel %vm244, %v2015, 0
    %v2023 = vsel %vm244, %v2016, 0
    %v2026 = vsel %vm244, %v2017, 0
    %v2029 = vsel %vm244, %v2018, 0
    %2031 = vmatpush.msra.mxu0 0.0
    %2032 = vmatpush.msra.mxu0 0.0
    %2033 = vmatpush.msra.mxu0 0.0
    %2034 = vmatpush.msra.mxu0 0.0
    %2035 = vmatpush.msra.mxu0 0.0
    %2036 = vmatpush.msra.mxu0 0.0
    %2037 = vmatpush.msra.mxu0 0.0
    %2038 = vmatpush.msra.mxu0 0.0
    %2039 = vmatpush.msra.mxu0 0.0
    %2040 = vmatpush.msra.mxu0 0.0
    %2041 = vmatpush.msra.mxu0 0.0
    %2042 = vmatpush.msra.mxu0 0.0
    %2043 = vmatpush.msra.mxu0 0.0
    %2044 = vmatpush.msra.mxu0 0.0
    %2045 = vmatpush.msra.mxu0 0.0
    %2046 = vmatpush.msra.mxu0 %v202
    %2047 = vmatmul.f32.gmra.mxu0 %v2020
    %v2048 = vpop.f32.mrf.mxu0
    %v2049 = vadd.f32 0.0, %v2048
    %2050 = vmatmul.f32.gmra.mxu0 %v2023
    %v2051 = vpop.f32.mrf.mxu0
    %v2052 = vadd.f32 0.0, %v2051
    %2053 = vmatmul.f32.gmra.mxu0 %v2026
    %v2054 = vpop.f32.mrf.mxu0
    %v2055 = vadd.f32 0.0, %v2054
    %2056 = vmatmul.f32.gmra.mxu0 %v2029
    %v2057 = vpop.f32.mrf.mxu0
    %v2058 = vadd.f32 0.0, %v2057
    %2059 = vdwg.mxu0
    %v2060 = vmul.f32 %v1878, %v2049
    %v2061 = vmul.f32 %v1881, %v2052
    %v2062 = vmul.f32 %v1884, %v2055
    %v2063 = vmul.f32 %v1887, %v2058
    %2064 = vmatpush.msra.mxu0 0.0
    %2065 = vmatpush.msra.mxu0 0.0
    %2066 = vmatpush.msra.mxu0 0.0
    %2067 = vmatpush.msra.mxu0 0.0
    %2068 = vmatpush.msra.mxu0 0.0
    %2069 = vmatpush.msra.mxu0 0.0
    %2070 = vmatpush.msra.mxu0 0.0
    %2071 = vmatpush.msra.mxu0 0.0
    %2072 = vmatpush.msra.mxu0 0.0
    %2073 = vmatpush.msra.mxu0 0.0
    %2074 = vmatpush.msra.mxu0 0.0
    %2075 = vmatpush.msra.mxu0 0.0
    %2076 = vmatpush.msra.mxu0 %v2063
    %2077 = vmatpush.msra.mxu0 %v2062
    %2078 = vmatpush.msra.mxu0 %v2061
    %2079 = vmatpush.msra.mxu0 %v2060
    %2080 = vmatmul.f32.gmra.mxu0 %v646
    %v2081 = vpop.f32.mrf.mxu0
    %v2082 = vadd.f32 0.0, %v2081
    %2083 = vmatmul.f32.gmra.mxu0 %v649
    %v2084 = vpop.f32.mrf.mxu0
    %v2085 = vadd.f32 0.0, %v2084
    %2086 = vdwg.mxu0
    %v2088 = vsel %vm578, %v2082, 0
    %v2091 = vsel %vm578, %v2085, 0
    %2093 = vmatpush.msra.mxu0 0.0
    %2094 = vmatpush.msra.mxu0 0.0
    %2095 = vmatpush.msra.mxu0 0.0
    %2096 = vmatpush.msra.mxu0 0.0
    %2097 = vmatpush.msra.mxu0 0.0
    %2098 = vmatpush.msra.mxu0 0.0
    %2099 = vmatpush.msra.mxu0 0.0
    %2100 = vmatpush.msra.mxu0 0.0
    %2101 = vmatpush.msra.mxu0 %v210
    %2102 = vmatpush.msra.mxu0 %v209
    %2103 = vmatpush.msra.mxu0 %v208
    %2104 = vmatpush.msra.mxu0 %v207
    %2105 = vmatpush.msra.mxu0 %v206
    %2106 = vmatpush.msra.mxu0 %v205
    %2107 = vmatpush.msra.mxu0 %v204
    %2108 = vmatpush.msra.mxu0 %v203
    %2109 = vmatmul.f32.gmra.mxu0 %v2088
    %v2110 = vpop.f32.mrf.mxu0
    %v2111 = vadd.f32 %v1636, %v2110
    %2112 = vmatmul.f32.gmra.mxu0 %v2091
    %v2113 = vpop.f32.mrf.mxu0
    %v2114 = vadd.f32 %v1637, %v2113
    %2115 = vdwg.mxu0
    %v2116 = vld [vmem:[#allocation2 + $0x1e0] sm:$0x1]
    %v2117 = vld [vmem:[#allocation2 + $0x1e8] sm:$0x1]
    %v2118 = vsel %vm288, %v2111, 0.0
    %2119 = vadd.xlane.f32.xlu0 %v2118
    %v2120 = vpop.xlane.xlu0 %2119
    %v2121 = vsel %vm288, %v2114, 0.0
    %2122 = vadd.xlane.f32.xlu0 %v2121
    %v2123 = vpop.xlane.xlu0 %2122
    %v2124 = vadd.f32 %v2120, %v2123
    %v2125 = vrot.slane %v2124, 4
    %v2126 = vadd.f32 %v2124, %v2125
    %v2127 = vrot.slane %v2126, 2
    %v2128 = vadd.f32 %v2126, %v2127
    %v2129 = vrot.slane %v2128, 1
    %v2130 = vadd.f32 %v2128, %v2129
    %v2131 = vmul.f32 %v2130, 0.001953125
    %v2132 = vsub.f32 %v2111, %v2131
    %v2133 = vsub.f32 %v2114, %v2131
    %v2134 = vmul.f32 %v2132, %v2132
    %v2135 = vmul.f32 %v2133, %v2133
    %v2136 = vsel %vm288, %v2134, 0.0
    %2137 = vadd.xlane.f32.xlu0 %v2136
    %v2138 = vpop.xlane.xlu0 %2137
    %v2139 = vsel %vm288, %v2135, 0.0
    %2140 = vadd.xlane.f32.xlu0 %v2139
    %v2141 = vpop.xlane.xlu0 %2140
    %v2142 = vadd.f32 %v2138, %v2141
    %v2143 = vrot.slane %v2142, 4
    %v2144 = vadd.f32 %v2142, %v2143
    %v2145 = vrot.slane %v2144, 2
    %v2146 = vadd.f32 %v2144, %v2145
    %v2147 = vrot.slane %v2146, 1
    %v2148 = vadd.f32 %v2146, %v2147
    %v2149 = vmul.f32 %v2148, 0.001953125
    %v2150 = vrsqrt.pop %v2149
    %v2151 = vmul.f32 %v2150, %v2149
    %v2152 = vmul.f32 %v2151, %v2150
    %v2153 = vmul.f32 0.5, %v2152
    %v2154 = vsub.f32 1.5, %v2153
    %v2155 = vmul.f32 %v2150, %v2154
    %v2156 = vmul.f32 %v2149, %v2155
    %vm2157 = vcmp.eq.f32.partialorder %v2149, inf
    %v2158 = vsel %vm2157, %v2149, %v2156
    %vm2159 = vcmp.eq.f32.partialorder %v2149, 0.0
    %v2160 = vand.u32 %v2149, 2147483648
    %v2161 = vsel %vm2159, %v2160, %v2158
    %v2162 = vadd.f32 %v2161, 1e-05
    %v2163 = vrcp.pop %v2162
    %v2164 = vmul.f32 %v2132, %v2163
    %v2165 = vmul.f32 %v2133, %v2163
    %v2166 = vperm.slane %v2116, 0
    %v2167 = vmul.f32 %v2164, %v2166
    %v2168 = vmul.f32 %v2165, %v2166
    %v2169 = vperm.slane %v2117, 0
    %v2170 = vadd.f32 %v2167, %v2169
    %v2171 = vadd.f32 %v2168, %v2169
    %v2172 = vld [vmem:[#allocation2 + $0x240] sm:$0xff]
    %v2173 = vld [vmem:[#allocation2 + $0x248] sm:$0xff]
    %v2174 = vld [vmem:[#allocation2 + $0x250] sm:$0xff]
    %v2175 = vld [vmem:[#allocation2 + $0x258] sm:$0xff]
    %v2176 = vld [vmem:[#allocation2 + $0x1f0] sm:$0x1]
    %v2177 = vperm.slane %v2176, 0
    %v2179 = vsel %vm288, %v2170, 0
    %v2182 = vsel %vm288, %v2171, 0
    %2184 = vmatpush.msra.mxu0 0.0
    %2185 = vmatpush.msra.mxu0 0.0
    %2186 = vmatpush.msra.mxu0 0.0
    %2187 = vmatpush.msra.mxu0 0.0
    %2188 = vmatpush.msra.mxu0 0.0
    %2189 = vmatpush.msra.mxu0 0.0
    %2190 = vmatpush.msra.mxu0 0.0
    %2191 = vmatpush.msra.mxu0 0.0
    %2192 = vmatpush.msra.mxu0 0.0
    %2193 = vmatpush.msra.mxu0 0.0
    %2194 = vmatpush.msra.mxu0 0.0
    %2195 = vmatpush.msra.mxu0 0.0
    %2196 = vmatpush.msra.mxu0 %v2175
    %2197 = vmatpush.msra.mxu0 %v2174
    %2198 = vmatpush.msra.mxu0 %v2173
    %2199 = vmatpush.msra.mxu0 %v2172
    %2200 = vmatmul.f32.gmra.mxu0 %v2179
    %v2201 = vpop.f32.mrf.mxu0
    %v2202 = vadd.f32 %v2177, %v2201
    %2203 = vmatmul.f32.gmra.mxu0 %v2182
    %v2204 = vpop.f32.mrf.mxu0
    %v2205 = vadd.f32 %v2177, %v2204
    %2206 = vdwg.mxu0
    %v2207 = vmul.f32 %v2202, 0.5
    %v2208 = vmul.f32 %v2205, 0.5
    %v2209 = vmul.f32 %v2202, 0.044715
    %v2210 = vmul.f32 %v2205, 0.044715
    %v2211 = vmul.f32 %v2209, %v2202
    %v2212 = vmul.f32 %v2210, %v2205
    %v2213 = vmul.f32 %v2211, %v2202
    %v2214 = vmul.f32 %v2212, %v2205
    %v2215 = vadd.f32 %v2202, %v2213
    %v2216 = vadd.f32 %v2205, %v2214
    %v2217 = vmul.f32 %v2215, 0.7978846
    %v2218 = vmul.f32 %v2216, 0.7978846
    %v2219 = vtanh.pop %v2217
    %v2220 = vtanh.pop %v2218
    %v2221 = vadd.f32 %v2219, 1.0
    %v2222 = vadd.f32 %v2220, 1.0
    %v2223 = vmul.f32 %v2207, %v2221
    %v2224 = vmul.f32 %v2208, %v2222
    %v2225 = vld [vmem:[#allocation2 + $0x260] sm:$0xff]
    %v2226 = vld [vmem:[#allocation2 + $0x268] sm:$0xff]
    %v2227 = vld [vmem:[#allocation2 + $0x270] sm:$0xff]
    %v2228 = vld [vmem:[#allocation2 + $0x278] sm:$0xff]
    %v2229 = vld [vmem:[#allocation2 + $0x1f8] sm:$0x1]
    %v2230 = vperm.slane %v2229, 0
    %v2232 = vsel %vm288, %v2223, 0
    %v2235 = vsel %vm288, %v2224, 0
    %2237 = vmatpush.msra.mxu0 0.0
    %2238 = vmatpush.msra.mxu0 0.0
    %2239 = vmatpush.msra.mxu0 0.0
    %2240 = vmatpush.msra.mxu0 0.0
    %2241 = vmatpush.msra.mxu0 0.0
    %2242 = vmatpush.msra.mxu0 0.0
    %2243 = vmatpush.msra.mxu0 0.0
    %2244 = vmatpush.msra.mxu0 0.0
    %2245 = vmatpush.msra.mxu0 0.0
    %2246 = vmatpush.msra.mxu0 0.0
    %2247 = vmatpush.msra.mxu0 0.0
    %2248 = vmatpush.msra.mxu0 0.0
    %2249 = vmatpush.msra.mxu0 %v2228
    %2250 = vmatpush.msra.mxu0 %v2227
    %2251 = vmatpush.msra.mxu0 %v2226
    %2252 = vmatpush.msra.mxu0 %v2225
    %2253 = vmatmul.f32.gmra.mxu0 %v2232
    %v2254 = vpop.f32.mrf.mxu0
    %v2255 = vadd.f32 %v2230, %v2254
    %2256 = vmatmul.f32.gmra.mxu0 %v2235
    %v2257 = vpop.f32.mrf.mxu0
    %v2258 = vadd.f32 %v2230, %v2257
    %2259 = vdwg.mxu0
    %v2260 = vadd.f32 %v2255, %v2111
    %v2261 = vadd.f32 %v2258, %v2114
    %v2262 = vld [vmem:[%s9] sm:$0xff]
    %v2263 = vld [vmem:[%s9 + $0x8] sm:$0xff]
    %v2264 = vld [vmem:[%s9 + $0x10] sm:$0xff]
    %v2265 = vld [vmem:[%s9 + $0x18] sm:$0xff]
    %v2266 = vld [vmem:[%s9 + $0x20] sm:$0x1]
    %v2267 = vperm.slane %v2266, 0
    %v2269 = vsel %vm288, %v2260, 0
    %v2272 = vsel %vm288, %v2261, 0
    %2274 = vmatpush.msra.mxu0 0.0
    %2275 = vmatpush.msra.mxu0 0.0
    %2276 = vmatpush.msra.mxu0 0.0
    %2277 = vmatpush.msra.mxu0 0.0
    %2278 = vmatpush.msra.mxu0 0.0
    %2279 = vmatpush.msra.mxu0 0.0
    %2280 = vmatpush.msra.mxu0 0.0
    %2281 = vmatpush.msra.mxu0 0.0
    %2282 = vmatpush.msra.mxu0 0.0
    %2283 = vmatpush.msra.mxu0 0.0
    %2284 = vmatpush.msra.mxu0 0.0
    %2285 = vmatpush.msra.mxu0 0.0
    %2286 = vmatpush.msra.mxu0 %v2265
    %2287 = vmatpush.msra.mxu0 %v2264
    %2288 = vmatpush.msra.mxu0 %v2263
    %2289 = vmatpush.msra.mxu0 %v2262
    %2290 = vmatmul.f32.gmra.mxu0 %v2269
    %v2291 = vpop.f32.mrf.mxu0
    %v2292 = vadd.f32 %v2267, %v2291
    %2293 = vmatmul.f32.gmra.mxu0 %v2272
    %v2294 = vpop.f32.mrf.mxu0
    %v2295 = vadd.f32 %v2267, %v2294
    %2296 = vdwg.mxu0
    %2297 = vst [vmem:[#allocation8] sm:$0xff] %v2292
    %2298 = vst [vmem:[#allocation8 + $0x8] sm:$0xff] %v2295
    // Predicated region
    $region54: #{_lambda_.1} parent=1 // pred_check
      _
    $region55: #{_lambda_.1} parent=1 // pred_check_branch
      %2300 = sbr.rel (0) target = $region57
    $region56: #{_lambda_.1} parent=1 // pred_region
      %2302 = vsyncadd [#allocation4], 0
      %s2303 = sshll.u32 [#allocation8], 4
      %s2304 = int_to_ptr.vmem [resolvable:$true] %s2303
      %s2305 = sshll.u32 %s10, 4
      %s2306 = int_to_ptr.hbm [resolvable:$true] %s2305
      %2311 = dma.vmem_to_hbm [thread:$0]  %s2304, 256, %s2306, [#allocation4], 128, 128, 8
    $region57: #{_lambda_.1} parent=1 // pred_fallthru
      _
    // Predicated region
    $region58: #{_lambda_.1} parent=1 // pred_check
      _
    $region59: #{_lambda_.1} parent=1 // pred_check_branch
      %2313 = sbr.rel (0) target = $region61
    $region60: #{_lambda_.1} parent=1 // pred_region
      %2315 = dma.done [#allocation4], 256
    $region61: #{_lambda_.1} parent=1 // pred_fallthru
      _
    %2316 = vsyncpa [#allocation3], 1
    %2317 = vsyncpa [#allocation6], 1
    %2318 = vsyncpa [#allocation4], 1

</llo_original>
